<compile_context>
chip_gen: v7x
topology: tpu7x:2x2x1
jax: 0.10.0
libtpu: 0.0.40
codegen_flags: <defaults>
</compile_context>

<pallas_src>
import functools

import jax
import jax.numpy as jnp
from jax import lax
from jax.experimental import pallas as pl
from jax.experimental.pallas import tpu as pltpu


_TM = 512          # row tile target for linears
_TN = 512          # output-feature tile target
_TK = 1536         # LN prologue fuses whenever K <= _TK (covers ViT-G's 1536)
_LN_EPS = 1e-6
_SQRT_HALF = 0.7071067811865476
_NEG_INF = -1e30


def _round_up(x, m):
    return (x + m - 1) // m * m


def _pick_tile(dim, target, align):
    """Largest divisor of `dim` that is a multiple of `align` and <= target.
    Returns `dim` itself if dim <= target or no aligned divisor exists."""
    if dim <= target:
        return dim
    t = (target // align) * align
    while t >= align:
        if dim % t == 0:
            return t
        t -= align
    return dim


def _ln(x, g, b, eps):
    mean = jnp.mean(x, axis=-1, keepdims=True)
    c = x - mean
    var = jnp.mean(c * c, axis=-1, keepdims=True)
    return c * lax.rsqrt(var + eps) * g + b


def _gelu(y):
    # exact (erf) GELU, matching torch.nn.GELU default
    return 0.5 * y * (1.0 + lax.erf(y * jnp.float32(_SQRT_HALF)))


# ----------------------------------------------------------------------------
# Fused tiled linear:  y = [res +] [gamma *] act( LN?(x) @ w + b )
# ----------------------------------------------------------------------------

def _linear_kernel(*refs, activation, fuse_ln, fuse_sr, nk, eps):
    it = iter(refs)
    x_ref, w_ref, b_ref = next(it), next(it), next(it)
    lng_ref = lnb_ref = g_ref = r_ref = None
    if fuse_ln:
        lng_ref, lnb_ref = next(it), next(it)
    if fuse_sr:
        g_ref, r_ref = next(it), next(it)
    o_ref, acc_ref = next(it), next(it)

    k = pl.program_id(2)

    @pl.when(k == 0)
    def _():
        acc_ref[...] = jnp.zeros_like(acc_ref)

    x = x_ref[...]
    if fuse_ln:
        x = _ln(x.astype(jnp.float32), lng_ref[...], lnb_ref[...], eps)
    acc_ref[...] += jnp.dot(x.astype(jnp.bfloat16),
                            w_ref[...].astype(jnp.bfloat16),
                            preferred_element_type=jnp.float32)

    @pl.when(k == nk - 1)
    def _():
        y = acc_ref[...] + b_ref[...]
        if activation == "gelu":
            y = _gelu(y)
        if fuse_sr:
            y = r_ref[...].astype(jnp.float32) + y * g_ref[...]
        o_ref[...] = y.astype(o_ref.dtype)


def pallas_linear(x, w, b, *, activation=None, ln=None, gamma=None,
                  residual=None, out_dtype=jnp.bfloat16, eps=_LN_EPS):
    """Tiled matmul with fused LN prologue and bias/GELU/LayerScale+residual
    epilogue.  x: (M, K), w: (K, N) (bf16), b: (N,).  Output bf16 by default.
    All dims must be covered by exact-divisor tiles (the callers guarantee
    M is a multiple of 8 via one-time token padding)."""
    M, K = x.shape
    N = w.shape[1]

    tm = _pick_tile(M, _TM, 8)
    tn = _pick_tile(N, _TN, 128)
    tk = _pick_tile(K, _TK, 128)
    gm, gn, gk = M // tm, N // tn, K // tk

    if ln is not None and gk > 1:
        # LN needs the whole feature row; only triggers for K > _TK (never for
        # real DINOv2 widths since D <= 1536).
        x = pallas_layernorm(x, ln[0], ln[1], eps=eps)
        ln = None
    fuse_ln = ln is not None
    fuse_sr = gamma is not None

    operands = [x, w, b.reshape(1, N).astype(jnp.float32)]
    in_specs = [
        pl.BlockSpec((tm, tk), lambda i, j, k: (i, k)),
        pl.BlockSpec((tk, tn), lambda i, j, k: (k, j)),
        pl.BlockSpec((1, tn), lambda i, j, k: (0, j)),
    ]
    if fuse_ln:
        operands += [ln[0].reshape(1, K).astype(jnp.float32),
                     ln[1].reshape(1, K).astype(jnp.float32)]
        in_specs += [pl.BlockSpec((1, K), lambda i, j, k: (0, 0)),
                     pl.BlockSpec((1, K), lambda i, j, k: (0, 0))]
    if fuse_sr:
        operands += [gamma.reshape(1, N).astype(jnp.float32), residual]
        in_specs += [pl.BlockSpec((1, tn), lambda i, j, k: (0, j)),
                     pl.BlockSpec((tm, tn), lambda i, j, k: (i, j))]

    return pl.pallas_call(
        functools.partial(_linear_kernel, activation=activation,
                          fuse_ln=fuse_ln, fuse_sr=fuse_sr, nk=gk, eps=eps),
        grid=(gm, gn, gk),
        in_specs=in_specs,
        out_specs=pl.BlockSpec((tm, tn), lambda i, j, k: (i, j)),
        out_shape=jax.ShapeDtypeStruct((M, N), out_dtype),
        scratch_shapes=[pltpu.VMEM((tm, tn), jnp.float32)],
        compiler_params=pltpu.CompilerParams(
            dimension_semantics=("parallel", "parallel", "arbitrary")),
    )(*operands)


# ----------------------------------------------------------------------------
# Standalone LayerNorm (class token / rare fallback)
# ----------------------------------------------------------------------------

def _layernorm_kernel(x_ref, g_ref, b_ref, o_ref, *, eps):
    o_ref[...] = _ln(x_ref[...].astype(jnp.float32), g_ref[...], b_ref[...],
                     eps).astype(o_ref.dtype)


def pallas_layernorm(x, g, b, eps=_LN_EPS, out_dtype=None):
    M, D = x.shape
    out_dtype = out_dtype or x.dtype
    tm = _pick_tile(M, _TM, 8)
    return pl.pallas_call(
        functools.partial(_layernorm_kernel, eps=eps),
        grid=(M // tm,),
        in_specs=[pl.BlockSpec((tm, D), lambda i: (i, 0)),
                  pl.BlockSpec((1, D), lambda i: (0, 0)),
                  pl.BlockSpec((1, D), lambda i: (0, 0))],
        out_specs=pl.BlockSpec((tm, D), lambda i: (i, 0)),
        out_shape=jax.ShapeDtypeStruct((M, D), out_dtype),
        compiler_params=pltpu.CompilerParams(dimension_semantics=("parallel",)),
    )(x, g.reshape(1, D).astype(jnp.float32),
      b.reshape(1, D).astype(jnp.float32))


# ----------------------------------------------------------------------------
# Attention: grid over (batch, head-group, q-tile); lane-aligned head pairs,
# Q/K/V column slices read straight out of the packed (B, N, 3D) qkv buffer.
# ----------------------------------------------------------------------------

def _attention_kernel(q_ref, k_ref, v_ref, o_ref, *, heads, dh, scale,
                      q_off, k_off, v_off, n_valid, masked):
    n_kv = k_ref.shape[1]
    if masked:
        kv_mask = lax.broadcasted_iota(jnp.int32, (1, n_kv), 1) < n_valid
    outs = []
    for h in range(heads):                          # heads per group (1 or 2)
        q = (q_ref[0, :, q_off + h * dh:q_off + (h + 1) * dh]
             .astype(jnp.float32) * scale).astype(jnp.bfloat16)
        k = k_ref[0, :, k_off + h * dh:k_off + (h + 1) * dh].astype(jnp.bfloat16)
        v = v_ref[0, :, v_off + h * dh:v_off + (h + 1) * dh].astype(jnp.bfloat16)
        s = lax.dot_general(q, k, (((1,), (1,)), ((), ())),
                            preferred_element_type=jnp.float32)    # (tq, n_kv)
        if masked:
            s = jnp.where(kv_mask, s, jnp.float32(_NEG_INF))
        m = jnp.max(s, axis=-1, keepdims=True)
        p = jnp.exp(s - m)
        l = jnp.sum(p, axis=-1, keepdims=True)
        o = jnp.dot(p.astype(jnp.bfloat16), v,
                    preferred_element_type=jnp.float32)             # (tq, dh)
        # approx reciprocal error (~2^-12) is below bf16 output precision
        outs.append(o * pl.reciprocal(l, approx=True))
    out = outs[0] if heads == 1 else jnp.concatenate(outs, axis=-1)
    o_ref[0] = out.astype(o_ref.dtype)


def pallas_attention(qkv, num_heads, scale, n_valid):
    """qkv: (B, Npad, 3D) bf16 -> (B, Npad, D) bf16.  Keys >= n_valid masked."""
    B, Npad, threeD = qkv.shape
    D = threeD // 3
    dh = D // num_heads
    masked = n_valid < Npad
    out_shape = jax.ShapeDtypeStruct((B, Npad, D), jnp.bfloat16)

    lane_ok = (D % 128 == 0) and (
        dh % 128 == 0 or (128 % dh == 0 and num_heads % (128 // dh) == 0))
    if lane_ok:
        # lane-aligned head groups (e.g. dh=64 -> 2 heads per 128-lane group)
        hgdh = dh if dh % 128 == 0 else 128
        hg = hgdh // dh
        n_groups = num_heads // hg
        nblk = D // hgdh                      # column blocks per q/k/v section
        tq = _pick_tile(Npad, 128, 8)
        kernel = functools.partial(
            _attention_kernel, heads=hg, dh=dh, scale=scale,
            q_off=0, k_off=0, v_off=0, n_valid=n_valid, masked=masked)
        # TODO(synk): tile the key axis with an online softmax for very long
        # sequences; at DINOv2 sizes the full-key block is a few hundred KiB.
        return pl.pallas_call(
            kernel,
            grid=(B, n_groups, Npad // tq),
            in_specs=[
                pl.BlockSpec((1, tq, hgdh), lambda b, g, qi: (b, qi, g)),
                pl.BlockSpec((1, Npad, hgdh), lambda b, g, qi: (b, 0, nblk + g)),
                pl.BlockSpec((1, Npad, hgdh),
                             lambda b, g, qi: (b, 0, 2 * nblk + g)),
            ],
            out_specs=pl.BlockSpec((1, tq, hgdh), lambda b, g, qi: (b, qi, g)),
            out_shape=out_shape,
            compiler_params=pltpu.CompilerParams(
                dimension_semantics=("parallel", "parallel", "parallel")),
        )(qkv, qkv, qkv)

    # Small-model fallback (D not a multiple of 128): whole (Npad, 3D) block.
    kernel = functools.partial(
        _attention_kernel, heads=num_heads, dh=dh, scale=scale,
        q_off=0, k_off=D, v_off=2 * D, n_valid=n_valid, masked=masked)
    full = pl.BlockSpec((1, Npad, threeD), lambda b: (b, 0, 0))
    return pl.pallas_call(
        kernel,
        grid=(B,),
        in_specs=[full, full, full],
        out_specs=pl.BlockSpec((1, Npad, D), lambda b: (b, 0, 0)),
        out_shape=out_shape,
        compiler_params=pltpu.CompilerParams(dimension_semantics=("parallel",)),
    )(qkv, qkv, qkv)


# ----------------------------------------------------------------------------
# Fused output head: final LN + per-feature 1x1 conv + cross-feature sum.
# dim_out padded to a multiple of 128 -> lane-dense, unmasked stores.
# ----------------------------------------------------------------------------

def _head_kernel(*refs, num_feats, eps):
    feat_refs = refs[:num_feats]
    lng_ref, lnb_ref, pw_ref, pb_ref, o_ref = refs[num_feats:]
    acc = pb_ref[...]                                    # (1, tn) f32
    for f in range(num_feats):
        xn = _ln(feat_refs[f][...].astype(jnp.float32),
                 lng_ref[...], lnb_ref[...], eps)
        acc = acc + jnp.dot(xn.astype(jnp.bfloat16), pw_ref[f],
                            preferred_element_type=jnp.float32)
    o_ref[...] = acc.astype(o_ref.dtype)


def pallas_fused_head(feats, ln_g, ln_b, proj_ws, proj_bs, eps=_LN_EPS):
    """feats: list of (M, D) bf16 -> (M, round_up(dim_out, 128)) f32."""
    num_feats = len(feats)
    M, D = feats[0].shape
    dim_out = proj_ws[0].shape[1]
    dop = _round_up(dim_out, 128)
    pad_w = ((0, 0), (0, dop - dim_out))
    pw = jnp.stack([jnp.pad(w.astype(jnp.bfloat16), pad_w) for w in proj_ws])
    pb = jnp.pad(sum(b.astype(jnp.float32) for b in proj_bs),
                 (0, dop - dim_out)).reshape(1, dop)

    tm = _pick_tile(M, 256, 8)
    tn = _pick_tile(dop, _TN, 128)
    gm, gn = M // tm, dop // tn

    in_specs = ([pl.BlockSpec((tm, D), lambda i, j: (i, 0))] * num_feats +
                [pl.BlockSpec((1, D), lambda i, j: (0, 0)),
                 pl.BlockSpec((1, D), lambda i, j: (0, 0)),
                 pl.BlockSpec((num_feats, D, tn), lambda i, j: (0, 0, j)),
                 pl.BlockSpec((1, tn), lambda i, j: (0, j))])
    return pl.pallas_call(
        functools.partial(_head_kernel, num_feats=num_feats, eps=eps),
        grid=(gm, gn),
        in_specs=in_specs,
        out_specs=pl.BlockSpec((tm, tn), lambda i, j: (i, j)),
        out_shape=jax.ShapeDtypeStruct((M, dop), jnp.float32),
        compiler_params=pltpu.CompilerParams(
            dimension_semantics=("parallel", "parallel")),
    )(*feats, ln_g.reshape(1, D).astype(jnp.float32),
      ln_b.reshape(1, D).astype(jnp.float32), pw, pb)


# ----------------------------------------------------------------------------
# DINOv2 backbone built from the fused Pallas kernels
# ----------------------------------------------------------------------------

def dino_block(x, p, B, Npad, n_valid, num_heads):
    """One DINOv2 transformer block on x of shape (B*Npad, D) bf16."""
    D = x.shape[1]
    dh = D // num_heads

    # attention branch: LN fused into QKV matmul; LayerScale+residual into proj
    qkv = pallas_linear(x, p["qkv_w"], p["qkv_b"],
                        ln=(p["norm1_g"], p["norm1_b"]))        # (B*Npad, 3D)
    attn = pallas_attention(qkv.reshape(B, Npad, 3 * D), num_heads,
                            float(dh) ** -0.5, n_valid)         # (B, Npad, D)
    x = pallas_linear(attn.reshape(B * Npad, D), p["proj_w"], p["proj_b"],
                      gamma=p["ls1"], residual=x)

    # MLP branch: LN fused into fc1 (+GELU); LayerScale+residual into fc2
    h = pallas_linear(x, p["fc1_w"], p["fc1_b"], activation="gelu",
                      ln=(p["norm2_g"], p["norm2_b"]))
    x = pallas_linear(h, p["fc2_w"], p["fc2_b"], gamma=p["ls2"], residual=x)
    return x


def dinov2_encoder_forward(params, image, *, token_rows, token_cols, num_heads,
                           intermediate_layers, return_class_token=False,
                           patch=14):
    """Mirror of DINOv2Encoder.forward. image: NCHW float32 in [0,1]."""
    B = image.shape[0]
    H14, W14 = token_rows * patch, token_cols * patch
    # antialiased bilinear resize (F.interpolate(mode='bilinear', antialias=True))
    image_14 = jax.image.resize(image, (B, 3, H14, W14), method="linear",
                                antialias=True)
    image_14 = (image_14 - params["image_mean"]) / params["image_std"]

    bp = params["backbone"]
    D = bp["cls_token"].shape[-1]
    Np = token_rows * token_cols
    N = Np + 1
    Npad = _round_up(N, 8) if N <= 128 else _round_up(N, 128)

    # patch embedding: 14x14 stride-14 conv == matmul over flattened patches
    patches = image_14.reshape(B, 3, token_rows, patch, token_cols, patch)
    patches = patches.transpose(0, 2, 4, 1, 3, 5).reshape(B * Np, 3 * patch * patch)
    x = pallas_linear(patches, bp["patch_w"], bp["patch_b"]).reshape(B, Np, D)

    cls = jnp.broadcast_to(bp["cls_token"], (B, 1, D))
    # TODO(synk): DINOv2 bicubic-interpolates pos_embed for mismatched grids;
    # pos_embed here is defined for exactly (token_rows, token_cols) so the
    # interpolation is the identity and is skipped.
    x = jnp.concatenate([cls, x.astype(jnp.float32)], axis=1) + bp["pos_embed"]
    if Npad != N:
        # pad the token axis ONCE; padded rows ride through every block and the
        # attention kernel masks them out as keys.
        x = jnp.pad(x, ((0, 0), (0, Npad - N), (0, 0)))
    x = x.astype(jnp.bfloat16).reshape(B * Npad, D)

    depth = len(bp["blocks"])
    if isinstance(intermediate_layers, int):
        blocks_to_take = set(range(depth - intermediate_layers, depth))
    else:
        blocks_to_take = set(intermediate_layers)

    feats = []
    for i, blk in enumerate(bp["blocks"]):
        x = dino_block(x, blk, B, Npad, N, num_heads)
        if i in blocks_to_take:
            feats.append(x)

    # fused: final LayerNorm + output 1x1-conv projections + cross-feature sum
    proj_ws = [pw for pw, _pb in params["out_projs"]]
    proj_bs = [pb for _pw, pb in params["out_projs"]]
    dim_out = proj_ws[0].shape[1]
    y = pallas_fused_head(feats, bp["norm_g"], bp["norm_b"], proj_ws, proj_bs)
    y = y.reshape(B, Npad, -1)[:, 1:1 + Np, :dim_out]          # drop cls/pad
    x_out = y.reshape(B, token_rows, token_cols, dim_out).transpose(0, 3, 1, 2)

    if return_class_token:
        cls_rows = feats[-1].reshape(B, Npad, D)[:, 0, :]      # (B, D) bf16
        cls_tok = pallas_layernorm(cls_rows, bp["norm_g"], bp["norm_b"],
                                   out_dtype=jnp.float32)
        return x_out, cls_tok
    return x_out


# ----------------------------------------------------------------------------
# Deterministic synthetic parameter init (matmul weights stored in bf16)
# ----------------------------------------------------------------------------

def init_params(key, *, embed_dim, depth, num_heads, mlp_ratio, dim_out,
                num_features, token_rows, token_cols, patch=14):
    keys = jax.random.split(key, 128)
    ki = iter(keys)

    def w(shape, scale=0.02, dtype=jnp.bfloat16):
        return (scale * jax.random.normal(next(ki), shape)).astype(dtype)

    D = embed_dim
    hidden = int(D * mlp_ratio)

    blocks = []
    for _ in range(depth):
        blocks.append(dict(
            norm1_g=jnp.ones((D,), jnp.float32), norm1_b=jnp.zeros((D,), jnp.float32),
            qkv_w=w((D, 3 * D)), qkv_b=jnp.zeros((3 * D,), jnp.float32),
            proj_w=w((D, D)), proj_b=jnp.zeros((D,), jnp.float32),
            ls1=jnp.full((D,), 1.0, jnp.float32),   # DINOv2 hub uses init_values=1.0
            norm2_g=jnp.ones((D,), jnp.float32), norm2_b=jnp.zeros((D,), jnp.float32),
            fc1_w=w((D, hidden)), fc1_b=jnp.zeros((hidden,), jnp.float32),
            fc2_w=w((hidden, D)), fc2_b=jnp.zeros((D,), jnp.float32),
            ls2=jnp.full((D,), 1.0, jnp.float32),
        ))

    Np = token_rows * token_cols
    backbone = dict(
        patch_w=w((3 * patch * patch, D)), patch_b=jnp.zeros((D,), jnp.float32),
        cls_token=w((1, 1, D), dtype=jnp.float32),
        pos_embed=w((1, Np + 1, D), dtype=jnp.float32),
        blocks=blocks,
        norm_g=jnp.ones((D,), jnp.float32), norm_b=jnp.zeros((D,), jnp.float32),
    )

    out_projs = [(w((D, dim_out)), jnp.zeros((dim_out,), jnp.float32))
                 for _ in range(num_features)]

    return dict(
        backbone=backbone,
        out_projs=out_projs,
        image_mean=jnp.array([0.485, 0.456, 0.406], jnp.float32).reshape(1, 3, 1, 1),
        image_std=jnp.array([0.229, 0.224, 0.225], jnp.float32).reshape(1, 3, 1, 1),
    )


# ----------------------------------------------------------------------------
# Main
# ----------------------------------------------------------------------------

if __name__ == "__main__":
    # small DINOv2-shaped config; dh=64 so the lane-aligned head-pair attention
    # path (the one used at real ViT sizes) is exercised.
    EMBED_DIM = 128
    DEPTH = 3
    NUM_HEADS = 2
    MLP_RATIO = 4
    DIM_OUT = 16
    INTERMEDIATE_LAYERS = 2          # last 2 blocks (int form, like the module)
    NUM_FEATURES = INTERMEDIATE_LAYERS
    TOKEN_ROWS, TOKEN_COLS = 2, 2    # -> image_14 is 28x28, 4 patch tokens + cls

    root = jax.random.PRNGKey(0)
    k_params, k_img = jax.random.split(root)

    params = init_params(
        k_params, embed_dim=EMBED_DIM, depth=DEPTH, num_heads=NUM_HEADS,
        mlp_ratio=MLP_RATIO, dim_out=DIM_OUT, num_features=NUM_FEATURES,
        token_rows=TOKEN_ROWS, token_cols=TOKEN_COLS)

    image = jax.random.uniform(k_img, (2, 3, 16, 16), dtype=jnp.float32)  # RGB in [0,1]

    fwd = jax.jit(functools.partial(
        dinov2_encoder_forward,
        token_rows=TOKEN_ROWS, token_cols=TOKEN_COLS, num_heads=NUM_HEADS,
        intermediate_layers=INTERMEDIATE_LAYERS, return_class_token=True))

    x, cls_token = fwd(params, image)

    jax.block_until_ready(x)
    jax.block_until_ready(cls_token)

    assert x.shape == (2, DIM_OUT, TOKEN_ROWS, TOKEN_COLS), x.shape
    assert cls_token.shape == (2, EMBED_DIM), cls_token.shape
    assert jnp.all(jnp.isfinite(x)) and jnp.all(jnp.isfinite(cls_token))

    print("KERNEL_OK")
</pallas_src>

<mosaic_0001>
module attributes {stable_mosaic.version = 11 : i64} {
  func.func @_linear_kernel(%arg0: i32, %arg1: i32, %arg2: i32, %arg3: memref<8x588xf32, #tpu.memory_space<vmem>>, %arg4: memref<588x128xbf16, #tpu.memory_space<vmem>>, %arg5: memref<1x128xf32, #tpu.memory_space<vmem>>, %arg6: memref<8x128xbf16, #tpu.memory_space<vmem>>, %arg7: memref<8x128xf32, #tpu.memory_space<vmem>>) attributes {dimension_semantics = [#tpu.dimension_semantics<parallel>, #tpu.dimension_semantics<parallel>, #tpu.dimension_semantics<arbitrary>], iteration_bounds = array<i64: 1, 1, 1>, scalar_prefetch = 0 : i64, scratch_operands = 1 : i64, tpu.core_type = #tpu.core_type<tc>, window_params = [{transform_indices = @transform_0, window_bounds = array<i64: 8, 588>}, {transform_indices = @transform_1, window_bounds = array<i64: 588, 128>}, {transform_indices = @transform_2, window_bounds = array<i64: 1, 128>}, {transform_indices = @transform_3, window_bounds = array<i64: 8, 128>}]} {
    %c0_i32 = arith.constant 0 : i32
    %0 = arith.cmpi eq, %arg2, %c0_i32 : i32
    %1 = arith.extui %0 : i1 to i32
    %c0_i32_0 = arith.constant 0 : i32
    %2 = arith.cmpi ne, %1, %c0_i32_0 : i32
    scf.if %2 {
      %cst_10 = arith.constant 0.000000e+00 : f32
      %13 = vector.broadcast %cst_10 : f32 to vector<8x128xf32>
      %c0_11 = arith.constant 0 : index
      %c0_12 = arith.constant 0 : index
      %14 = vector.load %arg7[%c0_11, %c0_12] : memref<8x128xf32, #tpu.memory_space<vmem>>, vector<8x128xf32>
      tpu.vector_store %arg7[%c0_11, %c0_12], %13 {strides = array<i32>} : memref<8x128xf32, #tpu.memory_space<vmem>>, vector<8x128xf32>,
    } else {
    }
    %c0 = arith.constant 0 : index
    %c0_1 = arith.constant 0 : index
    %3 = vector.load %arg3[%c0, %c0_1] : memref<8x588xf32, #tpu.memory_space<vmem>>, vector<8x588xf32>
    %c0_2 = arith.constant 0 : index
    %c0_3 = arith.constant 0 : index
    %4 = vector.load %arg7[%c0_2, %c0_3] : memref<8x128xf32, #tpu.memory_space<vmem>>, vector<8x128xf32>
    %5 = arith.truncf %3 : vector<8x588xf32> to vector<8x588xbf16>
    %c0_4 = arith.constant 0 : index
    %c0_5 = arith.constant 0 : index
    %6 = vector.load %arg4[%c0_4, %c0_5] : memref<588x128xbf16, #tpu.memory_space<vmem>>, vector<588x128xbf16>
    %cst = arith.constant dense<0.000000e+00> : vector<8x128xf32>
    %7 = tpu.matmul %5, %6, %cst {dimension_numbers = #tpu.dot_dimension_numbers<[1], [0], [0], [1], [0, 0, 1, 1], [], []>} : vector<8x588xbf16>, vector<588x128xbf16>, vector<8x128xf32> -> vector<8x128xf32>
    %8 = arith.addf %4, %7 : vector<8x128xf32>
    %c0_6 = arith.constant 0 : index
    %c0_7 = arith.constant 0 : index
    %9 = vector.load %arg7[%c0_6, %c0_7] : memref<8x128xf32, #tpu.memory_space<vmem>>, vector<8x128xf32>
    tpu.vector_store %arg7[%c0_6, %c0_7], %8 {strides = array<i32>} : memref<8x128xf32, #tpu.memory_space<vmem>>, vector<8x128xf32>,
    %c0_i32_8 = arith.constant 0 : i32
    %10 = arith.cmpi eq, %arg2, %c0_i32_8 : i32
    %11 = arith.extui %10 : i1 to i32
    %c0_i32_9 = arith.constant 0 : i32
    %12 = arith.cmpi ne, %11, %c0_i32_9 : i32
    scf.if %12 {
      %c0_10 = arith.constant 0 : index
      %c0_11 = arith.constant 0 : index
      %13 = vector.load %arg7[%c0_10, %c0_11] : memref<8x128xf32, #tpu.memory_space<vmem>>, vector<8x128xf32>
      %c0_12 = arith.constant 0 : index
      %c0_13 = arith.constant 0 : index
      %14 = vector.load %arg5[%c0_12, %c0_13] : memref<1x128xf32, #tpu.memory_space<vmem>>, vector<1x128xf32>
      %15 = vector.broadcast %14 : vector<1x128xf32> to vector<8x128xf32>
      %16 = arith.addf %13, %15 : vector<8x128xf32>
      %17 = arith.truncf %16 : vector<8x128xf32> to vector<8x128xbf16>
      %c0_14 = arith.constant 0 : index
      %c0_15 = arith.constant 0 : index
      %18 = vector.load %arg6[%c0_14, %c0_15] : memref<8x128xbf16, #tpu.memory_space<vmem>>, vector<8x128xbf16>
      tpu.vector_store %arg6[%c0_14, %c0_15], %17 {strides = array<i32>} : memref<8x128xbf16, #tpu.memory_space<vmem>>, vector<8x128xbf16>,
    } else {
    }
    return
  }
  func.func @transform_0(%arg0: i32, %arg1: i32, %arg2: i32) -> (i32, i32) {
    %c0_i32 = arith.constant 0 : i32
    return %arg0, %arg2 : i32, i32
  }
  func.func @transform_1(%arg0: i32, %arg1: i32, %arg2: i32) -> (i32, i32) {
    %c0_i32 = arith.constant 0 : i32
    return %arg2, %arg1 : i32, i32
  }
  func.func @transform_2(%arg0: i32, %arg1: i32, %arg2: i32) -> (i32, i32) {
    %c0_i32 = arith.constant 0 : i32
    %c0_i32_0 = arith.constant 0 : i32
    return %c0_i32, %arg1 : i32, i32
  }
  func.func @transform_3(%arg0: i32, %arg1: i32, %arg2: i32) -> (i32, i32) {
    %c0_i32 = arith.constant 0 : i32
    return %arg0, %arg1 : i32, i32
  }
}

module attributes {stable_mosaic.version = 11 : i64} {
  func.func @_linear_kernel(%arg0: i32, %arg1: i32, %arg2: i32, %arg3: memref<16x128xbf16, #tpu.memory_space<vmem>>, %arg4: memref<128x384xbf16, #tpu.memory_space<vmem>>, %arg5: memref<1x384xf32, #tpu.memory_space<vmem>>, %arg6: memref<1x128xf32, #tpu.memory_space<vmem>>, %arg7: memref<1x128xf32, #tpu.memory_space<vmem>>, %arg8: memref<16x384xbf16, #tpu.memory_space<vmem>>, %arg9: memref<16x384xf32, #tpu.memory_space<vmem>>) attributes {dimension_semantics = [#tpu.dimension_semantics<parallel>, #tpu.dimension_semantics<parallel>, #tpu.dimension_semantics<arbitrary>], iteration_bounds = array<i64: 1, 1, 1>, scalar_prefetch = 0 : i64, scratch_operands = 1 : i64, tpu.core_type = #tpu.core_type<tc>, window_params = [{transform_indices = @transform_0, window_bounds = array<i64: 16, 128>}, {transform_indices = @transform_1, window_bounds = array<i64: 128, 384>}, {transform_indices = @transform_2, window_bounds = array<i64: 1, 384>}, {pipeline_mode = #tpu.pipeline_mode<synchronous>, transform_indices = @transform_3, window_bounds = array<i64: 1, 128>}, {pipeline_mode = #tpu.pipeline_mode<synchronous>, transform_indices = @transform_4, window_bounds = array<i64: 1, 128>}, {transform_indices = @transform_5, window_bounds = array<i64: 16, 384>}]} {
    %c0_i32 = arith.constant 0 : i32
    %0 = arith.cmpi eq, %arg2, %c0_i32 : i32
    %1 = arith.extui %0 : i1 to i32
    %c0_i32_0 = arith.constant 0 : i32
    %2 = arith.cmpi ne, %1, %c0_i32_0 : i32
    scf.if %2 {
      %cst_19 = arith.constant 0.000000e+00 : f32
      %36 = vector.broadcast %cst_19 : f32 to vector<16x384xf32>
      %c0_20 = arith.constant 0 : index
      %c0_21 = arith.constant 0 : index
      %37 = vector.load %arg9[%c0_20, %c0_21] : memref<16x384xf32, #tpu.memory_space<vmem>>, vector<16x384xf32>
      tpu.vector_store %arg9[%c0_20, %c0_21], %36 {strides = array<i32>} : memref<16x384xf32, #tpu.memory_space<vmem>>, vector<16x384xf32>,
    } else {
    }
    %c0 = arith.constant 0 : index
    %c0_1 = arith.constant 0 : index
    %3 = vector.load %arg3[%c0, %c0_1] : memref<16x128xbf16, #tpu.memory_space<vmem>>, vector<16x128xbf16>
    %4 = arith.extf %3 : vector<16x128xbf16> to vector<16x128xf32>
    %c0_2 = arith.constant 0 : index
    %c0_3 = arith.constant 0 : index
    %5 = vector.load %arg6[%c0_2, %c0_3] : memref<1x128xf32, #tpu.memory_space<vmem>>, vector<1x128xf32>
    %c0_4 = arith.constant 0 : index
    %c0_5 = arith.constant 0 : index
    %6 = vector.load %arg7[%c0_4, %c0_5] : memref<1x128xf32, #tpu.memory_space<vmem>>, vector<1x128xf32>
    %cst = arith.constant dense<0.000000e+00> : vector<16xf32>
    %7 = vector.multi_reduction <add>, %4, %cst [1] : vector<16x128xf32> to vector<16xf32>
    %8 = vector.shape_cast %7 : vector<16xf32> to vector<16x1xf32>
    %cst_6 = arith.constant 1.280000e+02 : f32
    %9 = vector.broadcast %cst_6 : f32 to vector<16x1xf32>
    %10 = arith.divf %8, %9 : vector<16x1xf32>
    %11 = vector.broadcast %10 : vector<16x1xf32> to vector<16x128xf32>
    %12 = arith.subf %4, %11 : vector<16x128xf32>
    %13 = arith.mulf %12, %12 : vector<16x128xf32>
    %cst_7 = arith.constant dense<0.000000e+00> : vector<16xf32>
    %14 = vector.multi_reduction <add>, %13, %cst_7 [1] : vector<16x128xf32> to vector<16xf32>
    %15 = vector.shape_cast %14 : vector<16xf32> to vector<16x1xf32>
    %cst_8 = arith.constant 1.280000e+02 : f32
    %16 = vector.broadcast %cst_8 : f32 to vector<16x1xf32>
    %17 = arith.divf %15, %16 : vector<16x1xf32>
    %cst_9 = arith.constant 9.99999997E-7 : f32
    %18 = vector.broadcast %cst_9 : f32 to vector<16x1xf32>
    %19 = arith.addf %17, %18 : vector<16x1xf32>
    %20 = math.rsqrt %19 : vector<16x1xf32>
    %21 = vector.broadcast %20 : vector<16x1xf32> to vector<16x128xf32>
    %22 = arith.mulf %12, %21 : vector<16x128xf32>
    %23 = vector.broadcast %5 : vector<1x128xf32> to vector<16x128xf32>
    %24 = arith.mulf %22, %23 : vector<16x128xf32>
    %25 = vector.broadcast %6 : vector<1x128xf32> to vector<16x128xf32>
    %26 = arith.addf %24, %25 : vector<16x128xf32>
    %c0_10 = arith.constant 0 : index
    %c0_11 = arith.constant 0 : index
    %27 = vector.load %arg9[%c0_10, %c0_11] : memref<16x384xf32, #tpu.memory_space<vmem>>, vector<16x384xf32>
    %28 = arith.truncf %26 : vector<16x128xf32> to vector<16x128xbf16>
    %c0_12 = arith.constant 0 : index
    %c0_13 = arith.constant 0 : index
    %29 = vector.load %arg4[%c0_12, %c0_13] : memref<128x384xbf16, #tpu.memory_space<vmem>>, vector<128x384xbf16>
    %cst_14 = arith.constant dense<0.000000e+00> : vector<16x384xf32>
    %30 = tpu.matmul %28, %29, %cst_14 {dimension_numbers = #tpu.dot_dimension_numbers<[1], [0], [0], [1], [0, 0, 1, 1], [], []>} : vector<16x128xbf16>, vector<128x384xbf16>, vector<16x384xf32> -> vector<16x384xf32>
    %31 = arith.addf %27, %30 : vector<16x384xf32>
    %c0_15 = arith.constant 0 : index
    %c0_16 = arith.constant 0 : index
    %32 = vector.load %arg9[%c0_15, %c0_16] : memref<16x384xf32, #tpu.memory_space<vmem>>, vector<16x384xf32>
    tpu.vector_store %arg9[%c0_15, %c0_16], %31 {strides = array<i32>} : memref<16x384xf32, #tpu.memory_space<vmem>>, vector<16x384xf32>,
    %c0_i32_17 = arith.constant 0 : i32
    %33 = arith.cmpi eq, %arg2, %c0_i32_17 : i32
    %34 = arith.extui %33 : i1 to i32
    %c0_i32_18 = arith.constant 0 : i32
    %35 = arith.cmpi ne, %34, %c0_i32_18 : i32
    scf.if %35 {
      %c0_19 = arith.constant 0 : index
      %c0_20 = arith.constant 0 : index
      %36 = vector.load %arg9[%c0_19, %c0_20] : memref<16x384xf32, #tpu.memory_space<vmem>>, vector<16x384xf32>
      %c0_21 = arith.constant 0 : index
      %c0_22 = arith.constant 0 : index
      %37 = vector.load %arg5[%c0_21, %c0_22] : memref<1x384xf32, #tpu.memory_space<vmem>>, vector<1x384xf32>
      %38 = vector.broadcast %37 : vector<1x384xf32> to vector<16x384xf32>
      %39 = arith.addf %36, %38 : vector<16x384xf32>
      %40 = arith.truncf %39 : vector<16x384xf32> to vector<16x384xbf16>
      %c0_23 = arith.constant 0 : index
      %c0_24 = arith.constant 0 : index
      %41 = vector.load %arg8[%c0_23, %c0_24] : memref<16x384xbf16, #tpu.memory_space<vmem>>, vector<16x384xbf16>
      tpu.vector_store %arg8[%c0_23, %c0_24], %40 {strides = array<i32>} : memref<16x384xbf16, #tpu.memory_space<vmem>>, vector<16x384xbf16>,
    } else {
    }
    return
  }
  func.func @transform_0(%arg0: i32, %arg1: i32, %arg2: i32) -> (i32, i32) {
    %c0_i32 = arith.constant 0 : i32
    return %arg0, %arg2 : i32, i32
  }
  func.func @transform_1(%arg0: i32, %arg1: i32, %arg2: i32) -> (i32, i32) {
    %c0_i32 = arith.constant 0 : i32
    return %arg2, %arg1 : i32, i32
  }
  func.func @transform_2(%arg0: i32, %arg1: i32, %arg2: i32) -> (i32, i32) {
    %c0_i32 = arith.constant 0 : i32
    %c0_i32_0 = arith.constant 0 : i32
    return %c0_i32, %arg1 : i32, i32
  }
  func.func @transform_3(%arg0: i32, %arg1: i32, %arg2: i32) -> (i32, i32) {
    %c0_i32 = arith.constant 0 : i32
    %c0_i32_0 = arith.constant 0 : i32
    %c0_i32_1 = arith.constant 0 : i32
    return %c0_i32, %c0_i32_0 : i32, i32
  }
  func.func @transform_4(%arg0: i32, %arg1: i32, %arg2: i32) -> (i32, i32) {
    %c0_i32 = arith.constant 0 : i32
    %c0_i32_0 = arith.constant 0 : i32
    %c0_i32_1 = arith.constant 0 : i32
    return %c0_i32, %c0_i32_0 : i32, i32
  }
  func.func @transform_5(%arg0: i32, %arg1: i32, %arg2: i32) -> (i32, i32) {
    %c0_i32 = arith.constant 0 : i32
    return %arg0, %arg1 : i32, i32
  }
}

module attributes {stable_mosaic.version = 11 : i64} {
  func.func @_attention_kernel(%arg0: i32, %arg1: i32, %arg2: i32, %arg3: memref<1x8x128xbf16, #tpu.memory_space<vmem>>, %arg4: memref<1x8x128xbf16, #tpu.memory_space<vmem>>, %arg5: memref<1x8x128xbf16, #tpu.memory_space<vmem>>, %arg6: memref<1x8x128xbf16, #tpu.memory_space<vmem>>) attributes {dimension_semantics = [#tpu.dimension_semantics<parallel>, #tpu.dimension_semantics<parallel>, #tpu.dimension_semantics<parallel>], iteration_bounds = array<i64: 2, 1, 1>, scalar_prefetch = 0 : i64, scratch_operands = 0 : i64, tpu.core_type = #tpu.core_type<tc>, window_params = [{transform_indices = @transform_0, window_bounds = array<i64: 1, 8, 128>}, {transform_indices = @transform_1, window_bounds = array<i64: 1, 8, 128>}, {transform_indices = @transform_2, window_bounds = array<i64: 1, 8, 128>}, {transform_indices = @transform_3, window_bounds = array<i64: 1, 8, 128>}]} {
    %0 = tpu.iota {dimensions = array<i32: 1>} : vector<1x8xi32>
    %c5_i32 = arith.constant 5 : i32
    %1 = vector.broadcast %c5_i32 : i32 to vector<1x8xi32>
    %2 = arith.cmpi slt, %0, %1 : vector<1x8xi32>
    %c0 = arith.constant 0 : index
    %c0_0 = arith.constant 0 : index
    %c0_1 = arith.constant 0 : index
    %3 = vector.load %arg3[%c0, %c0_0, %c0_1] : memref<1x8x128xbf16, #tpu.memory_space<vmem>>, vector<1x8x64xbf16>
    %4 = vector.shape_cast %3 : vector<1x8x64xbf16> to vector<8x64xbf16>
    %5 = arith.extf %4 : vector<8x64xbf16> to vector<8x64xf32>
    %cst = arith.constant 1.250000e-01 : f32
    %6 = vector.broadcast %cst : f32 to vector<8x64xf32>
    %7 = arith.mulf %5, %6 : vector<8x64xf32>
    %8 = arith.truncf %7 : vector<8x64xf32> to vector<8x64xbf16>
    %c0_2 = arith.constant 0 : index
    %c0_3 = arith.constant 0 : index
    %c0_4 = arith.constant 0 : index
    %9 = vector.load %arg4[%c0_2, %c0_3, %c0_4] : memref<1x8x128xbf16, #tpu.memory_space<vmem>>, vector<1x8x64xbf16>
    %10 = vector.shape_cast %9 : vector<1x8x64xbf16> to vector<8x64xbf16>
    %c0_5 = arith.constant 0 : index
    %c0_6 = arith.constant 0 : index
    %c0_7 = arith.constant 0 : index
    %11 = vector.load %arg5[%c0_5, %c0_6, %c0_7] : memref<1x8x128xbf16, #tpu.memory_space<vmem>>, vector<1x8x64xbf16>
    %12 = vector.shape_cast %11 : vector<1x8x64xbf16> to vector<8x64xbf16>
    %cst_8 = arith.constant dense<0.000000e+00> : vector<8x8xf32>
    %13 = tpu.matmul %8, %10, %cst_8 {dimension_numbers = #tpu.dot_dimension_numbers<[1], [1], [0], [0], [0, 0, 1, 0], [], []>} : vector<8x64xbf16>, vector<8x64xbf16>, vector<8x8xf32> -> vector<8x8xf32>
    %cst_9 = arith.constant -1.000000e+30 : f32
    %14 = vector.shape_cast %2 : vector<1x8xi1> to vector<1x8xi1>
    %15 = vector.broadcast %14 : vector<1x8xi1> to vector<8x8xi1>
    %16 = vector.broadcast %cst_9 : f32 to vector<8x8xf32>
    %17 = arith.select %15, %13, %16 : vector<8x8xi1>, vector<8x8xf32>
    %cst_10 = arith.constant dense<0xFF800000> : vector<8xf32>
    %18 = vector.multi_reduction <maximumf>, %17, %cst_10 [1] : vector<8x8xf32> to vector<8xf32>
    %19 = vector.shape_cast %18 : vector<8xf32> to vector<8x1xf32>
    %20 = vector.broadcast %19 : vector<8x1xf32> to vector<8x8xf32>
    %21 = arith.subf %17, %20 : vector<8x8xf32>
    %22 = math.exp %21 : vector<8x8xf32>
    %cst_11 = arith.constant dense<0.000000e+00> : vector<8xf32>
    %23 = vector.multi_reduction <add>, %22, %cst_11 [1] : vector<8x8xf32> to vector<8xf32>
    %24 = vector.shape_cast %23 : vector<8xf32> to vector<8x1xf32>
    %25 = arith.truncf %22 : vector<8x8xf32> to vector<8x8xbf16>
    %cst_12 = arith.constant dense<0.000000e+00> : vector<8x64xf32>
    %26 = tpu.matmul %25, %12, %cst_12 {dimension_numbers = #tpu.dot_dimension_numbers<[1], [0], [0], [1], [0, 0, 1, 1], [], []>} : vector<8x8xbf16>, vector<8x64xbf16>, vector<8x64xf32> -> vector<8x64xf32>
    %27 = tpu.reciprocal %24 {approx = true} : vector<8x1xf32> -> vector<8x1xf32>
    %28 = vector.broadcast %27 : vector<8x1xf32> to vector<8x64xf32>
    %29 = arith.mulf %26, %28 : vector<8x64xf32>
    %c0_13 = arith.constant 0 : index
    %c0_14 = arith.constant 0 : index
    %c64 = arith.constant 64 : index
    %30 = vector.load %arg3[%c0_13, %c0_14, %c64] : memref<1x8x128xbf16, #tpu.memory_space<vmem>>, vector<1x8x64xbf16>
    %31 = vector.shape_cast %30 : vector<1x8x64xbf16> to vector<8x64xbf16>
    %32 = arith.extf %31 : vector<8x64xbf16> to vector<8x64xf32>
    %cst_15 = arith.constant 1.250000e-01 : f32
    %33 = vector.broadcast %cst_15 : f32 to vector<8x64xf32>
    %34 = arith.mulf %32, %33 : vector<8x64xf32>
    %35 = arith.truncf %34 : vector<8x64xf32> to vector<8x64xbf16>
    %c0_16 = arith.constant 0 : index
    %c0_17 = arith.constant 0 : index
    %c64_18 = arith.constant 64 : index
    %36 = vector.load %arg4[%c0_16, %c0_17, %c64_18] : memref<1x8x128xbf16, #tpu.memory_space<vmem>>, vector<1x8x64xbf16>
    %37 = vector.shape_cast %36 : vector<1x8x64xbf16> to vector<8x64xbf16>
    %c0_19 = arith.constant 0 : index
    %c0_20 = arith.constant 0 : index
    %c64_21 = arith.constant 64 : index
    %38 = vector.load %arg5[%c0_19, %c0_20, %c64_21] : memref<1x8x128xbf16, #tpu.memory_space<vmem>>, vector<1x8x64xbf16>
    %39 = vector.shape_cast %38 : vector<1x8x64xbf16> to vector<8x64xbf16>
    %cst_22 = arith.constant dense<0.000000e+00> : vector<8x8xf32>
    %40 = tpu.matmul %35, %37, %cst_22 {dimension_numbers = #tpu.dot_dimension_numbers<[1], [1], [0], [0], [0, 0, 1, 0], [], []>} : vector<8x64xbf16>, vector<8x64xbf16>, vector<8x8xf32> -> vector<8x8xf32>
    %cst_23 = arith.constant -1.000000e+30 : f32
    %41 = vector.shape_cast %2 : vector<1x8xi1> to vector<1x8xi1>
    %42 = vector.broadcast %41 : vector<1x8xi1> to vector<8x8xi1>
    %43 = vector.broadcast %cst_23 : f32 to vector<8x8xf32>
    %44 = arith.select %42, %40, %43 : vector<8x8xi1>, vector<8x8xf32>
    %cst_24 = arith.constant dense<0xFF800000> : vector<8xf32>
    %45 = vector.multi_reduction <maximumf>, %44, %cst_24 [1] : vector<8x8xf32> to vector<8xf32>
    %46 = vector.shape_cast %45 : vector<8xf32> to vector<8x1xf32>
    %47 = vector.broadcast %46 : vector<8x1xf32> to vector<8x8xf32>
    %48 = arith.subf %44, %47 : vector<8x8xf32>
    %49 = math.exp %48 : vector<8x8xf32>
    %cst_25 = arith.constant dense<0.000000e+00> : vector<8xf32>
    %50 = vector.multi_reduction <add>, %49, %cst_25 [1] : vector<8x8xf32> to vector<8xf32>
    %51 = vector.shape_cast %50 : vector<8xf32> to vector<8x1xf32>
    %52 = arith.truncf %49 : vector<8x8xf32> to vector<8x8xbf16>
    %cst_26 = arith.constant dense<0.000000e+00> : vector<8x64xf32>
    %53 = tpu.matmul %52, %39, %cst_26 {dimension_numbers = #tpu.dot_dimension_numbers<[1], [0], [0], [1], [0, 0, 1, 1], [], []>} : vector<8x8xbf16>, vector<8x64xbf16>, vector<8x64xf32> -> vector<8x64xf32>
    %54 = tpu.reciprocal %51 {approx = true} : vector<8x1xf32> -> vector<8x1xf32>
    %55 = vector.broadcast %54 : vector<8x1xf32> to vector<8x64xf32>
    %56 = arith.mulf %53, %55 : vector<8x64xf32>
    %57 = tpu.concatenate %29, %56 in 1 : vector<8x64xf32>, vector<8x64xf32> -> vector<8x128xf32>
    %58 = arith.truncf %57 : vector<8x128xf32> to vector<8x128xbf16>
    %c0_27 = arith.constant 0 : index
    %c0_28 = arith.constant 0 : index
    %c0_29 = arith.constant 0 : index
    %59 = vector.load %arg6[%c0_27, %c0_28, %c0_29] : memref<1x8x128xbf16, #tpu.memory_space<vmem>>, vector<1x8x128xbf16>
    %60 = vector.shape_cast %59 : vector<1x8x128xbf16> to vector<8x128xbf16>
    %61 = vector.shape_cast %58 : vector<8x128xbf16> to vector<1x8x128xbf16>
    tpu.vector_store %arg6[%c0_27, %c0_28, %c0_29], %61 {strides = array<i32>} : memref<1x8x128xbf16, #tpu.memory_space<vmem>>, vector<1x8x128xbf16>,
    return
  }
  func.func @transform_0(%arg0: i32, %arg1: i32, %arg2: i32) -> (i32, i32, i32) {
    %c0_i32 = arith.constant 0 : i32
    return %arg0, %arg2, %arg1 : i32, i32, i32
  }
  func.func @transform_1(%arg0: i32, %arg1: i32, %arg2: i32) -> (i32, i32, i32) {
    %c1_i32 = arith.constant 1 : i32
    %0 = arith.addi %c1_i32, %arg1 : i32
    %c0_i32 = arith.constant 0 : i32
    %c0_i32_0 = arith.constant 0 : i32
    return %arg0, %c0_i32, %0 : i32, i32, i32
  }
  func.func @transform_2(%arg0: i32, %arg1: i32, %arg2: i32) -> (i32, i32, i32) {
    %c2_i32 = arith.constant 2 : i32
    %0 = arith.addi %c2_i32, %arg1 : i32
    %c0_i32 = arith.constant 0 : i32
    %c0_i32_0 = arith.constant 0 : i32
    return %arg0, %c0_i32, %0 : i32, i32, i32
  }
  func.func @transform_3(%arg0: i32, %arg1: i32, %arg2: i32) -> (i32, i32, i32) {
    %c0_i32 = arith.constant 0 : i32
    return %arg0, %arg2, %arg1 : i32, i32, i32
  }
}

module attributes {stable_mosaic.version = 11 : i64} {
  func.func @_linear_kernel(%arg0: i32, %arg1: i32, %arg2: i32, %arg3: memref<16x128xbf16, #tpu.memory_space<vmem>>, %arg4: memref<128x128xbf16, #tpu.memory_space<vmem>>, %arg5: memref<1x128xf32, #tpu.memory_space<vmem>>, %arg6: memref<1x128xf32, #tpu.memory_space<vmem>>, %arg7: memref<16x128xbf16, #tpu.memory_space<vmem>>, %arg8: memref<16x128xbf16, #tpu.memory_space<vmem>>, %arg9: memref<16x128xf32, #tpu.memory_space<vmem>>) attributes {dimension_semantics = [#tpu.dimension_semantics<parallel>, #tpu.dimension_semantics<parallel>, #tpu.dimension_semantics<arbitrary>], iteration_bounds = array<i64: 1, 1, 1>, scalar_prefetch = 0 : i64, scratch_operands = 1 : i64, tpu.core_type = #tpu.core_type<tc>, window_params = [{transform_indices = @transform_0, window_bounds = array<i64: 16, 128>}, {transform_indices = @transform_1, window_bounds = array<i64: 128, 128>}, {transform_indices = @transform_2, window_bounds = array<i64: 1, 128>}, {transform_indices = @transform_3, window_bounds = array<i64: 1, 128>}, {transform_indices = @transform_4, window_bounds = array<i64: 16, 128>}, {transform_indices = @transform_5, window_bounds = array<i64: 16, 128>}]} {
    %c0_i32 = arith.constant 0 : i32
    %0 = arith.cmpi eq, %arg2, %c0_i32 : i32
    %1 = arith.extui %0 : i1 to i32
    %c0_i32_0 = arith.constant 0 : i32
    %2 = arith.cmpi ne, %1, %c0_i32_0 : i32
    scf.if %2 {
      %cst_10 = arith.constant 0.000000e+00 : f32
      %12 = vector.broadcast %cst_10 : f32 to vector<16x128xf32>
      %c0_11 = arith.constant 0 : index
      %c0_12 = arith.constant 0 : index
      %13 = vector.load %arg9[%c0_11, %c0_12] : memref<16x128xf32, #tpu.memory_space<vmem>>, vector<16x128xf32>
      tpu.vector_store %arg9[%c0_11, %c0_12], %12 {strides = array<i32>} : memref<16x128xf32, #tpu.memory_space<vmem>>, vector<16x128xf32>,
    } else {
    }
    %c0 = arith.constant 0 : index
    %c0_1 = arith.constant 0 : index
    %3 = vector.load %arg3[%c0, %c0_1] : memref<16x128xbf16, #tpu.memory_space<vmem>>, vector<16x128xbf16>
    %c0_2 = arith.constant 0 : index
    %c0_3 = arith.constant 0 : index
    %4 = vector.load %arg9[%c0_2, %c0_3] : memref<16x128xf32, #tpu.memory_space<vmem>>, vector<16x128xf32>
    %c0_4 = arith.constant 0 : index
    %c0_5 = arith.constant 0 : index
    %5 = vector.load %arg4[%c0_4, %c0_5] : memref<128x128xbf16, #tpu.memory_space<vmem>>, vector<128x128xbf16>
    %cst = arith.constant dense<0.000000e+00> : vector<16x128xf32>
    %6 = tpu.matmul %3, %5, %cst {dimension_numbers = #tpu.dot_dimension_numbers<[1], [0], [0], [1], [0, 0, 1, 1], [], []>} : vector<16x128xbf16>, vector<128x128xbf16>, vector<16x128xf32> -> vector<16x128xf32>
    %7 = arith.addf %4, %6 : vector<16x128xf32>
    %c0_6 = arith.constant 0 : index
    %c0_7 = arith.constant 0 : index
    %8 = vector.load %arg9[%c0_6, %c0_7] : memref<16x128xf32, #tpu.memory_space<vmem>>, vector<16x128xf32>
    tpu.vector_store %arg9[%c0_6, %c0_7], %7 {strides = array<i32>} : memref<16x128xf32, #tpu.memory_space<vmem>>, vector<16x128xf32>,
    %c0_i32_8 = arith.constant 0 : i32
    %9 = arith.cmpi eq, %arg2, %c0_i32_8 : i32
    %10 = arith.extui %9 : i1 to i32
    %c0_i32_9 = arith.constant 0 : i32
    %11 = arith.cmpi ne, %10, %c0_i32_9 : i32
    scf.if %11 {
      %c0_10 = arith.constant 0 : index
      %c0_11 = arith.constant 0 : index
      %12 = vector.load %arg9[%c0_10, %c0_11] : memref<16x128xf32, #tpu.memory_space<vmem>>, vector<16x128xf32>
      %c0_12 = arith.constant 0 : index
      %c0_13 = arith.constant 0 : index
      %13 = vector.load %arg5[%c0_12, %c0_13] : memref<1x128xf32, #tpu.memory_space<vmem>>, vector<1x128xf32>
      %14 = vector.broadcast %13 : vector<1x128xf32> to vector<16x128xf32>
      %15 = arith.addf %12, %14 : vector<16x128xf32>
      %c0_14 = arith.constant 0 : index
      %c0_15 = arith.constant 0 : index
      %16 = vector.load %arg7[%c0_14, %c0_15] : memref<16x128xbf16, #tpu.memory_space<vmem>>, vector<16x128xbf16>
      %17 = arith.extf %16 : vector<16x128xbf16> to vector<16x128xf32>
      %c0_16 = arith.constant 0 : index
      %c0_17 = arith.constant 0 : index
      %18 = vector.load %arg6[%c0_16, %c0_17] : memref<1x128xf32, #tpu.memory_space<vmem>>, vector<1x128xf32>
      %19 = vector.broadcast %18 : vector<1x128xf32> to vector<16x128xf32>
      %20 = arith.mulf %15, %19 : vector<16x128xf32>
      %21 = arith.addf %17, %20 : vector<16x128xf32>
      %22 = arith.truncf %21 : vector<16x128xf32> to vector<16x128xbf16>
      %c0_18 = arith.constant 0 : index
      %c0_19 = arith.constant 0 : index
      %23 = vector.load %arg8[%c0_18, %c0_19] : memref<16x128xbf16, #tpu.memory_space<vmem>>, vector<16x128xbf16>
      tpu.vector_store %arg8[%c0_18, %c0_19], %22 {strides = array<i32>} : memref<16x128xbf16, #tpu.memory_space<vmem>>, vector<16x128xbf16>,
    } else {
    }
    return
  }
  func.func @transform_0(%arg0: i32, %arg1: i32, %arg2: i32) -> (i32, i32) {
    %c0_i32 = arith.constant 0 : i32
    return %arg0, %arg2 : i32, i32
  }
  func.func @transform_1(%arg0: i32, %arg1: i32, %arg2: i32) -> (i32, i32) {
    %c0_i32 = arith.constant 0 : i32
    return %arg2, %arg1 : i32, i32
  }
  func.func @transform_2(%arg0: i32, %arg1: i32, %arg2: i32) -> (i32, i32) {
    %c0_i32 = arith.constant 0 : i32
    %c0_i32_0 = arith.constant 0 : i32
    return %c0_i32, %arg1 : i32, i32
  }
  func.func @transform_3(%arg0: i32, %arg1: i32, %arg2: i32) -> (i32, i32) {
    %c0_i32 = arith.constant 0 : i32
    %c0_i32_0 = arith.constant 0 : i32
    return %c0_i32, %arg1 : i32, i32
  }
  func.func @transform_4(%arg0: i32, %arg1: i32, %arg2: i32) -> (i32, i32) {
    %c0_i32 = arith.constant 0 : i32
    return %arg0, %arg1 : i32, i32
  }
  func.func @transform_5(%arg0: i32, %arg1: i32, %arg2: i32) -> (i32, i32) {
    %c0_i32 = arith.constant 0 : i32
    return %arg0, %arg1 : i32, i32
  }
}

module attributes {stable_mosaic.version = 11 : i64} {
  func.func @_linear_kernel(%arg0: i32, %arg1: i32, %arg2: i32, %arg3: memref<16x512xbf16, #tpu.memory_space<vmem>>, %arg4: memref<512x128xbf16, #tpu.memory_space<vmem>>, %arg5: memref<1x128xf32, #tpu.memory_space<vmem>>, %arg6: memref<1x128xf32, #tpu.memory_space<vmem>>, %arg7: memref<16x128xbf16, #tpu.memory_space<vmem>>, %arg8: memref<16x128xbf16, #tpu.memory_space<vmem>>, %arg9: memref<16x128xf32, #tpu.memory_space<vmem>>) attributes {dimension_semantics = [#tpu.dimension_semantics<parallel>, #tpu.dimension_semantics<parallel>, #tpu.dimension_semantics<arbitrary>], iteration_bounds = array<i64: 1, 1, 1>, scalar_prefetch = 0 : i64, scratch_operands = 1 : i64, tpu.core_type = #tpu.core_type<tc>, window_params = [{transform_indices = @transform_0, window_bounds = array<i64: 16, 512>}, {transform_indices = @transform_1, window_bounds = array<i64: 512, 128>}, {transform_indices = @transform_2, window_bounds = array<i64: 1, 128>}, {transform_indices = @transform_3, window_bounds = array<i64: 1, 128>}, {transform_indices = @transform_4, window_bounds = array<i64: 16, 128>}, {transform_indices = @transform_5, window_bounds = array<i64: 16, 128>}]} {
    %c0_i32 = arith.constant 0 : i32
    %0 = arith.cmpi eq, %arg2, %c0_i32 : i32
    %1 = arith.extui %0 : i1 to i32
    %c0_i32_0 = arith.constant 0 : i32
    %2 = arith.cmpi ne, %1, %c0_i32_0 : i32
    scf.if %2 {
      %cst_10 = arith.constant 0.000000e+00 : f32
      %12 = vector.broadcast %cst_10 : f32 to vector<16x128xf32>
      %c0_11 = arith.constant 0 : index
      %c0_12 = arith.constant 0 : index
      %13 = vector.load %arg9[%c0_11, %c0_12] : memref<16x128xf32, #tpu.memory_space<vmem>>, vector<16x128xf32>
      tpu.vector_store %arg9[%c0_11, %c0_12], %12 {strides = array<i32>} : memref<16x128xf32, #tpu.memory_space<vmem>>, vector<16x128xf32>,
    } else {
    }
    %c0 = arith.constant 0 : index
    %c0_1 = arith.constant 0 : index
    %3 = vector.load %arg3[%c0, %c0_1] : memref<16x512xbf16, #tpu.memory_space<vmem>>, vector<16x512xbf16>
    %c0_2 = arith.constant 0 : index
    %c0_3 = arith.constant 0 : index
    %4 = vector.load %arg9[%c0_2, %c0_3] : memref<16x128xf32, #tpu.memory_space<vmem>>, vector<16x128xf32>
    %c0_4 = arith.constant 0 : index
    %c0_5 = arith.constant 0 : index
    %5 = vector.load %arg4[%c0_4, %c0_5] : memref<512x128xbf16, #tpu.memory_space<vmem>>, vector<512x128xbf16>
    %cst = arith.constant dense<0.000000e+00> : vector<16x128xf32>
    %6 = tpu.matmul %3, %5, %cst {dimension_numbers = #tpu.dot_dimension_numbers<[1], [0], [0], [1], [0, 0, 1, 1], [], []>} : vector<16x512xbf16>, vector<512x128xbf16>, vector<16x128xf32> -> vector<16x128xf32>
    %7 = arith.addf %4, %6 : vector<16x128xf32>
    %c0_6 = arith.constant 0 : index
    %c0_7 = arith.constant 0 : index
    %8 = vector.load %arg9[%c0_6, %c0_7] : memref<16x128xf32, #tpu.memory_space<vmem>>, vector<16x128xf32>
    tpu.vector_store %arg9[%c0_6, %c0_7], %7 {strides = array<i32>} : memref<16x128xf32, #tpu.memory_space<vmem>>, vector<16x128xf32>,
    %c0_i32_8 = arith.constant 0 : i32
    %9 = arith.cmpi eq, %arg2, %c0_i32_8 : i32
    %10 = arith.extui %9 : i1 to i32
    %c0_i32_9 = arith.constant 0 : i32
    %11 = arith.cmpi ne, %10, %c0_i32_9 : i32
    scf.if %11 {
      %c0_10 = arith.constant 0 : index
      %c0_11 = arith.constant 0 : index
      %12 = vector.load %arg9[%c0_10, %c0_11] : memref<16x128xf32, #tpu.memory_space<vmem>>, vector<16x128xf32>
      %c0_12 = arith.constant 0 : index
      %c0_13 = arith.constant 0 : index
      %13 = vector.load %arg5[%c0_12, %c0_13] : memref<1x128xf32, #tpu.memory_space<vmem>>, vector<1x128xf32>
      %14 = vector.broadcast %13 : vector<1x128xf32> to vector<16x128xf32>
      %15 = arith.addf %12, %14 : vector<16x128xf32>
      %c0_14 = arith.constant 0 : index
      %c0_15 = arith.constant 0 : index
      %16 = vector.load %arg7[%c0_14, %c0_15] : memref<16x128xbf16, #tpu.memory_space<vmem>>, vector<16x128xbf16>
      %17 = arith.extf %16 : vector<16x128xbf16> to vector<16x128xf32>
      %c0_16 = arith.constant 0 : index
      %c0_17 = arith.constant 0 : index
      %18 = vector.load %arg6[%c0_16, %c0_17] : memref<1x128xf32, #tpu.memory_space<vmem>>, vector<1x128xf32>
      %19 = vector.broadcast %18 : vector<1x128xf32> to vector<16x128xf32>
      %20 = arith.mulf %15, %19 : vector<16x128xf32>
      %21 = arith.addf %17, %20 : vector<16x128xf32>
      %22 = arith.truncf %21 : vector<16x128xf32> to vector<16x128xbf16>
      %c0_18 = arith.constant 0 : index
      %c0_19 = arith.constant 0 : index
      %23 = vector.load %arg8[%c0_18, %c0_19] : memref<16x128xbf16, #tpu.memory_space<vmem>>, vector<16x128xbf16>
      tpu.vector_store %arg8[%c0_18, %c0_19], %22 {strides = array<i32>} : memref<16x128xbf16, #tpu.memory_space<vmem>>, vector<16x128xbf16>,
    } else {
    }
    return
  }
  func.func @transform_0(%arg0: i32, %arg1: i32, %arg2: i32) -> (i32, i32) {
    %c0_i32 = arith.constant 0 : i32
    return %arg0, %arg2 : i32, i32
  }
  func.func @transform_1(%arg0: i32, %arg1: i32, %arg2: i32) -> (i32, i32) {
    %c0_i32 = arith.constant 0 : i32
    return %arg2, %arg1 : i32, i32
  }
  func.func @transform_2(%arg0: i32, %arg1: i32, %arg2: i32) -> (i32, i32) {
    %c0_i32 = arith.constant 0 : i32
    %c0_i32_0 = arith.constant 0 : i32
    return %c0_i32, %arg1 : i32, i32
  }
  func.func @transform_3(%arg0: i32, %arg1: i32, %arg2: i32) -> (i32, i32) {
    %c0_i32 = arith.constant 0 : i32
    %c0_i32_0 = arith.constant 0 : i32
    return %c0_i32, %arg1 : i32, i32
  }
  func.func @transform_4(%arg0: i32, %arg1: i32, %arg2: i32) -> (i32, i32) {
    %c0_i32 = arith.constant 0 : i32
    return %arg0, %arg1 : i32, i32
  }
  func.func @transform_5(%arg0: i32, %arg1: i32, %arg2: i32) -> (i32, i32) {
    %c0_i32 = arith.constant 0 : i32
    return %arg0, %arg1 : i32, i32
  }
}

module attributes {stable_mosaic.version = 11 : i64} {
  func.func @_linear_kernel(%arg0: i32, %arg1: i32, %arg2: i32, %arg3: memref<16x128xbf16, #tpu.memory_space<vmem>>, %arg4: memref<128x512xbf16, #tpu.memory_space<vmem>>, %arg5: memref<1x512xf32, #tpu.memory_space<vmem>>, %arg6: memref<1x128xf32, #tpu.memory_space<vmem>>, %arg7: memref<1x128xf32, #tpu.memory_space<vmem>>, %arg8: memref<16x512xbf16, #tpu.memory_space<vmem>>, %arg9: memref<16x512xf32, #tpu.memory_space<vmem>>) attributes {dimension_semantics = [#tpu.dimension_semantics<parallel>, #tpu.dimension_semantics<parallel>, #tpu.dimension_semantics<arbitrary>], iteration_bounds = array<i64: 1, 1, 1>, scalar_prefetch = 0 : i64, scratch_operands = 1 : i64, tpu.core_type = #tpu.core_type<tc>, window_params = [{transform_indices = @transform_0, window_bounds = array<i64: 16, 128>}, {transform_indices = @transform_1, window_bounds = array<i64: 128, 512>}, {transform_indices = @transform_2, window_bounds = array<i64: 1, 512>}, {pipeline_mode = #tpu.pipeline_mode<synchronous>, transform_indices = @transform_3, window_bounds = array<i64: 1, 128>}, {pipeline_mode = #tpu.pipeline_mode<synchronous>, transform_indices = @transform_4, window_bounds = array<i64: 1, 128>}, {transform_indices = @transform_5, window_bounds = array<i64: 16, 512>}]} {
    %c0_i32 = arith.constant 0 : i32
    %0 = arith.cmpi eq, %arg2, %c0_i32 : i32
    %1 = arith.extui %0 : i1 to i32
    %c0_i32_0 = arith.constant 0 : i32
    %2 = arith.cmpi ne, %1, %c0_i32_0 : i32
    scf.if %2 {
      %cst_19 = arith.constant 0.000000e+00 : f32
      %36 = vector.broadcast %cst_19 : f32 to vector<16x512xf32>
      %c0_20 = arith.constant 0 : index
      %c0_21 = arith.constant 0 : index
      %37 = vector.load %arg9[%c0_20, %c0_21] : memref<16x512xf32, #tpu.memory_space<vmem>>, vector<16x512xf32>
      tpu.vector_store %arg9[%c0_20, %c0_21], %36 {strides = array<i32>} : memref<16x512xf32, #tpu.memory_space<vmem>>, vector<16x512xf32>,
    } else {
    }
    %c0 = arith.constant 0 : index
    %c0_1 = arith.constant 0 : index
    %3 = vector.load %arg3[%c0, %c0_1] : memref<16x128xbf16, #tpu.memory_space<vmem>>, vector<16x128xbf16>
    %4 = arith.extf %3 : vector<16x128xbf16> to vector<16x128xf32>
    %c0_2 = arith.constant 0 : index
    %c0_3 = arith.constant 0 : index
    %5 = vector.load %arg6[%c0_2, %c0_3] : memref<1x128xf32, #tpu.memory_space<vmem>>, vector<1x128xf32>
    %c0_4 = arith.constant 0 : index
    %c0_5 = arith.constant 0 : index
    %6 = vector.load %arg7[%c0_4, %c0_5] : memref<1x128xf32, #tpu.memory_space<vmem>>, vector<1x128xf32>
    %cst = arith.constant dense<0.000000e+00> : vector<16xf32>
    %7 = vector.multi_reduction <add>, %4, %cst [1] : vector<16x128xf32> to vector<16xf32>
    %8 = vector.shape_cast %7 : vector<16xf32> to vector<16x1xf32>
    %cst_6 = arith.constant 1.280000e+02 : f32
    %9 = vector.broadcast %cst_6 : f32 to vector<16x1xf32>
    %10 = arith.divf %8, %9 : vector<16x1xf32>
    %11 = vector.broadcast %10 : vector<16x1xf32> to vector<16x128xf32>
    %12 = arith.subf %4, %11 : vector<16x128xf32>
    %13 = arith.mulf %12, %12 : vector<16x128xf32>
    %cst_7 = arith.constant dense<0.000000e+00> : vector<16xf32>
    %14 = vector.multi_reduction <add>, %13, %cst_7 [1] : vector<16x128xf32> to vector<16xf32>
    %15 = vector.shape_cast %14 : vector<16xf32> to vector<16x1xf32>
    %cst_8 = arith.constant 1.280000e+02 : f32
    %16 = vector.broadcast %cst_8 : f32 to vector<16x1xf32>
    %17 = arith.divf %15, %16 : vector<16x1xf32>
    %cst_9 = arith.constant 9.99999997E-7 : f32
    %18 = vector.broadcast %cst_9 : f32 to vector<16x1xf32>
    %19 = arith.addf %17, %18 : vector<16x1xf32>
    %20 = math.rsqrt %19 : vector<16x1xf32>
    %21 = vector.broadcast %20 : vector<16x1xf32> to vector<16x128xf32>
    %22 = arith.mulf %12, %21 : vector<16x128xf32>
    %23 = vector.broadcast %5 : vector<1x128xf32> to vector<16x128xf32>
    %24 = arith.mulf %22, %23 : vector<16x128xf32>
    %25 = vector.broadcast %6 : vector<1x128xf32> to vector<16x128xf32>
    %26 = arith.addf %24, %25 : vector<16x128xf32>
    %c0_10 = arith.constant 0 : index
    %c0_11 = arith.constant 0 : index
    %27 = vector.load %arg9[%c0_10, %c0_11] : memref<16x512xf32, #tpu.memory_space<vmem>>, vector<16x512xf32>
    %28 = arith.truncf %26 : vector<16x128xf32> to vector<16x128xbf16>
    %c0_12 = arith.constant 0 : index
    %c0_13 = arith.constant 0 : index
    %29 = vector.load %arg4[%c0_12, %c0_13] : memref<128x512xbf16, #tpu.memory_space<vmem>>, vector<128x512xbf16>
    %cst_14 = arith.constant dense<0.000000e+00> : vector<16x512xf32>
    %30 = tpu.matmul %28, %29, %cst_14 {dimension_numbers = #tpu.dot_dimension_numbers<[1], [0], [0], [1], [0, 0, 1, 1], [], []>} : vector<16x128xbf16>, vector<128x512xbf16>, vector<16x512xf32> -> vector<16x512xf32>
    %31 = arith.addf %27, %30 : vector<16x512xf32>
    %c0_15 = arith.constant 0 : index
    %c0_16 = arith.constant 0 : index
    %32 = vector.load %arg9[%c0_15, %c0_16] : memref<16x512xf32, #tpu.memory_space<vmem>>, vector<16x512xf32>
    tpu.vector_store %arg9[%c0_15, %c0_16], %31 {strides = array<i32>} : memref<16x512xf32, #tpu.memory_space<vmem>>, vector<16x512xf32>,
    %c0_i32_17 = arith.constant 0 : i32
    %33 = arith.cmpi eq, %arg2, %c0_i32_17 : i32
    %34 = arith.extui %33 : i1 to i32
    %c0_i32_18 = arith.constant 0 : i32
    %35 = arith.cmpi ne, %34, %c0_i32_18 : i32
    scf.if %35 {
      %c0_19 = arith.constant 0 : index
      %c0_20 = arith.constant 0 : index
      %36 = vector.load %arg9[%c0_19, %c0_20] : memref<16x512xf32, #tpu.memory_space<vmem>>, vector<16x512xf32>
      %c0_21 = arith.constant 0 : index
      %c0_22 = arith.constant 0 : index
      %37 = vector.load %arg5[%c0_21, %c0_22] : memref<1x512xf32, #tpu.memory_space<vmem>>, vector<1x512xf32>
      %38 = vector.broadcast %37 : vector<1x512xf32> to vector<16x512xf32>
      %39 = arith.addf %36, %38 : vector<16x512xf32>
      %cst_23 = arith.constant 5.000000e-01 : f32
      %40 = vector.broadcast %cst_23 : f32 to vector<16x512xf32>
      %41 = arith.mulf %40, %39 : vector<16x512xf32>
      %cst_24 = arith.constant 0.707106769 : f32
      %42 = vector.broadcast %cst_24 : f32 to vector<16x512xf32>
      %43 = arith.mulf %39, %42 : vector<16x512xf32>
      %44 = math.erf %43 : vector<16x512xf32>
      %cst_25 = arith.constant 1.000000e+00 : f32
      %45 = vector.broadcast %cst_25 : f32 to vector<16x512xf32>
      %46 = arith.addf %45, %44 : vector<16x512xf32>
      %47 = arith.mulf %41, %46 : vector<16x512xf32>
      %48 = arith.truncf %47 : vector<16x512xf32> to vector<16x512xbf16>
      %c0_26 = arith.constant 0 : index
      %c0_27 = arith.constant 0 : index
      %49 = vector.load %arg8[%c0_26, %c0_27] : memref<16x512xbf16, #tpu.memory_space<vmem>>, vector<16x512xbf16>
      tpu.vector_store %arg8[%c0_26, %c0_27], %48 {strides = array<i32>} : memref<16x512xbf16, #tpu.memory_space<vmem>>, vector<16x512xbf16>,
    } else {
    }
    return
  }
  func.func @transform_0(%arg0: i32, %arg1: i32, %arg2: i32) -> (i32, i32) {
    %c0_i32 = arith.constant 0 : i32
    return %arg0, %arg2 : i32, i32
  }
  func.func @transform_1(%arg0: i32, %arg1: i32, %arg2: i32) -> (i32, i32) {
    %c0_i32 = arith.constant 0 : i32
    return %arg2, %arg1 : i32, i32
  }
  func.func @transform_2(%arg0: i32, %arg1: i32, %arg2: i32) -> (i32, i32) {
    %c0_i32 = arith.constant 0 : i32
    %c0_i32_0 = arith.constant 0 : i32
    return %c0_i32, %arg1 : i32, i32
  }
  func.func @transform_3(%arg0: i32, %arg1: i32, %arg2: i32) -> (i32, i32) {
    %c0_i32 = arith.constant 0 : i32
    %c0_i32_0 = arith.constant 0 : i32
    %c0_i32_1 = arith.constant 0 : i32
    return %c0_i32, %c0_i32_0 : i32, i32
  }
  func.func @transform_4(%arg0: i32, %arg1: i32, %arg2: i32) -> (i32, i32) {
    %c0_i32 = arith.constant 0 : i32
    %c0_i32_0 = arith.constant 0 : i32
    %c0_i32_1 = arith.constant 0 : i32
    return %c0_i32, %c0_i32_0 : i32, i32
  }
  func.func @transform_5(%arg0: i32, %arg1: i32, %arg2: i32) -> (i32, i32) {
    %c0_i32 = arith.constant 0 : i32
    return %arg0, %arg1 : i32, i32
  }
}

module attributes {stable_mosaic.version = 11 : i64} {
  func.func @_head_kernel(%arg0: i32, %arg1: i32, %arg2: memref<16x128xbf16, #tpu.memory_space<vmem>>, %arg3: memref<16x128xbf16, #tpu.memory_space<vmem>>, %arg4: memref<1x128xf32, #tpu.memory_space<vmem>>, %arg5: memref<1x128xf32, #tpu.memory_space<vmem>>, %arg6: memref<2x128x128xbf16, #tpu.memory_space<vmem>>, %arg7: memref<1x128xf32, #tpu.memory_space<vmem>>, %arg8: memref<16x128xf32, #tpu.memory_space<vmem>>) attributes {dimension_semantics = [#tpu.dimension_semantics<parallel>, #tpu.dimension_semantics<parallel>], iteration_bounds = array<i64: 1, 1>, scalar_prefetch = 0 : i64, scratch_operands = 0 : i64, tpu.core_type = #tpu.core_type<tc>, window_params = [{transform_indices = @transform_0, window_bounds = array<i64: 16, 128>}, {transform_indices = @transform_1, window_bounds = array<i64: 16, 128>}, {pipeline_mode = #tpu.pipeline_mode<synchronous>, transform_indices = @transform_2, window_bounds = array<i64: 1, 128>}, {pipeline_mode = #tpu.pipeline_mode<synchronous>, transform_indices = @transform_3, window_bounds = array<i64: 1, 128>}, {transform_indices = @transform_4, window_bounds = array<i64: 2, 128, 128>}, {transform_indices = @transform_5, window_bounds = array<i64: 1, 128>}, {transform_indices = @transform_6, window_bounds = array<i64: 16, 128>}]} {
    %c0 = arith.constant 0 : index
    %c0_0 = arith.constant 0 : index
    %0 = vector.load %arg7[%c0, %c0_0] : memref<1x128xf32, #tpu.memory_space<vmem>>, vector<1x128xf32>
    %c0_1 = arith.constant 0 : index
    %c0_2 = arith.constant 0 : index
    %1 = vector.load %arg2[%c0_1, %c0_2] : memref<16x128xbf16, #tpu.memory_space<vmem>>, vector<16x128xbf16>
    %2 = arith.extf %1 : vector<16x128xbf16> to vector<16x128xf32>
    %c0_3 = arith.constant 0 : index
    %c0_4 = arith.constant 0 : index
    %3 = vector.load %arg4[%c0_3, %c0_4] : memref<1x128xf32, #tpu.memory_space<vmem>>, vector<1x128xf32>
    %c0_5 = arith.constant 0 : index
    %c0_6 = arith.constant 0 : index
    %4 = vector.load %arg5[%c0_5, %c0_6] : memref<1x128xf32, #tpu.memory_space<vmem>>, vector<1x128xf32>
    %cst = arith.constant dense<0.000000e+00> : vector<16xf32>
    %5 = vector.multi_reduction <add>, %2, %cst [1] : vector<16x128xf32> to vector<16xf32>
    %6 = vector.shape_cast %5 : vector<16xf32> to vector<16x1xf32>
    %cst_7 = arith.constant 1.280000e+02 : f32
    %7 = vector.broadcast %cst_7 : f32 to vector<16x1xf32>
    %8 = arith.divf %6, %7 : vector<16x1xf32>
    %9 = vector.broadcast %8 : vector<16x1xf32> to vector<16x128xf32>
    %10 = arith.subf %2, %9 : vector<16x128xf32>
    %11 = arith.mulf %10, %10 : vector<16x128xf32>
    %cst_8 = arith.constant dense<0.000000e+00> : vector<16xf32>
    %12 = vector.multi_reduction <add>, %11, %cst_8 [1] : vector<16x128xf32> to vector<16xf32>
    %13 = vector.shape_cast %12 : vector<16xf32> to vector<16x1xf32>
    %cst_9 = arith.constant 1.280000e+02 : f32
    %14 = vector.broadcast %cst_9 : f32 to vector<16x1xf32>
    %15 = arith.divf %13, %14 : vector<16x1xf32>
    %cst_10 = arith.constant 9.99999997E-7 : f32
    %16 = vector.broadcast %cst_10 : f32 to vector<16x1xf32>
    %17 = arith.addf %15, %16 : vector<16x1xf32>
    %18 = math.rsqrt %17 : vector<16x1xf32>
    %19 = vector.broadcast %18 : vector<16x1xf32> to vector<16x128xf32>
    %20 = arith.mulf %10, %19 : vector<16x128xf32>
    %21 = vector.broadcast %3 : vector<1x128xf32> to vector<16x128xf32>
    %22 = arith.mulf %20, %21 : vector<16x128xf32>
    %23 = vector.broadcast %4 : vector<1x128xf32> to vector<16x128xf32>
    %24 = arith.addf %22, %23 : vector<16x128xf32>
    %25 = arith.truncf %24 : vector<16x128xf32> to vector<16x128xbf16>
    %c0_11 = arith.constant 0 : index
    %c0_12 = arith.constant 0 : index
    %c0_13 = arith.constant 0 : index
    %26 = vector.load %arg6[%c0_11, %c0_12, %c0_13] : memref<2x128x128xbf16, #tpu.memory_space<vmem>>, vector<1x128x128xbf16>
    %27 = vector.shape_cast %26 : vector<1x128x128xbf16> to vector<128x128xbf16>
    %cst_14 = arith.constant dense<0.000000e+00> : vector<16x128xf32>
    %28 = tpu.matmul %25, %27, %cst_14 {dimension_numbers = #tpu.dot_dimension_numbers<[1], [0], [0], [1], [0, 0, 1, 1], [], []>} : vector<16x128xbf16>, vector<128x128xbf16>, vector<16x128xf32> -> vector<16x128xf32>
    %29 = vector.broadcast %0 : vector<1x128xf32> to vector<16x128xf32>
    %30 = arith.addf %29, %28 : vector<16x128xf32>
    %c0_15 = arith.constant 0 : index
    %c0_16 = arith.constant 0 : index
    %31 = vector.load %arg3[%c0_15, %c0_16] : memref<16x128xbf16, #tpu.memory_space<vmem>>, vector<16x128xbf16>
    %32 = arith.extf %31 : vector<16x128xbf16> to vector<16x128xf32>
    %c0_17 = arith.constant 0 : index
    %c0_18 = arith.constant 0 : index
    %33 = vector.load %arg4[%c0_17, %c0_18] : memref<1x128xf32, #tpu.memory_space<vmem>>, vector<1x128xf32>
    %c0_19 = arith.constant 0 : index
    %c0_20 = arith.constant 0 : index
    %34 = vector.load %arg5[%c0_19, %c0_20] : memref<1x128xf32, #tpu.memory_space<vmem>>, vector<1x128xf32>
    %cst_21 = arith.constant dense<0.000000e+00> : vector<16xf32>
    %35 = vector.multi_reduction <add>, %32, %cst_21 [1] : vector<16x128xf32> to vector<16xf32>
    %36 = vector.shape_cast %35 : vector<16xf32> to vector<16x1xf32>
    %cst_22 = arith.constant 1.280000e+02 : f32
    %37 = vector.broadcast %cst_22 : f32 to vector<16x1xf32>
    %38 = arith.divf %36, %37 : vector<16x1xf32>
    %39 = vector.broadcast %38 : vector<16x1xf32> to vector<16x128xf32>
    %40 = arith.subf %32, %39 : vector<16x128xf32>
    %41 = arith.mulf %40, %40 : vector<16x128xf32>
    %cst_23 = arith.constant dense<0.000000e+00> : vector<16xf32>
    %42 = vector.multi_reduction <add>, %41, %cst_23 [1] : vector<16x128xf32> to vector<16xf32>
    %43 = vector.shape_cast %42 : vector<16xf32> to vector<16x1xf32>
    %cst_24 = arith.constant 1.280000e+02 : f32
    %44 = vector.broadcast %cst_24 : f32 to vector<16x1xf32>
    %45 = arith.divf %43, %44 : vector<16x1xf32>
    %cst_25 = arith.constant 9.99999997E-7 : f32
    %46 = vector.broadcast %cst_25 : f32 to vector<16x1xf32>
    %47 = arith.addf %45, %46 : vector<16x1xf32>
    %48 = math.rsqrt %47 : vector<16x1xf32>
    %49 = vector.broadcast %48 : vector<16x1xf32> to vector<16x128xf32>
    %50 = arith.mulf %40, %49 : vector<16x128xf32>
    %51 = vector.broadcast %33 : vector<1x128xf32> to vector<16x128xf32>
    %52 = arith.mulf %50, %51 : vector<16x128xf32>
    %53 = vector.broadcast %34 : vector<1x128xf32> to vector<16x128xf32>
    %54 = arith.addf %52, %53 : vector<16x128xf32>
    %55 = arith.truncf %54 : vector<16x128xf32> to vector<16x128xbf16>
    %c1 = arith.constant 1 : index
    %c0_26 = arith.constant 0 : index
    %c0_27 = arith.constant 0 : index
    %56 = vector.load %arg6[%c1, %c0_26, %c0_27] : memref<2x128x128xbf16, #tpu.memory_space<vmem>>, vector<1x128x128xbf16>
    %57 = vector.shape_cast %56 : vector<1x128x128xbf16> to vector<128x128xbf16>
    %cst_28 = arith.constant dense<0.000000e+00> : vector<16x128xf32>
    %58 = tpu.matmul %55, %57, %cst_28 {dimension_numbers = #tpu.dot_dimension_numbers<[1], [0], [0], [1], [0, 0, 1, 1], [], []>} : vector<16x128xbf16>, vector<128x128xbf16>, vector<16x128xf32> -> vector<16x128xf32>
    %59 = arith.addf %30, %58 : vector<16x128xf32>
    %c0_29 = arith.constant 0 : index
    %c0_30 = arith.constant 0 : index
    %60 = vector.load %arg8[%c0_29, %c0_30] : memref<16x128xf32, #tpu.memory_space<vmem>>, vector<16x128xf32>
    tpu.vector_store %arg8[%c0_29, %c0_30], %59 {strides = array<i32>} : memref<16x128xf32, #tpu.memory_space<vmem>>, vector<16x128xf32>,
    return
  }
  func.func @transform_0(%arg0: i32, %arg1: i32) -> (i32, i32) {
    %c0_i32 = arith.constant 0 : i32
    %c0_i32_0 = arith.constant 0 : i32
    return %arg0, %c0_i32 : i32, i32
  }
  func.func @transform_1(%arg0: i32, %arg1: i32) -> (i32, i32) {
    %c0_i32 = arith.constant 0 : i32
    %c0_i32_0 = arith.constant 0 : i32
    return %arg0, %c0_i32 : i32, i32
  }
  func.func @transform_2(%arg0: i32, %arg1: i32) -> (i32, i32) {
    %c0_i32 = arith.constant 0 : i32
    %c0_i32_0 = arith.constant 0 : i32
    %c0_i32_1 = arith.constant 0 : i32
    return %c0_i32, %c0_i32_0 : i32, i32
  }
  func.func @transform_3(%arg0: i32, %arg1: i32) -> (i32, i32) {
    %c0_i32 = arith.constant 0 : i32
    %c0_i32_0 = arith.constant 0 : i32
    %c0_i32_1 = arith.constant 0 : i32
    return %c0_i32, %c0_i32_0 : i32, i32
  }
  func.func @transform_4(%arg0: i32, %arg1: i32) -> (i32, i32, i32) {
    %c0_i32 = arith.constant 0 : i32
    %c0_i32_0 = arith.constant 0 : i32
    %c0_i32_1 = arith.constant 0 : i32
    return %c0_i32, %c0_i32_0, %arg1 : i32, i32, i32
  }
  func.func @transform_5(%arg0: i32, %arg1: i32) -> (i32, i32) {
    %c0_i32 = arith.constant 0 : i32
    %c0_i32_0 = arith.constant 0 : i32
    return %c0_i32, %arg1 : i32, i32
  }
  func.func @transform_6(%arg0: i32, %arg1: i32) -> (i32, i32) {
    %c0_i32 = arith.constant 0 : i32
    return %arg0, %arg1 : i32, i32
  }
}

module attributes {stable_mosaic.version = 11 : i64} {
  func.func @_layernorm_kernel(%arg0: i32, %arg1: memref<2x128xbf16, #tpu.memory_space<vmem>>, %arg2: memref<1x128xf32, #tpu.memory_space<vmem>>, %arg3: memref<1x128xf32, #tpu.memory_space<vmem>>, %arg4: memref<2x128xf32, #tpu.memory_space<vmem>>) attributes {dimension_semantics = [#tpu.dimension_semantics<parallel>], iteration_bounds = array<i64: 1>, scalar_prefetch = 0 : i64, scratch_operands = 0 : i64, tpu.core_type = #tpu.core_type<tc>, window_params = [{transform_indices = @transform_0, window_bounds = array<i64: 2, 128>}, {pipeline_mode = #tpu.pipeline_mode<synchronous>, transform_indices = @transform_1, window_bounds = array<i64: 1, 128>}, {pipeline_mode = #tpu.pipeline_mode<synchronous>, transform_indices = @transform_2, window_bounds = array<i64: 1, 128>}, {transform_indices = @transform_3, window_bounds = array<i64: 2, 128>}]} {
    %c0 = arith.constant 0 : index
    %c0_0 = arith.constant 0 : index
    %0 = vector.load %arg1[%c0, %c0_0] : memref<2x128xbf16, #tpu.memory_space<vmem>>, vector<2x128xbf16>
    %1 = arith.extf %0 : vector<2x128xbf16> to vector<2x128xf32>
    %c0_1 = arith.constant 0 : index
    %c0_2 = arith.constant 0 : index
    %2 = vector.load %arg2[%c0_1, %c0_2] : memref<1x128xf32, #tpu.memory_space<vmem>>, vector<1x128xf32>
    %c0_3 = arith.constant 0 : index
    %c0_4 = arith.constant 0 : index
    %3 = vector.load %arg3[%c0_3, %c0_4] : memref<1x128xf32, #tpu.memory_space<vmem>>, vector<1x128xf32>
    %cst = arith.constant dense<0.000000e+00> : vector<2xf32>
    %4 = vector.multi_reduction <add>, %1, %cst [1] : vector<2x128xf32> to vector<2xf32>
    %5 = vector.shape_cast %4 : vector<2xf32> to vector<2x1xf32>
    %cst_5 = arith.constant 1.280000e+02 : f32
    %6 = vector.broadcast %cst_5 : f32 to vector<2x1xf32>
    %7 = arith.divf %5, %6 : vector<2x1xf32>
    %8 = vector.broadcast %7 : vector<2x1xf32> to vector<2x128xf32>
    %9 = arith.subf %1, %8 : vector<2x128xf32>
    %10 = arith.mulf %9, %9 : vector<2x128xf32>
    %cst_6 = arith.constant dense<0.000000e+00> : vector<2xf32>
    %11 = vector.multi_reduction <add>, %10, %cst_6 [1] : vector<2x128xf32> to vector<2xf32>
    %12 = vector.shape_cast %11 : vector<2xf32> to vector<2x1xf32>
    %cst_7 = arith.constant 1.280000e+02 : f32
    %13 = vector.broadcast %cst_7 : f32 to vector<2x1xf32>
    %14 = arith.divf %12, %13 : vector<2x1xf32>
    %cst_8 = arith.constant 9.99999997E-7 : f32
    %15 = vector.broadcast %cst_8 : f32 to vector<2x1xf32>
    %16 = arith.addf %14, %15 : vector<2x1xf32>
    %17 = math.rsqrt %16 : vector<2x1xf32>
    %18 = vector.broadcast %17 : vector<2x1xf32> to vector<2x128xf32>
    %19 = arith.mulf %9, %18 : vector<2x128xf32>
    %20 = vector.broadcast %2 : vector<1x128xf32> to vector<2x128xf32>
    %21 = arith.mulf %19, %20 : vector<2x128xf32>
    %22 = vector.broadcast %3 : vector<1x128xf32> to vector<2x128xf32>
    %23 = arith.addf %21, %22 : vector<2x128xf32>
    %c0_9 = arith.constant 0 : index
    %c0_10 = arith.constant 0 : index
    %24 = vector.load %arg4[%c0_9, %c0_10] : memref<2x128xf32, #tpu.memory_space<vmem>>, vector<2x128xf32>
    tpu.vector_store %arg4[%c0_9, %c0_10], %23 {strides = array<i32>} : memref<2x128xf32, #tpu.memory_space<vmem>>, vector<2x128xf32>,
    return
  }
  func.func @transform_0(%arg0: i32) -> (i32, i32) {
    %c0_i32 = arith.constant 0 : i32
    %c0_i32_0 = arith.constant 0 : i32
    return %arg0, %c0_i32 : i32, i32
  }
  func.func @transform_1(%arg0: i32) -> (i32, i32) {
    %c0_i32 = arith.constant 0 : i32
    %c0_i32_0 = arith.constant 0 : i32
    %c0_i32_1 = arith.constant 0 : i32
    return %c0_i32, %c0_i32_0 : i32, i32
  }
  func.func @transform_2(%arg0: i32) -> (i32, i32) {
    %c0_i32 = arith.constant 0 : i32
    %c0_i32_0 = arith.constant 0 : i32
    %c0_i32_1 = arith.constant 0 : i32
    return %c0_i32, %c0_i32_0 : i32, i32
  }
  func.func @transform_3(%arg0: i32) -> (i32, i32) {
    %c0_i32 = arith.constant 0 : i32
    %c0_i32_0 = arith.constant 0 : i32
    return %arg0, %c0_i32 : i32, i32
  }
}

</mosaic_0001>

<llo_original>
// kernel: dinov2_encoder_forward.20
$region0: #{dinov2_encoder_forward.20}
  #allocation0 [shape = 'u32[]', space=smem, size = 0x4, offset = 0x4, fixed_abs, tag = 'smem constant byte address 0x4 - core index']
  #allocation1 [shape = 'u32[144,128]{1,0:T(1,128)}', space=vmem, size = 0x12000, scoped, tag = 'internal scratch']
  %s0 = inlined_call_operand.vmem [shape: bf16[2,8,384], index: 0, kind: input, shape index: {}, may-alias: {0,1,2}]
  %s1 = inlined_call_operand.vmem [shape: bf16[2,8,384], index: 1, kind: input, shape index: {}, may-alias: {0,1,2}]
  %s2 = inlined_call_operand.vmem [shape: bf16[2,8,384], index: 2, kind: input, shape index: {}, may-alias: {0,1,2}]
  %s3 = inlined_call_operand.vmem [shape: bf16[2,8,128], index: 3, kind: output, shape index: {}]
  %s4 = sld [smem:[#allocation0]]
  $region45: #{dinov2_encoder_forward.20} parent=0
    _
  %s6 = ssub.s32 1, %s4
  %s7 = scalar_select 0, %s6, %s4
  loop: start=0, step=1, limit=4
  $region2: #{dinov2_encoder_forward.20} parent=0 // loop_pre_header
    _
  $region3: #{dinov2_encoder_forward.20} parent=0 // loop_header
    %s9 = sphi 0, %s13
    %p10 = scmp.ge.s32.totalorder %s9, 4
    %s16 = sphi 0, %s35
    %s17 = sphi 0, %s31
    %s18 = sphi 0, %s27
    %s19 = sphi 0, %s16
    %s20 = sphi 0, %s17
    %s21 = sphi 0, %s18
    %s22 = sphi 0, %s19
    %s23 = sphi 0, %s20
    %s24 = sphi 0, %s21
    %s42 = sphi 0, %s44
    %s45 = sphi 0, %s42
    %s46 = sphi 0, %s45
    %s62 = sphi 0, %s46
    %s72 = sphi 0, %s74
    %s75 = sphi 0, %s72
    %s76 = sphi 0, %s75
    %s92 = sphi 0, %s76
    %s102 = sphi 0, %s104
    %s105 = sphi 0, %s102
    %s106 = sphi 0, %s105
    %s122 = sphi 0, %s106
    %s132 = sphi 0, %s134
    %s135 = sphi 0, %s132
    %s136 = sphi 0, %s135
    %s152 = sphi 0, %s136
  $region4: #{dinov2_encoder_forward.20} parent=0 // loop_header_branch
    %12 = sbr.rel (%p10) target = $region8
  $region5: #{dinov2_encoder_forward.20} parent=0 // loop_body
    %s14 = ssub.s32 %s9, 1
    %s15 = ssub.s32 %s9, 2
    %s25 = sadd.s32 1, %s18
    %p26 = scmp.ge.s32.totalorder %s25, 1
    %s27 = scalar_select %p26, 0, %s25
    %s28 = sadd.s32 1, %s17
    %s29 = scalar_select %p26, %s28, %s17
    %p30 = scmp.ge.s32.totalorder %s29, 1
    %s31 = scalar_select %p30, 0, %s29
    %s32 = sadd.s32 1, %s16
    %s33 = scalar_select %p30, %s32, %s16
    %p34 = scmp.ge.s32.totalorder %s33, 2
    %s35 = scalar_select %p34, 0, %s33
    %s36 = ssub.s32 %s16, %s35
    %s37 = ssub.s32 %s18, %s27
    %s38 = sor.u32 %s36, %s37
    %s39 = ssub.s32 %s17, %s31
    %s40 = sor.u32 %s38, %s39
    %p41 = scmp.eq.s32.totalorder %s40, 0
    %s43 = sadd.s32 %s42, 1
    %s44 = scalar_select %p41, %s42, %s43
    %p47 = pneg %p41
    %p48 = scmp.eq.s32.totalorder %s9, 1
    %p49 = por %p47, %p48
    %p50 = scmp.ne.s32.totalorder %s42, %s45
    %p51 = scmp.eq.s32.totalorder %s9, 0
    %p52 = por %p50, %p51
    %p53 = scmp.ne.s32.totalorder %s42, %s45
    %p54 = scmp.eq.s32.totalorder %s14, 1
    %p55 = por %p53, %p54
    %p56 = scmp.ne.s32.totalorder %s45, %s46
    %p57 = scmp.eq.s32.totalorder %s14, 0
    %p58 = por %p56, %p57
    %p59 = scmp.ne.s32.totalorder %s45, %s46
    %p60 = scmp.eq.s32.totalorder %s15, 1
    %p61 = por %p59, %p60
    %p63 = scmp.ne.s32.totalorder %s46, %s62
    %p64 = scmp.eq.s32.totalorder %s15, 0
    %p65 = por %p63, %p64
    %s66 = sadd.s32 %s17, 1
    %s67 = sadd.s32 %s31, 1
    %s68 = ssub.s32 %s16, %s35
    %s69 = ssub.s32 %s66, %s67
    %s70 = sor.u32 %s68, %s69
    %p71 = scmp.eq.s32.totalorder %s70, 0
    %s73 = sadd.s32 %s72, 1
    %s74 = scalar_select %p71, %s72, %s73
    %p77 = pneg %p71
    %p78 = scmp.eq.s32.totalorder %s9, 1
    %p79 = por %p77, %p78
    %p80 = scmp.ne.s32.totalorder %s72, %s75
    %p81 = scmp.eq.s32.totalorder %s9, 0
    %p82 = por %p80, %p81
    %p83 = scmp.ne.s32.totalorder %s72, %s75
    %p84 = scmp.eq.s32.totalorder %s14, 1
    %p85 = por %p83, %p84
    %p86 = scmp.ne.s32.totalorder %s75, %s76
    %p87 = scmp.eq.s32.totalorder %s14, 0
    %p88 = por %p86, %p87
    %p89 = scmp.ne.s32.totalorder %s75, %s76
    %p90 = scmp.eq.s32.totalorder %s15, 1
    %p91 = por %p89, %p90
    %p93 = scmp.ne.s32.totalorder %s76, %s92
    %p94 = scmp.eq.s32.totalorder %s15, 0
    %p95 = por %p93, %p94
    %s96 = sadd.s32 %s17, 2
    %s97 = sadd.s32 %s31, 2
    %s98 = ssub.s32 %s16, %s35
    %s99 = ssub.s32 %s96, %s97
    %s100 = sor.u32 %s98, %s99
    %p101 = scmp.eq.s32.totalorder %s100, 0
    %s103 = sadd.s32 %s102, 1
    %s104 = scalar_select %p101, %s102, %s103
    %p107 = pneg %p101
    %p108 = scmp.eq.s32.totalorder %s9, 1
    %p109 = por %p107, %p108
    %p110 = scmp.ne.s32.totalorder %s102, %s105
    %p111 = scmp.eq.s32.totalorder %s9, 0
    %p112 = por %p110, %p111
    %p113 = scmp.ne.s32.totalorder %s102, %s105
    %p114 = scmp.eq.s32.totalorder %s14, 1
    %p115 = por %p113, %p114
    %p116 = scmp.ne.s32.totalorder %s105, %s106
    %p117 = scmp.eq.s32.totalorder %s14, 0
    %p118 = por %p116, %p117
    %p119 = scmp.ne.s32.totalorder %s105, %s106
    %p120 = scmp.eq.s32.totalorder %s15, 1
    %p121 = por %p119, %p120
    %p123 = scmp.ne.s32.totalorder %s106, %s122
    %p124 = scmp.eq.s32.totalorder %s15, 0
    %p125 = por %p123, %p124
    %s126 = ssub.s32 %s16, %s35
    %s127 = ssub.s32 %s18, %s27
    %s128 = sor.u32 %s126, %s127
    %s129 = ssub.s32 %s17, %s31
    %s130 = sor.u32 %s128, %s129
    %p131 = scmp.eq.s32.totalorder %s130, 0
    %s133 = sadd.s32 %s132, 1
    %s134 = scalar_select %p131, %s132, %s133
    %p137 = pneg %p131
    %p138 = scmp.eq.s32.totalorder %s9, 1
    %p139 = por %p137, %p138
    %p140 = scmp.ne.s32.totalorder %s132, %s135
    %p141 = scmp.eq.s32.totalorder %s9, 0
    %p142 = por %p140, %p141
    %p143 = scmp.ne.s32.totalorder %s132, %s135
    %p144 = scmp.eq.s32.totalorder %s14, 1
    %p145 = por %p143, %p144
    %p146 = scmp.ne.s32.totalorder %s135, %s136
    %p147 = scmp.eq.s32.totalorder %s14, 0
    %p148 = por %p146, %p147
    %p149 = scmp.ne.s32.totalorder %s135, %s136
    %p150 = scmp.eq.s32.totalorder %s15, 1
    %p151 = por %p149, %p150
    %p153 = scmp.ne.s32.totalorder %s136, %s152
    %p154 = scmp.eq.s32.totalorder %s15, 0
    %p155 = por %p153, %p154
    %p156 = scmp.le.s32.totalorder 1, %s9
    %p157 = scmp.lt.s32.totalorder %s9, 3
    %p158 = pnand %p156, %p157
    %p159 = pneg %p158
    // Predicated region
    $region9: #{dinov2_encoder_forward.20} parent=5 // pred_check
      _
    $region10: #{dinov2_encoder_forward.20} parent=5 // pred_check_branch
      %161 = sbr.rel (%p158) target = $region12
    $region11: #{dinov2_encoder_forward.20} parent=5 // pred_region
      %s162 = ssub.s32 %s9, 1
    $region12: #{dinov2_encoder_forward.20} parent=5 // pred_fallthru
      _
    %p163 = scmp.lt.s32.totalorder %s9, 2
    // Predicated region
    $region13: #{dinov2_encoder_forward.20} parent=5 // pred_check
      %p164 = pneg %p163
    $region14: #{dinov2_encoder_forward.20} parent=5 // pred_check_branch
      %166 = sbr.rel (%p164) target = $region16
    $region15: #{dinov2_encoder_forward.20} parent=5 // pred_region
      // Predicated region
      $region17: #{dinov2_encoder_forward.20} parent=15 // pred_check
        %p167 = pneg %p52
      $region18: #{dinov2_encoder_forward.20} parent=15 // pred_check_branch
        %169 = sbr.rel (%p167) target = $region20
      $region19: #{dinov2_encoder_forward.20} parent=15 // pred_region
        %p170 = scmp.lt.s32.totalorder %s16, 1
        %s171 = scalar_select %p170, %s16, 1
        %p172 = scmp.lt.s32.totalorder %s18, 0
        %s173 = scalar_select %p172, %s18, 0
        %p174 = scmp.lt.s32.totalorder %s17, 2
        %s175 = scalar_select %p174, %s17, 2
        %s176 = smul.addr %s173, 3
        %s177 = sadd.s32 %s175, %s176
        %s178 = smul.addr %s171, 3
        %s179 = sadd.s32 %s177, %s178
        %s180 = smul.addr %s179, 4
        %s181 = scalar_lea.vmem %s0, %s180
      $region20: #{dinov2_encoder_forward.20} parent=15 // pred_fallthru
        _
      // Predicated region
      $region21: #{dinov2_encoder_forward.20} parent=15 // pred_check
        %p182 = pneg %p82
      $region22: #{dinov2_encoder_forward.20} parent=15 // pred_check_branch
        %184 = sbr.rel (%p182) target = $region24
      $region23: #{dinov2_encoder_forward.20} parent=15 // pred_region
        %s185 = sadd.s32 %s17, 1
        %p186 = scmp.lt.s32.totalorder %s16, 1
        %s187 = scalar_select %p186, %s16, 1
        %p188 = scmp.lt.s32.totalorder %s185, 2
        %s189 = scalar_select %p188, %s185, 2
        %s190 = smul.addr %s187, 3
        %s191 = sadd.s32 %s189, %s190
        %s192 = smul.addr %s191, 4
        %s193 = scalar_lea.vmem %s1, %s192
        %s194 = sadd.s32 %s17, 1
      $region24: #{dinov2_encoder_forward.20} parent=15 // pred_fallthru
        _
      // Predicated region
      $region25: #{dinov2_encoder_forward.20} parent=15 // pred_check
        %p195 = pneg %p112
      $region26: #{dinov2_encoder_forward.20} parent=15 // pred_check_branch
        %197 = sbr.rel (%p195) target = $region28
      $region27: #{dinov2_encoder_forward.20} parent=15 // pred_region
        %s198 = sadd.s32 %s17, 2
        %p199 = scmp.lt.s32.totalorder %s16, 1
        %s200 = scalar_select %p199, %s16, 1
        %p201 = scmp.lt.s32.totalorder %s198, 2
        %s202 = scalar_select %p201, %s198, 2
        %s203 = smul.addr %s200, 3
        %s204 = sadd.s32 %s202, %s203
        %s205 = smul.addr %s204, 4
        %s206 = scalar_lea.vmem %s2, %s205
        %s207 = sadd.s32 %s17, 2
      $region28: #{dinov2_encoder_forward.20} parent=15 // pred_fallthru
        _
    $region16: #{dinov2_encoder_forward.20} parent=5 // pred_fallthru
      _
    %p208 = scmp.le.s32.totalorder 1, %s9
    %p209 = scmp.lt.s32.totalorder %s9, 3
    %p210 = pnand %p208, %p209
    %p211 = pneg %p210
    // Predicated region
    $region29: #{dinov2_encoder_forward.20} parent=5 // pred_check
      _
    $region30: #{dinov2_encoder_forward.20} parent=5 // pred_check_branch
      %213 = sbr.rel (%p210) target = $region32
    $region31: #{dinov2_encoder_forward.20} parent=5 // pred_region
      %s214 = ssub.s32 %s9, 1
      %p215 = scmp.lt.s32.totalorder %s19, 1
      %s216 = scalar_select %p215, %s19, 1
      %p217 = scmp.lt.s32.totalorder %s21, 0
      %s218 = scalar_select %p217, %s21, 0
      %p219 = scmp.lt.s32.totalorder %s20, 2
      %s220 = scalar_select %p219, %s20, 2
      %s221 = smul.addr %s218, 3
      %s222 = sadd.s32 %s220, %s221
      %s223 = smul.addr %s216, 3
      %s224 = sadd.s32 %s222, %s223
      %s225 = smul.addr %s224, 4
      %s226 = scalar_lea.vmem %s0, %s225
      %p227 = pneg %p58
      %p228 = pneg %p55
      %s229 = sadd.s32 %s20, 1
      %p230 = scmp.lt.s32.totalorder %s19, 1
      %s231 = scalar_select %p230, %s19, 1
      %p232 = scmp.lt.s32.totalorder %s229, 2
      %s233 = scalar_select %p232, %s229, 2
      %s234 = smul.addr %s231, 3
      %s235 = sadd.s32 %s233, %s234
      %s236 = smul.addr %s235, 4
      %s237 = scalar_lea.vmem %s1, %s236
      %p238 = pneg %p88
      %p239 = pneg %p85
      %s240 = sadd.s32 %s20, 2
      %p241 = scmp.lt.s32.totalorder %s19, 1
      %s242 = scalar_select %p241, %s19, 1
      %p243 = scmp.lt.s32.totalorder %s240, 2
      %s244 = scalar_select %p243, %s240, 2
      %s245 = smul.addr %s242, 3
      %s246 = sadd.s32 %s244, %s245
      %s247 = smul.addr %s246, 4
      %s248 = scalar_lea.vmem %s2, %s247
      %p249 = pneg %p118
      %p250 = pneg %p115
      %p251 = pneg %p148
      %p252 = pneg %p145
      %p253 = scmp.lt.s32.totalorder %s19, 1
      %s254 = scalar_select %p253, %s19, 1
      %p255 = scmp.lt.s32.totalorder %s21, 0
      %s256 = scalar_select %p255, %s21, 0
      %p257 = scmp.lt.s32.totalorder %s20, 0
      %s258 = scalar_select %p257, %s20, 0
      %s259 = sadd.s32 %s258, %s256
      %s260 = sadd.s32 %s259, %s254
      %s261 = smul.addr %s260, 4
      %s262 = scalar_lea.vmem %s3, %s261
      %p263 = scmp.lt.s32.totalorder %s19, 1
      %s264 = scalar_select %p263, %s19, 1
      %p265 = scmp.lt.s32.totalorder %s21, 0
      %s266 = scalar_select %p265, %s21, 0
      %p267 = scmp.lt.s32.totalorder %s20, 2
      %s268 = scalar_select %p267, %s20, 2
      %s269 = smul.addr %s266, 3
      %s270 = sadd.s32 %s268, %s269
      %s271 = smul.addr %s264, 3
      %s272 = sadd.s32 %s270, %s271
      %s273 = smul.addr %s272, 4
      %s274 = scalar_lea.vmem %s0, %s273
      %s275 = sadd.s32 %s20, 1
      %p276 = scmp.lt.s32.totalorder %s19, 1
      %s277 = scalar_select %p276, %s19, 1
      %p278 = scmp.lt.s32.totalorder %s275, 2
      %s279 = scalar_select %p278, %s275, 2
      %s280 = smul.addr %s277, 3
      %s281 = sadd.s32 %s279, %s280
      %s282 = smul.addr %s281, 4
      %s283 = scalar_lea.vmem %s1, %s282
      %s284 = sadd.s32 %s20, 1
      %s285 = sadd.s32 %s20, 2
      %p286 = scmp.lt.s32.totalorder %s19, 1
      %s287 = scalar_select %p286, %s19, 1
      %p288 = scmp.lt.s32.totalorder %s285, 2
      %s289 = scalar_select %p288, %s285, 2
      %s290 = smul.addr %s287, 3
      %s291 = sadd.s32 %s289, %s290
      %s292 = smul.addr %s291, 4
      %s293 = scalar_lea.vmem %s2, %s292
      %s294 = sadd.s32 %s20, 2
      %p295 = scmp.lt.s32.totalorder %s19, 1
      %s296 = scalar_select %p295, %s19, 1
      %p297 = scmp.lt.s32.totalorder %s21, 0
      %s298 = scalar_select %p297, %s21, 0
      %p299 = scmp.lt.s32.totalorder %s20, 0
      %s300 = scalar_select %p299, %s20, 0
      %s301 = sadd.s32 %s300, %s298
      %s302 = sadd.s32 %s301, %s296
      %s303 = smul.addr %s302, 4
      %s304 = scalar_lea.vmem %s3, %s303
      %v306 = vlaneseq
      %v307 = vand.u32 %v306, 127
      %vm308 = vcmp.lt.s32.totalorder %v307, 5
      %v309 = vld [vmem:[%s274] sm:$0xf]
      %v310 = vunpack.c.l.bf16 %v309
      %v311 = vmul.f32 %v310, 0.125
      %v312 = vpack.c.bf16 %v311, %v311
      %v313 = vld [vmem:[%s283] sm:$0xf]
      %v314 = vld [vmem:[%s293] sm:$0xf]
      %vm315 = vcmask 523264
      %v317 = vsel %vm315, %v312, 0
      %v320 = vsel %vm315, %v313, 0
      %322 = vmatprep.subr.bf16.mxu0 0
      %323 = vmatpush1.bf16.xpose.msra.mxu0 %v320
      %324 = vmatprep.subr.bf16.mxu0 0
      %325 = vmatpush1.bf16.xpose.msra.mxu0 0
      %326 = vmatprep.subr.bf16.mxu0 0
      %327 = vmatpush1.bf16.xpose.msra.mxu0 0
      %328 = vmatprep.subr.bf16.mxu0 0
      %329 = vmatpush1.bf16.xpose.msra.mxu0 0
      %330 = vmatprep.subr.bf16.mxu0 0
      %331 = vmatpush1.bf16.xpose.msra.mxu0 0
      %332 = vmatprep.subr.bf16.mxu0 0
      %333 = vmatpush1.bf16.xpose.msra.mxu0 0
      %334 = vmatprep.subr.bf16.mxu0 0
      %335 = vmatpush1.bf16.xpose.msra.mxu0 0
      %336 = vmatprep.subr.bf16.mxu0 0
      %337 = vmatpush1.bf16.xpose.msra.mxu0 0
      %338 = vmatprep.subr.bf16.mxu0 0
      %339 = vmatpush1.bf16.xpose.msra.mxu0 0
      %340 = vmatprep.subr.bf16.mxu0 0
      %341 = vmatpush1.bf16.xpose.msra.mxu0 0
      %342 = vmatprep.subr.bf16.mxu0 0
      %343 = vmatpush1.bf16.xpose.msra.mxu0 0
      %344 = vmatprep.subr.bf16.mxu0 0
      %345 = vmatpush1.bf16.xpose.msra.mxu0 0
      %346 = vmatprep.subr.bf16.mxu0 0
      %347 = vmatpush1.bf16.xpose.msra.mxu0 0
      %348 = vmatprep.subr.bf16.mxu0 0
      %349 = vmatpush1.bf16.xpose.msra.mxu0 0
      %350 = vmatprep.subr.bf16.mxu0 0
      %351 = vmatpush1.bf16.xpose.msra.mxu0 0
      %352 = vmatprep.subr.bf16.mxu0 0
      %353 = vmatpush1.bf16.xpose.msra.mxu0 0
      %354 = vmatprep.mubr.bf16.mxu0 0
      %355 = vmatmul.mubr.bf16.gmra.mrb[0].mxu0 %v317
      %v356 = vpop.f32.mrb[0].mxu0
      %v357 = vadd.f32 0.0, %v356
      %v358 = vpop.f32.mrb[0].mxu0
      %v359 = vpop.f32.mrb[0].mxu0
      %v360 = vpop.f32.mrb[0].mxu0
      %361 = vdwg.mxu0
      %v362 = vsel %vm308, 1, 0
      %vm363 = vcmp.eq.s32.totalorder %v362, 1
      %v364 = vsel %vm363, %v357, -1e+30
      %vm365 = vcmask 64512
      %v366 = vsel %vm365, %v364, -inf
      %367 = vmax.xlane.f32.xlu0 %v366
      %v368 = vpop.xlane.xlu0 %367
      %v369 = vsub.f32 %v364, %v368
      %v370 = vmul.f32 %v369, 1.442695
      %v371 = vpow.pop %v370
      %v372 = vsel %vm365, %v371, 0.0
      %373 = vadd.xlane.f32.xlu0 %v372
      %v374 = vpop.xlane.xlu0 %373
      %v375 = vpack.c.bf16 %v371, %v371
      %v377 = vsel %vm365, %v375, 0
      %vm379 = vcmask 1043456
      %v381 = vsel %vm379, %v314, 0
      %383 = vmatprep.subr.bf16.mxu0 0
      %384 = vmatpush1.bf16.msra.mxu0 %v381
      %385 = vmatprep.subr.bf16.mxu0 0
      %386 = vmatpush1.bf16.msra.mxu0 0
      %387 = vmatprep.subr.bf16.mxu0 0
      %388 = vmatpush1.bf16.msra.mxu0 0
      %389 = vmatprep.subr.bf16.mxu0 0
      %390 = vmatpush1.bf16.msra.mxu0 0
      %391 = vmatprep.subr.bf16.mxu0 0
      %392 = vmatpush1.bf16.msra.mxu0 0
      %393 = vmatprep.subr.bf16.mxu0 0
      %394 = vmatpush1.bf16.msra.mxu0 0
      %395 = vmatprep.subr.bf16.mxu0 0
      %396 = vmatpush1.bf16.msra.mxu0 0
      %397 = vmatprep.subr.bf16.mxu0 0
      %398 = vmatpush1.bf16.msra.mxu0 0
      %399 = vmatprep.subr.bf16.mxu0 0
      %400 = vmatpush1.bf16.msra.mxu0 0
      %401 = vmatprep.subr.bf16.mxu0 0
      %402 = vmatpush1.bf16.msra.mxu0 0
      %403 = vmatprep.subr.bf16.mxu0 0
      %404 = vmatpush1.bf16.msra.mxu0 0
      %405 = vmatprep.subr.bf16.mxu0 0
      %406 = vmatpush1.bf16.msra.mxu0 0
      %407 = vmatprep.subr.bf16.mxu0 0
      %408 = vmatpush1.bf16.msra.mxu0 0
      %409 = vmatprep.subr.bf16.mxu0 0
      %410 = vmatpush1.bf16.msra.mxu0 0
      %411 = vmatprep.subr.bf16.mxu0 0
      %412 = vmatpush1.bf16.msra.mxu0 0
      %413 = vmatprep.subr.bf16.mxu0 0
      %414 = vmatpush1.bf16.msra.mxu0 0
      %415 = vmatprep.mubr.bf16.mxu0 0
      %416 = vmatmul.mubr.bf16.gmra.mrb[0].mxu0 %v377
      %v417 = vpop.f32.mrb[0].mxu0
      %v418 = vadd.f32 0.0, %v417
      %v419 = vpop.f32.mrb[0].mxu0
      %v420 = vpop.f32.mrb[0].mxu0
      %v421 = vpop.f32.mrb[0].mxu0
      %422 = vdwg.mxu0
      %v423 = vrcp.pop %v374
      %v424 = vmul.f32 %v418, %v423
      %426 = vrot.lane.b32.xlu0 %v312, 64
      %v427 = vpop.permute.xlu0 %426
      %v429 = vunpack.c.l.b16 %v313
      %v430 = vpack.c.b16 %v429, %v429
      %431 = vrot.lane.b32.xlu0 %v430, 64
      %v432 = vpop.permute.xlu0 %431
      %v434 = vsel %vm315, %v427, 0
      %v437 = vsel %vm315, %v432, 0
      %439 = vmatprep.subr.bf16.mxu0 0
      %440 = vmatpush1.bf16.xpose.msra.mxu0 %v437
      %441 = vmatprep.subr.bf16.mxu0 0
      %442 = vmatpush1.bf16.xpose.msra.mxu0 0
      %443 = vmatprep.subr.bf16.mxu0 0
      %444 = vmatpush1.bf16.xpose.msra.mxu0 0
      %445 = vmatprep.subr.bf16.mxu0 0
      %446 = vmatpush1.bf16.xpose.msra.mxu0 0
      %447 = vmatprep.subr.bf16.mxu0 0
      %448 = vmatpush1.bf16.xpose.msra.mxu0 0
      %449 = vmatprep.subr.bf16.mxu0 0
      %450 = vmatpush1.bf16.xpose.msra.mxu0 0
      %451 = vmatprep.subr.bf16.mxu0 0
      %452 = vmatpush1.bf16.xpose.msra.mxu0 0
      %453 = vmatprep.subr.bf16.mxu0 0
      %454 = vmatpush1.bf16.xpose.msra.mxu0 0
      %455 = vmatprep.subr.bf16.mxu0 0
      %456 = vmatpush1.bf16.xpose.msra.mxu0 0
      %457 = vmatprep.subr.bf16.mxu0 0
      %458 = vmatpush1.bf16.xpose.msra.mxu0 0
      %459 = vmatprep.subr.bf16.mxu0 0
      %460 = vmatpush1.bf16.xpose.msra.mxu0 0
      %461 = vmatprep.subr.bf16.mxu0 0
      %462 = vmatpush1.bf16.xpose.msra.mxu0 0
      %463 = vmatprep.subr.bf16.mxu0 0
      %464 = vmatpush1.bf16.xpose.msra.mxu0 0
      %465 = vmatprep.subr.bf16.mxu0 0
      %466 = vmatpush1.bf16.xpose.msra.mxu0 0
      %467 = vmatprep.subr.bf16.mxu0 0
      %468 = vmatpush1.bf16.xpose.msra.mxu0 0
      %469 = vmatprep.subr.bf16.mxu0 0
      %470 = vmatpush1.bf16.xpose.msra.mxu0 0
      %471 = vmatprep.mubr.bf16.mxu0 0
      %472 = vmatmul.mubr.bf16.gmra.mrb[0].mxu0 %v434
      %v473 = vpop.f32.mrb[0].mxu0
      %v474 = vadd.f32 0.0, %v473
      %v475 = vpop.f32.mrb[0].mxu0
      %v476 = vpop.f32.mrb[0].mxu0
      %v477 = vpop.f32.mrb[0].mxu0
      %478 = vdwg.mxu0
      %v479 = vsel %vm363, %v474, -1e+30
      %v480 = vsel %vm365, %v479, -inf
      %481 = vmax.xlane.f32.xlu0 %v480
      %v482 = vpop.xlane.xlu0 %481
      %v483 = vsub.f32 %v479, %v482
      %v484 = vmul.f32 %v483, 1.442695
      %v485 = vpow.pop %v484
      %v486 = vsel %vm365, %v485, 0.0
      %487 = vadd.xlane.f32.xlu0 %v486
      %v488 = vpop.xlane.xlu0 %487
      %v489 = vpack.c.bf16 %v485, %v485
      %v491 = vunpack.c.l.b16 %v314
      %v492 = vpack.c.b16 %v491, %v491
      %493 = vrot.lane.b32.xlu0 %v492, 64
      %v494 = vpop.permute.xlu0 %493
      %v496 = vsel %vm365, %v489, 0
      %v499 = vsel %vm379, %v494, 0
      %501 = vmatprep.subr.bf16.mxu0 0
      %502 = vmatpush1.bf16.msra.mxu0 %v499
      %503 = vmatprep.subr.bf16.mxu0 0
      %504 = vmatpush1.bf16.msra.mxu0 0
      %505 = vmatprep.subr.bf16.mxu0 0
      %506 = vmatpush1.bf16.msra.mxu0 0
      %507 = vmatprep.subr.bf16.mxu0 0
      %508 = vmatpush1.bf16.msra.mxu0 0
      %509 = vmatprep.subr.bf16.mxu0 0
      %510 = vmatpush1.bf16.msra.mxu0 0
      %511 = vmatprep.subr.bf16.mxu0 0
      %512 = vmatpush1.bf16.msra.mxu0 0
      %513 = vmatprep.subr.bf16.mxu0 0
      %514 = vmatpush1.bf16.msra.mxu0 0
      %515 = vmatprep.subr.bf16.mxu0 0
      %516 = vmatpush1.bf16.msra.mxu0 0
      %517 = vmatprep.subr.bf16.mxu0 0
      %518 = vmatpush1.bf16.msra.mxu0 0
      %519 = vmatprep.subr.bf16.mxu0 0
      %520 = vmatpush1.bf16.msra.mxu0 0
      %521 = vmatprep.subr.bf16.mxu0 0
      %522 = vmatpush1.bf16.msra.mxu0 0
      %523 = vmatprep.subr.bf16.mxu0 0
      %524 = vmatpush1.bf16.msra.mxu0 0
      %525 = vmatprep.subr.bf16.mxu0 0
      %526 = vmatpush1.bf16.msra.mxu0 0
      %527 = vmatprep.subr.bf16.mxu0 0
      %528 = vmatpush1.bf16.msra.mxu0 0
      %529 = vmatprep.subr.bf16.mxu0 0
      %530 = vmatpush1.bf16.msra.mxu0 0
      %531 = vmatprep.subr.bf16.mxu0 0
      %532 = vmatpush1.bf16.msra.mxu0 0
      %533 = vmatprep.mubr.bf16.mxu0 0
      %534 = vmatmul.mubr.bf16.gmra.mrb[0].mxu0 %v496
      %v535 = vpop.f32.mrb[0].mxu0
      %v536 = vadd.f32 0.0, %v535
      %v537 = vpop.f32.mrb[0].mxu0
      %v538 = vpop.f32.mrb[0].mxu0
      %v539 = vpop.f32.mrb[0].mxu0
      %540 = vdwg.mxu0
      %v541 = vrcp.pop %v488
      %v542 = vmul.f32 %v536, %v541
      %544 = vrot.lane.b32.xlu0 %v542, 64
      %v545 = vpop.permute.xlu0 %544
      %v547 = vsel %vm315, %v424, %v545
      %v548 = vpack.c.bf16 %v547, %v547
      %549 = vst [vmem:[%s304] sm:$0xf] %v548
      %p550 = scmp.lt.s32.totalorder %s19, 1
      %s551 = scalar_select %p550, %s19, 1
      %p552 = scmp.lt.s32.totalorder %s21, 0
      %s553 = scalar_select %p552, %s21, 0
      %p554 = scmp.lt.s32.totalorder %s20, 0
      %s555 = scalar_select %p554, %s20, 0
      %s556 = sadd.s32 %s555, %s553
      %s557 = sadd.s32 %s556, %s551
      %s558 = smul.addr %s557, 4
      %s559 = scalar_lea.vmem %s3, %s558
      // Predicated region
      $region33: #{dinov2_encoder_forward.20} parent=31 // pred_check
        %p560 = pneg %p145
      $region34: #{dinov2_encoder_forward.20} parent=31 // pred_check_branch
        %562 = sbr.rel (%p560) target = $region36
      $region35: #{dinov2_encoder_forward.20} parent=31 // pred_region
        _
      $region36: #{dinov2_encoder_forward.20} parent=31 // pred_fallthru
        _
    $region32: #{dinov2_encoder_forward.20} parent=5 // pred_fallthru
      _
    %p563 = scmp.le.s32.totalorder 2, %s9
    // Predicated region
    $region37: #{dinov2_encoder_forward.20} parent=5 // pred_check
      %p564 = pneg %p563
    $region38: #{dinov2_encoder_forward.20} parent=5 // pred_check_branch
      %566 = sbr.rel (%p564) target = $region40
    $region39: #{dinov2_encoder_forward.20} parent=5 // pred_region
      %s567 = ssub.s32 %s9, 2
      // Predicated region
      $region41: #{dinov2_encoder_forward.20} parent=39 // pred_check
        %p568 = pneg %p151
      $region42: #{dinov2_encoder_forward.20} parent=39 // pred_check_branch
        %570 = sbr.rel (%p568) target = $region44
      $region43: #{dinov2_encoder_forward.20} parent=39 // pred_region
        %p571 = scmp.lt.s32.totalorder %s22, 1
        %s572 = scalar_select %p571, %s22, 1
        %p573 = scmp.lt.s32.totalorder %s24, 0
        %s574 = scalar_select %p573, %s24, 0
        %p575 = scmp.lt.s32.totalorder %s23, 0
        %s576 = scalar_select %p575, %s23, 0
        %s577 = sadd.s32 %s576, %s574
        %s578 = sadd.s32 %s577, %s572
        %s579 = smul.addr %s578, 4
        %s580 = scalar_lea.vmem %s3, %s579
      $region44: #{dinov2_encoder_forward.20} parent=39 // pred_fallthru
        _
    $region40: #{dinov2_encoder_forward.20} parent=5 // pred_fallthru
      _
  $region6: #{dinov2_encoder_forward.20} parent=0 // loop_footer
    %s13 = sadd.s32 1, %s9
  $region7: #{dinov2_encoder_forward.20} parent=0 // loop_footer_branch
    %8 = sbr.rel target = $region3
  $region8: #{dinov2_encoder_forward.20} parent=0 // loop_exit
    _

// kernel: dinov2_encoder_forward.19
$region0: #{dinov2_encoder_forward.19}
  #allocation0 [shape = 'u32[]', space=smem, size = 0x4, offset = 0x4, fixed_abs, tag = 'smem constant byte address 0x4 - core index']
  #allocation1 [shape = 'u32[144,128]{1,0:T(1,128)}', space=vmem, size = 0x12000, scoped, tag = 'internal scratch']
  #allocation2 [shape = 'f32[16,384]{1,0:T(8,128)}', space=vmem, size = 0x6000, scoped, tag = 'scratch operand']
  %s0 = inlined_call_operand.vmem [shape: bf16[16,128], index: 0, kind: input, shape index: {}]
  %s1 = inlined_call_operand.vmem [shape: bf16[128,384], index: 1, kind: input, shape index: {}]
  %s2 = inlined_call_operand.vmem [shape: f32[1,384], index: 2, kind: input, shape index: {}]
  %s3 = inlined_call_operand.vmem [shape: f32[1,128], index: 3, kind: input, shape index: {}]
  %s4 = inlined_call_operand.vmem [shape: f32[1,128], index: 4, kind: input, shape index: {}]
  %s5 = inlined_call_operand.vmem [shape: bf16[16,384], index: 5, kind: output, shape index: {}]
  %s6 = sld [smem:[#allocation0]]
  $region38: #{dinov2_encoder_forward.19} parent=0
    _
  %s8 = ssub.s32 1, %s6
  %s9 = scalar_select 0, %s8, %s6
  // Predicated region
  $region2: #{dinov2_encoder_forward.19} parent=0 // pred_check
    _
  $region3: #{dinov2_encoder_forward.19} parent=0 // pred_check_branch
    %11 = sbr.rel (0) target = $region5
  $region4: #{dinov2_encoder_forward.19} parent=0 // pred_region
    _
  $region5: #{dinov2_encoder_forward.19} parent=0 // pred_fallthru
    _
  // Predicated region
  $region6: #{dinov2_encoder_forward.19} parent=0 // pred_check
    _
  $region7: #{dinov2_encoder_forward.19} parent=0 // pred_check_branch
    %13 = sbr.rel (0) target = $region9
  $region8: #{dinov2_encoder_forward.19} parent=0 // pred_region
    _
  $region9: #{dinov2_encoder_forward.19} parent=0 // pred_fallthru
    _
  // Predicated region
  $region10: #{dinov2_encoder_forward.19} parent=0 // pred_check
    _
  $region11: #{dinov2_encoder_forward.19} parent=0 // pred_check_branch
    %15 = sbr.rel (0) target = $region13
  $region12: #{dinov2_encoder_forward.19} parent=0 // pred_region
    _
  $region13: #{dinov2_encoder_forward.19} parent=0 // pred_fallthru
    _
  // Predicated region
  $region14: #{dinov2_encoder_forward.19} parent=0 // pred_check
    _
  $region15: #{dinov2_encoder_forward.19} parent=0 // pred_check_branch
    %17 = sbr.rel (0) target = $region17
  $region16: #{dinov2_encoder_forward.19} parent=0 // pred_region
    _
  $region17: #{dinov2_encoder_forward.19} parent=0 // pred_fallthru
    _
  // Predicated region
  $region18: #{dinov2_encoder_forward.19} parent=0 // pred_check
    _
  $region19: #{dinov2_encoder_forward.19} parent=0 // pred_check_branch
    %19 = sbr.rel (0) target = $region21
  $region20: #{dinov2_encoder_forward.19} parent=0 // pred_region
    _
  $region21: #{dinov2_encoder_forward.19} parent=0 // pred_fallthru
    _
  %p21 = scmp.eq.s32.totalorder 0, 0
  // Predicated region
  $region22: #{dinov2_encoder_forward.19} parent=0 // pred_check
    %p22 = pneg %p21
  $region23: #{dinov2_encoder_forward.19} parent=0 // pred_check_branch
    %24 = sbr.rel (%p22) target = $region25
  $region24: #{dinov2_encoder_forward.19} parent=0 // pred_region
    %25 = vst [vmem:[#allocation2] sm:$0xff] 0.0
    %26 = vst [vmem:[#allocation2 + $0x8] sm:$0xff] 0.0
    %27 = vst [vmem:[#allocation2 + $0x10] sm:$0xff] 0.0
    %28 = vst [vmem:[#allocation2 + $0x18] sm:$0xff] 0.0
    %29 = vst [vmem:[#allocation2 + $0x20] sm:$0xff] 0.0
    %30 = vst [vmem:[#allocation2 + $0x28] sm:$0xff] 0.0
  $region25: #{dinov2_encoder_forward.19} parent=0 // pred_fallthru
    _
  %v31 = vld [vmem:[%s0] sm:$0xf]
  %v32 = vld [vmem:[%s0 + $0x4] sm:$0xf]
  %v33 = vunpack.c.l.bf16 %v31
  %v34 = vunpack.c.l.bf16 %v32
  %v35 = vld [vmem:[%s3] sm:$0x1]
  %v36 = vld [vmem:[%s4] sm:$0x1]
  %37 = vadd.xlane.f32.xlu0 %v33
  %v38 = vpop.xlane.xlu0 %37
  %39 = vadd.xlane.f32.xlu0 %v34
  %v40 = vpop.xlane.xlu0 %39
  %v41 = vrcp.pop 128.0
  %v42 = vmul.f32 %v38, %v41
  %v43 = vmul.f32 %v40, %v41
  %v44 = vsub.f32 %v33, %v42
  %v45 = vsub.f32 %v34, %v43
  %v46 = vmul.f32 %v44, %v44
  %v47 = vmul.f32 %v45, %v45
  %48 = vadd.xlane.f32.xlu0 %v46
  %v49 = vpop.xlane.xlu0 %48
  %50 = vadd.xlane.f32.xlu0 %v47
  %v51 = vpop.xlane.xlu0 %50
  %v52 = vmul.f32 %v49, %v41
  %v53 = vmul.f32 %v51, %v41
  %v54 = vadd.f32 %v52, 1e-06
  %v55 = vadd.f32 %v53, 1e-06
  %v56 = vrsqrt.pop %v54
  %v57 = vrsqrt.pop %v55
  %v58 = vmul.f32 %v44, %v56
  %v59 = vmul.f32 %v45, %v57
  %v61 = vlaneseq
  %v62 = vshrl.u32 %v61, 7
  %v63 = vsub.s32 0, %v62
  %v64 = vrot.slane %v35, %v63
  %v66 = vmul.f32 %v58, %v64
  %v67 = vmul.f32 %v59, %v64
  %v69 = vlaneseq
  %v70 = vshrl.u32 %v69, 7
  %v71 = vsub.s32 0, %v70
  %v72 = vrot.slane %v36, %v71
  %v74 = vadd.f32 %v66, %v72
  %v75 = vadd.f32 %v67, %v72
  %v76 = vld [vmem:[#allocation2] sm:$0xff]
  %v77 = vld [vmem:[#allocation2 + $0x8] sm:$0xff]
  %v78 = vld [vmem:[#allocation2 + $0x10] sm:$0xff]
  %v79 = vld [vmem:[#allocation2 + $0x18] sm:$0xff]
  %v80 = vld [vmem:[#allocation2 + $0x20] sm:$0xff]
  %v81 = vld [vmem:[#allocation2 + $0x28] sm:$0xff]
  %v82 = vpack.c.bf16 %v75, %v74
  %v83 = vld [vmem:[%s1] sm:$0xff]
  %v84 = vld [vmem:[%s1 + $0x8] sm:$0xf]
  %v85 = vld [vmem:[%s1 + $0xc] sm:$0xff]
  %v86 = vld [vmem:[%s1 + $0x14] sm:$0xf]
  %v87 = vld [vmem:[%s1 + $0x18] sm:$0xff]
  %v88 = vld [vmem:[%s1 + $0x20] sm:$0xf]
  %v89 = vld [vmem:[%s1 + $0x24] sm:$0xff]
  %v90 = vld [vmem:[%s1 + $0x2c] sm:$0xf]
  %v91 = vld [vmem:[%s1 + $0x30] sm:$0xff]
  %v92 = vld [vmem:[%s1 + $0x38] sm:$0xf]
  %v93 = vld [vmem:[%s1 + $0x3c] sm:$0xff]
  %v94 = vld [vmem:[%s1 + $0x44] sm:$0xf]
  %v95 = vld [vmem:[%s1 + $0x48] sm:$0xff]
  %v96 = vld [vmem:[%s1 + $0x50] sm:$0xf]
  %v97 = vld [vmem:[%s1 + $0x54] sm:$0xff]
  %v98 = vld [vmem:[%s1 + $0x5c] sm:$0xf]
  %v99 = vld [vmem:[%s1 + $0x60] sm:$0xff]
  %v100 = vld [vmem:[%s1 + $0x68] sm:$0xf]
  %v101 = vld [vmem:[%s1 + $0x6c] sm:$0xff]
  %v102 = vld [vmem:[%s1 + $0x74] sm:$0xf]
  %v103 = vld [vmem:[%s1 + $0x78] sm:$0xff]
  %v104 = vld [vmem:[%s1 + $0x80] sm:$0xf]
  %v105 = vld [vmem:[%s1 + $0x84] sm:$0xff]
  %v106 = vld [vmem:[%s1 + $0x8c] sm:$0xf]
  %v107 = vld [vmem:[%s1 + $0x90] sm:$0xff]
  %v108 = vld [vmem:[%s1 + $0x98] sm:$0xf]
  %v109 = vld [vmem:[%s1 + $0x9c] sm:$0xff]
  %v110 = vld [vmem:[%s1 + $0xa4] sm:$0xf]
  %v111 = vld [vmem:[%s1 + $0xa8] sm:$0xff]
  %v112 = vld [vmem:[%s1 + $0xb0] sm:$0xf]
  %v113 = vld [vmem:[%s1 + $0xb4] sm:$0xff]
  %v114 = vld [vmem:[%s1 + $0xbc] sm:$0xf]
  %v147 = vunpack.c.l.b16 %v83
  %v148 = vunpack.c.h.b16 %v83
  %v149 = vunpack.c.l.b16 %v84
  %v150 = vunpack.c.l.b16 %v85
  %v151 = vunpack.c.h.b16 %v85
  %v152 = vunpack.c.l.b16 %v86
  %v153 = vunpack.c.l.b16 %v87
  %v154 = vunpack.c.h.b16 %v87
  %v155 = vunpack.c.l.b16 %v88
  %v156 = vunpack.c.l.b16 %v89
  %v157 = vunpack.c.h.b16 %v89
  %v158 = vunpack.c.l.b16 %v90
  %v159 = vunpack.c.l.b16 %v91
  %v160 = vunpack.c.h.b16 %v91
  %v161 = vunpack.c.l.b16 %v92
  %v162 = vunpack.c.l.b16 %v93
  %v163 = vunpack.c.h.b16 %v93
  %v164 = vunpack.c.l.b16 %v94
  %v165 = vunpack.c.l.b16 %v95
  %v166 = vunpack.c.h.b16 %v95
  %v167 = vunpack.c.l.b16 %v96
  %v168 = vunpack.c.l.b16 %v97
  %v169 = vunpack.c.h.b16 %v97
  %v170 = vunpack.c.l.b16 %v98
  %v171 = vunpack.c.l.b16 %v99
  %v172 = vunpack.c.h.b16 %v99
  %v173 = vunpack.c.l.b16 %v100
  %v174 = vunpack.c.l.b16 %v101
  %v175 = vunpack.c.h.b16 %v101
  %v176 = vunpack.c.l.b16 %v102
  %v177 = vunpack.c.l.b16 %v103
  %v178 = vunpack.c.h.b16 %v103
  %v179 = vunpack.c.l.b16 %v104
  %v180 = vunpack.c.l.b16 %v105
  %v181 = vunpack.c.h.b16 %v105
  %v182 = vunpack.c.l.b16 %v106
  %v183 = vunpack.c.l.b16 %v107
  %v184 = vunpack.c.h.b16 %v107
  %v185 = vunpack.c.l.b16 %v108
  %v186 = vunpack.c.l.b16 %v109
  %v187 = vunpack.c.h.b16 %v109
  %v188 = vunpack.c.l.b16 %v110
  %v189 = vunpack.c.l.b16 %v111
  %v190 = vunpack.c.h.b16 %v111
  %v191 = vunpack.c.l.b16 %v112
  %v192 = vunpack.c.l.b16 %v113
  %v193 = vunpack.c.h.b16 %v113
  %v194 = vunpack.c.l.b16 %v114
  %v195 = vpack.c.b16 %v150, %v147
  %v196 = vpack.c.b16 %v151, %v148
  %v197 = vpack.c.b16 %v152, %v149
  %v198 = vpack.c.b16 %v156, %v153
  %v199 = vpack.c.b16 %v157, %v154
  %v200 = vpack.c.b16 %v158, %v155
  %v201 = vpack.c.b16 %v162, %v159
  %v202 = vpack.c.b16 %v163, %v160
  %v203 = vpack.c.b16 %v164, %v161
  %v204 = vpack.c.b16 %v168, %v165
  %v205 = vpack.c.b16 %v169, %v166
  %v206 = vpack.c.b16 %v170, %v167
  %v207 = vpack.c.b16 %v174, %v171
  %v208 = vpack.c.b16 %v175, %v172
  %v209 = vpack.c.b16 %v176, %v173
  %v210 = vpack.c.b16 %v180, %v177
  %v211 = vpack.c.b16 %v181, %v178
  %v212 = vpack.c.b16 %v182, %v179
  %v213 = vpack.c.b16 %v186, %v183
  %v214 = vpack.c.b16 %v187, %v184
  %v215 = vpack.c.b16 %v188, %v185
  %v216 = vpack.c.b16 %v192, %v189
  %v217 = vpack.c.b16 %v193, %v190
  %v218 = vpack.c.b16 %v194, %v191
  %243 = vmatprep.subr.bf16.mxu0 %v196
  %244 = vmatpush1.bf16.msra.mxu0 %v195
  %245 = vmatprep.subr.bf16.mxu0 %v199
  %246 = vmatpush1.bf16.msra.mxu0 %v198
  %247 = vmatprep.subr.bf16.mxu0 %v202
  %248 = vmatpush1.bf16.msra.mxu0 %v201
  %249 = vmatprep.subr.bf16.mxu0 %v205
  %250 = vmatpush1.bf16.msra.mxu0 %v204
  %251 = vmatprep.subr.bf16.mxu0 %v208
  %252 = vmatpush1.bf16.msra.mxu0 %v207
  %253 = vmatprep.subr.bf16.mxu0 %v211
  %254 = vmatpush1.bf16.msra.mxu0 %v210
  %255 = vmatprep.subr.bf16.mxu0 %v214
  %256 = vmatpush1.bf16.msra.mxu0 %v213
  %257 = vmatprep.subr.bf16.mxu0 %v217
  %258 = vmatpush1.bf16.msra.mxu0 %v216
  %259 = vmatprep.subr.bf16.mxu0 0
  %260 = vmatpush1.bf16.msra.mxu0 0
  %261 = vmatprep.subr.bf16.mxu0 0
  %262 = vmatpush1.bf16.msra.mxu0 0
  %263 = vmatprep.subr.bf16.mxu0 0
  %264 = vmatpush1.bf16.msra.mxu0 0
  %265 = vmatprep.subr.bf16.mxu0 0
  %266 = vmatpush1.bf16.msra.mxu0 0
  %267 = vmatprep.subr.bf16.mxu0 0
  %268 = vmatpush1.bf16.msra.mxu0 0
  %269 = vmatprep.subr.bf16.mxu0 0
  %270 = vmatpush1.bf16.msra.mxu0 0
  %271 = vmatprep.subr.bf16.mxu0 0
  %272 = vmatpush1.bf16.msra.mxu0 0
  %273 = vmatprep.subr.bf16.mxu0 0
  %274 = vmatpush1.bf16.msra.mxu0 0
  %275 = vmatprep.mubr.bf16.mxu0 0
  %276 = vmatmul.mubr.bf16.gmra.mrb[0].mxu0 %v82
  %v277 = vpop.f32.mrb[0].mxu0
  %v278 = vadd.f32 0.0, %v277
  %v279 = vpop.f32.mrb[0].mxu0
  %v280 = vadd.f32 0.0, %v279
  %v281 = vpop.f32.mrb[0].mxu0
  %v282 = vadd.f32 0.0, %v281
  %v283 = vpop.f32.mrb[0].mxu0
  %v284 = vadd.f32 0.0, %v283
  %285 = vdwg.mxu0
  %286 = vmatprep.subr.bf16.mxu0 0
  %287 = vmatpush1.bf16.msra.mxu0 %v197
  %288 = vmatprep.subr.bf16.mxu0 0
  %289 = vmatpush1.bf16.msra.mxu0 %v200
  %290 = vmatprep.subr.bf16.mxu0 0
  %291 = vmatpush1.bf16.msra.mxu0 %v203
  %292 = vmatprep.subr.bf16.mxu0 0
  %293 = vmatpush1.bf16.msra.mxu0 %v206
  %294 = vmatprep.subr.bf16.mxu0 0
  %295 = vmatpush1.bf16.msra.mxu0 %v209
  %296 = vmatprep.subr.bf16.mxu0 0
  %297 = vmatpush1.bf16.msra.mxu0 %v212
  %298 = vmatprep.subr.bf16.mxu0 0
  %299 = vmatpush1.bf16.msra.mxu0 %v215
  %300 = vmatprep.subr.bf16.mxu0 0
  %301 = vmatpush1.bf16.msra.mxu0 %v218
  %302 = vmatprep.subr.bf16.mxu0 0
  %303 = vmatpush1.bf16.msra.mxu0 0
  %304 = vmatprep.subr.bf16.mxu0 0
  %305 = vmatpush1.bf16.msra.mxu0 0
  %306 = vmatprep.subr.bf16.mxu0 0
  %307 = vmatpush1.bf16.msra.mxu0 0
  %308 = vmatprep.subr.bf16.mxu0 0
  %309 = vmatpush1.bf16.msra.mxu0 0
  %310 = vmatprep.subr.bf16.mxu0 0
  %311 = vmatpush1.bf16.msra.mxu0 0
  %312 = vmatprep.subr.bf16.mxu0 0
  %313 = vmatpush1.bf16.msra.mxu0 0
  %314 = vmatprep.subr.bf16.mxu0 0
  %315 = vmatpush1.bf16.msra.mxu0 0
  %316 = vmatprep.subr.bf16.mxu0 0
  %317 = vmatpush1.bf16.msra.mxu0 0
  %318 = vmatprep.mubr.bf16.mxu0 0
  %319 = vmatmul.mubr.bf16.gmra.mrb[0].mxu0 %v82
  %v320 = vpop.f32.mrb[0].mxu0
  %v321 = vadd.f32 0.0, %v320
  %v322 = vpop.f32.mrb[0].mxu0
  %v323 = vpop.f32.mrb[0].mxu0
  %v324 = vadd.f32 0.0, %v323
  %v325 = vpop.f32.mrb[0].mxu0
  %326 = vdwg.mxu0
  %v327 = vadd.f32 %v76, %v278
  %v328 = vadd.f32 %v77, %v280
  %v329 = vadd.f32 %v78, %v321
  %v330 = vadd.f32 %v79, %v282
  %v331 = vadd.f32 %v80, %v284
  %v332 = vadd.f32 %v81, %v324
  %333 = vst [vmem:[#allocation2] sm:$0xff] %v327
  %334 = vst [vmem:[#allocation2 + $0x8] sm:$0xff] %v328
  %335 = vst [vmem:[#allocation2 + $0x10] sm:$0xff] %v329
  %336 = vst [vmem:[#allocation2 + $0x18] sm:$0xff] %v330
  %337 = vst [vmem:[#allocation2 + $0x20] sm:$0xff] %v331
  %338 = vst [vmem:[#allocation2 + $0x28] sm:$0xff] %v332
  // Predicated region
  $region26: #{dinov2_encoder_forward.19} parent=0 // pred_check
    %p339 = pneg %p21
  $region27: #{dinov2_encoder_forward.19} parent=0 // pred_check_branch
    %341 = sbr.rel (%p339) target = $region29
  $region28: #{dinov2_encoder_forward.19} parent=0 // pred_region
    %v342 = vld [vmem:[#allocation2] sm:$0xff]
    %v343 = vld [vmem:[#allocation2 + $0x8] sm:$0xff]
    %v344 = vld [vmem:[#allocation2 + $0x10] sm:$0xff]
    %v345 = vld [vmem:[#allocation2 + $0x18] sm:$0xff]
    %v346 = vld [vmem:[#allocation2 + $0x20] sm:$0xff]
    %v347 = vld [vmem:[#allocation2 + $0x28] sm:$0xff]
    %v348 = vld [vmem:[%s2] sm:$0x7]
    %v350 = vlaneseq
    %v351 = vshrl.u32 %v350, 7
    %v352 = vsub.s32 0, %v351
    %v353 = vrot.slane %v348, %v352
    %v354 = vlaneseq
    %v355 = vshrl.u32 %v354, 7
    %v356 = vsub.s32 1, %v355
    %v357 = vrot.slane %v348, %v356
    %v358 = vlaneseq
    %v359 = vshrl.u32 %v358, 7
    %v360 = vsub.s32 2, %v359
    %v361 = vrot.slane %v348, %v360
    %v365 = vadd.f32 %v342, %v353
    %v366 = vadd.f32 %v343, %v357
    %v367 = vadd.f32 %v344, %v361
    %v368 = vadd.f32 %v345, %v353
    %v369 = vadd.f32 %v346, %v357
    %v370 = vadd.f32 %v347, %v361
    %v371 = vpack.c.bf16 %v368, %v365
    %v372 = vpack.c.bf16 %v369, %v366
    %v373 = vpack.c.bf16 %v370, %v367
    %v377 = vunpack.c.l.b16 %v371
    %v378 = vunpack.c.l.b16 %v372
    %v379 = vunpack.c.l.b16 %v373
    %v380 = vunpack.c.h.b16 %v371
    %v381 = vunpack.c.h.b16 %v372
    %v382 = vunpack.c.h.b16 %v373
    %v383 = vpack.c.b16 %v378, %v377
    %v384 = vpack.c.b16 %v379, %v379
    %v385 = vpack.c.b16 %v381, %v380
    %v386 = vpack.c.b16 %v382, %v382
    %391 = vst [vmem:[%s5] sm:$0xff] %v383
    %392 = vst [vmem:[%s5 + $0x8] sm:$0xf] %v384
    %393 = vst [vmem:[%s5 + $0xc] sm:$0xff] %v385
    %394 = vst [vmem:[%s5 + $0x14] sm:$0xf] %v386
  $region29: #{dinov2_encoder_forward.19} parent=0 // pred_fallthru
    _
  // Predicated region
  $region30: #{dinov2_encoder_forward.19} parent=0 // pred_check
    _
  $region31: #{dinov2_encoder_forward.19} parent=0 // pred_check_branch
    %396 = sbr.rel (0) target = $region33
  $region32: #{dinov2_encoder_forward.19} parent=0 // pred_region
    _
  $region33: #{dinov2_encoder_forward.19} parent=0 // pred_fallthru
    _
  // Predicated region
  $region34: #{dinov2_encoder_forward.19} parent=0 // pred_check
    _
  $region35: #{dinov2_encoder_forward.19} parent=0 // pred_check_branch
    %398 = sbr.rel (0) target = $region37
  $region36: #{dinov2_encoder_forward.19} parent=0 // pred_region
    _
  $region37: #{dinov2_encoder_forward.19} parent=0 // pred_fallthru
    _

// kernel: dinov2_encoder_forward.21
$region0: #{dinov2_encoder_forward.21}
  #allocation0 [shape = 'u32[]', space=smem, size = 0x4, offset = 0x4, fixed_abs, tag = 'smem constant byte address 0x4 - core index']
  #allocation1 [shape = 'u32[144,128]{1,0:T(1,128)}', space=vmem, size = 0x12000, scoped, tag = 'internal scratch']
  #allocation2 [shape = 'f32[16,128]{1,0:T(8,128)}', space=vmem, size = 0x2000, scoped, tag = 'scratch operand']
  %s0 = inlined_call_operand.vmem [shape: bf16[16,128], index: 0, kind: input, shape index: {}]
  %s1 = inlined_call_operand.vmem [shape: bf16[128,128], index: 1, kind: input, shape index: {}]
  %s2 = inlined_call_operand.vmem [shape: f32[1,128], index: 2, kind: input, shape index: {}]
  %s3 = inlined_call_operand.vmem [shape: f32[1,128], index: 3, kind: input, shape index: {}]
  %s4 = inlined_call_operand.vmem [shape: bf16[16,128], index: 4, kind: input, shape index: {}]
  %s5 = inlined_call_operand.vmem [shape: bf16[16,128], index: 5, kind: output, shape index: {}]
  %s6 = sld [smem:[#allocation0]]
  $region38: #{dinov2_encoder_forward.21} parent=0
    _
  %s8 = ssub.s32 1, %s6
  %s9 = scalar_select 0, %s8, %s6
  // Predicated region
  $region2: #{dinov2_encoder_forward.21} parent=0 // pred_check
    _
  $region3: #{dinov2_encoder_forward.21} parent=0 // pred_check_branch
    %11 = sbr.rel (0) target = $region5
  $region4: #{dinov2_encoder_forward.21} parent=0 // pred_region
    _
  $region5: #{dinov2_encoder_forward.21} parent=0 // pred_fallthru
    _
  // Predicated region
  $region6: #{dinov2_encoder_forward.21} parent=0 // pred_check
    _
  $region7: #{dinov2_encoder_forward.21} parent=0 // pred_check_branch
    %13 = sbr.rel (0) target = $region9
  $region8: #{dinov2_encoder_forward.21} parent=0 // pred_region
    _
  $region9: #{dinov2_encoder_forward.21} parent=0 // pred_fallthru
    _
  // Predicated region
  $region10: #{dinov2_encoder_forward.21} parent=0 // pred_check
    _
  $region11: #{dinov2_encoder_forward.21} parent=0 // pred_check_branch
    %15 = sbr.rel (0) target = $region13
  $region12: #{dinov2_encoder_forward.21} parent=0 // pred_region
    _
  $region13: #{dinov2_encoder_forward.21} parent=0 // pred_fallthru
    _
  // Predicated region
  $region14: #{dinov2_encoder_forward.21} parent=0 // pred_check
    _
  $region15: #{dinov2_encoder_forward.21} parent=0 // pred_check_branch
    %17 = sbr.rel (0) target = $region17
  $region16: #{dinov2_encoder_forward.21} parent=0 // pred_region
    _
  $region17: #{dinov2_encoder_forward.21} parent=0 // pred_fallthru
    _
  // Predicated region
  $region18: #{dinov2_encoder_forward.21} parent=0 // pred_check
    _
  $region19: #{dinov2_encoder_forward.21} parent=0 // pred_check_branch
    %19 = sbr.rel (0) target = $region21
  $region20: #{dinov2_encoder_forward.21} parent=0 // pred_region
    _
  $region21: #{dinov2_encoder_forward.21} parent=0 // pred_fallthru
    _
  %p21 = scmp.eq.s32.totalorder 0, 0
  // Predicated region
  $region22: #{dinov2_encoder_forward.21} parent=0 // pred_check
    %p22 = pneg %p21
  $region23: #{dinov2_encoder_forward.21} parent=0 // pred_check_branch
    %24 = sbr.rel (%p22) target = $region25
  $region24: #{dinov2_encoder_forward.21} parent=0 // pred_region
    %25 = vst [vmem:[#allocation2] sm:$0xff] 0.0
    %26 = vst [vmem:[#allocation2 + $0x8] sm:$0xff] 0.0
  $region25: #{dinov2_encoder_forward.21} parent=0 // pred_fallthru
    _
  %v27 = vld [vmem:[%s0] sm:$0xf]
  %v28 = vld [vmem:[%s0 + $0x4] sm:$0xf]
  %v29 = vld [vmem:[#allocation2] sm:$0xff]
  %v30 = vld [vmem:[#allocation2 + $0x8] sm:$0xff]
  %v31 = vld [vmem:[%s1] sm:$0xf]
  %v32 = vld [vmem:[%s1 + $0x4] sm:$0xf]
  %v33 = vld [vmem:[%s1 + $0x8] sm:$0xf]
  %v34 = vld [vmem:[%s1 + $0xc] sm:$0xf]
  %v35 = vld [vmem:[%s1 + $0x10] sm:$0xf]
  %v36 = vld [vmem:[%s1 + $0x14] sm:$0xf]
  %v37 = vld [vmem:[%s1 + $0x18] sm:$0xf]
  %v38 = vld [vmem:[%s1 + $0x1c] sm:$0xf]
  %v39 = vld [vmem:[%s1 + $0x20] sm:$0xf]
  %v40 = vld [vmem:[%s1 + $0x24] sm:$0xf]
  %v41 = vld [vmem:[%s1 + $0x28] sm:$0xf]
  %v42 = vld [vmem:[%s1 + $0x2c] sm:$0xf]
  %v43 = vld [vmem:[%s1 + $0x30] sm:$0xf]
  %v44 = vld [vmem:[%s1 + $0x34] sm:$0xf]
  %v45 = vld [vmem:[%s1 + $0x38] sm:$0xf]
  %v46 = vld [vmem:[%s1 + $0x3c] sm:$0xf]
  %v49 = vunpack.c.l.b16 %v27
  %v50 = vunpack.c.l.b16 %v28
  %v51 = vpack.c.b16 %v50, %v49
  %v69 = vunpack.c.l.b16 %v31
  %v70 = vunpack.c.l.b16 %v32
  %v71 = vunpack.c.l.b16 %v33
  %v72 = vunpack.c.l.b16 %v34
  %v73 = vunpack.c.l.b16 %v35
  %v74 = vunpack.c.l.b16 %v36
  %v75 = vunpack.c.l.b16 %v37
  %v76 = vunpack.c.l.b16 %v38
  %v77 = vunpack.c.l.b16 %v39
  %v78 = vunpack.c.l.b16 %v40
  %v79 = vunpack.c.l.b16 %v41
  %v80 = vunpack.c.l.b16 %v42
  %v81 = vunpack.c.l.b16 %v43
  %v82 = vunpack.c.l.b16 %v44
  %v83 = vunpack.c.l.b16 %v45
  %v84 = vunpack.c.l.b16 %v46
  %v85 = vpack.c.b16 %v70, %v69
  %v86 = vpack.c.b16 %v72, %v71
  %v87 = vpack.c.b16 %v74, %v73
  %v88 = vpack.c.b16 %v76, %v75
  %v89 = vpack.c.b16 %v78, %v77
  %v90 = vpack.c.b16 %v80, %v79
  %v91 = vpack.c.b16 %v82, %v81
  %v92 = vpack.c.b16 %v84, %v83
  %101 = vmatprep.subr.bf16.mxu0 0
  %102 = vmatpush1.bf16.msra.mxu0 %v85
  %103 = vmatprep.subr.bf16.mxu0 0
  %104 = vmatpush1.bf16.msra.mxu0 %v86
  %105 = vmatprep.subr.bf16.mxu0 0
  %106 = vmatpush1.bf16.msra.mxu0 %v87
  %107 = vmatprep.subr.bf16.mxu0 0
  %108 = vmatpush1.bf16.msra.mxu0 %v88
  %109 = vmatprep.subr.bf16.mxu0 0
  %110 = vmatpush1.bf16.msra.mxu0 %v89
  %111 = vmatprep.subr.bf16.mxu0 0
  %112 = vmatpush1.bf16.msra.mxu0 %v90
  %113 = vmatprep.subr.bf16.mxu0 0
  %114 = vmatpush1.bf16.msra.mxu0 %v91
  %115 = vmatprep.subr.bf16.mxu0 0
  %116 = vmatpush1.bf16.msra.mxu0 %v92
  %117 = vmatprep.subr.bf16.mxu0 0
  %118 = vmatpush1.bf16.msra.mxu0 0
  %119 = vmatprep.subr.bf16.mxu0 0
  %120 = vmatpush1.bf16.msra.mxu0 0
  %121 = vmatprep.subr.bf16.mxu0 0
  %122 = vmatpush1.bf16.msra.mxu0 0
  %123 = vmatprep.subr.bf16.mxu0 0
  %124 = vmatpush1.bf16.msra.mxu0 0
  %125 = vmatprep.subr.bf16.mxu0 0
  %126 = vmatpush1.bf16.msra.mxu0 0
  %127 = vmatprep.subr.bf16.mxu0 0
  %128 = vmatpush1.bf16.msra.mxu0 0
  %129 = vmatprep.subr.bf16.mxu0 0
  %130 = vmatpush1.bf16.msra.mxu0 0
  %131 = vmatprep.subr.bf16.mxu0 0
  %132 = vmatpush1.bf16.msra.mxu0 0
  %133 = vmatprep.mubr.bf16.mxu0 0
  %134 = vmatmul.mubr.bf16.gmra.mrb[0].mxu0 %v51
  %v135 = vpop.f32.mrb[0].mxu0
  %v136 = vadd.f32 0.0, %v135
  %v137 = vpop.f32.mrb[0].mxu0
  %v138 = vpop.f32.mrb[0].mxu0
  %v139 = vadd.f32 0.0, %v138
  %v140 = vpop.f32.mrb[0].mxu0
  %141 = vdwg.mxu0
  %v142 = vadd.f32 %v29, %v136
  %v143 = vadd.f32 %v30, %v139
  %144 = vst [vmem:[#allocation2] sm:$0xff] %v142
  %145 = vst [vmem:[#allocation2 + $0x8] sm:$0xff] %v143
  // Predicated region
  $region26: #{dinov2_encoder_forward.21} parent=0 // pred_check
    %p146 = pneg %p21
  $region27: #{dinov2_encoder_forward.21} parent=0 // pred_check_branch
    %148 = sbr.rel (%p146) target = $region29
  $region28: #{dinov2_encoder_forward.21} parent=0 // pred_region
    %v149 = vld [vmem:[#allocation2] sm:$0xff]
    %v150 = vld [vmem:[#allocation2 + $0x8] sm:$0xff]
    %v151 = vld [vmem:[%s2] sm:$0x1]
    %v153 = vlaneseq
    %v154 = vshrl.u32 %v153, 7
    %v155 = vsub.s32 0, %v154
    %v156 = vrot.slane %v151, %v155
    %v158 = vadd.f32 %v149, %v156
    %v159 = vadd.f32 %v150, %v156
    %v160 = vld [vmem:[%s4] sm:$0xf]
    %v161 = vld [vmem:[%s4 + $0x4] sm:$0xf]
    %v162 = vunpack.c.l.bf16 %v160
    %v163 = vunpack.c.l.bf16 %v161
    %v164 = vld [vmem:[%s3] sm:$0x1]
    %v166 = vlaneseq
    %v167 = vshrl.u32 %v166, 7
    %v168 = vsub.s32 0, %v167
    %v169 = vrot.slane %v164, %v168
    %v171 = vmul.f32 %v158, %v169
    %v172 = vmul.f32 %v159, %v169
    %v173 = vadd.f32 %v162, %v171
    %v174 = vadd.f32 %v163, %v172
    %v175 = vpack.c.bf16 %v174, %v173
    %v177 = vunpack.c.l.b16 %v175
    %v178 = vunpack.c.h.b16 %v175
    %v179 = vpack.c.b16 %v177, %v177
    %v180 = vpack.c.b16 %v178, %v178
    %183 = vst [vmem:[%s5] sm:$0xf] %v179
    %184 = vst [vmem:[%s5 + $0x4] sm:$0xf] %v180
  $region29: #{dinov2_encoder_forward.21} parent=0 // pred_fallthru
    _
  // Predicated region
  $region30: #{dinov2_encoder_forward.21} parent=0 // pred_check
    _
  $region31: #{dinov2_encoder_forward.21} parent=0 // pred_check_branch
    %186 = sbr.rel (0) target = $region33
  $region32: #{dinov2_encoder_forward.21} parent=0 // pred_region
    _
  $region33: #{dinov2_encoder_forward.21} parent=0 // pred_fallthru
    _
  // Predicated region
  $region34: #{dinov2_encoder_forward.21} parent=0 // pred_check
    _
  $region35: #{dinov2_encoder_forward.21} parent=0 // pred_check_branch
    %188 = sbr.rel (0) target = $region37
  $region36: #{dinov2_encoder_forward.21} parent=0 // pred_region
    _
  $region37: #{dinov2_encoder_forward.21} parent=0 // pred_fallthru
    _

// kernel: dinov2_encoder_forward.18
$region0: #{dinov2_encoder_forward.18}
  #allocation0 [shape = 'u32[]', space=smem, size = 0x4, offset = 0x4, fixed_abs, tag = 'smem constant byte address 0x4 - core index']
  #allocation1 [shape = 'u32[144,128]{1,0:T(1,128)}', space=vmem, size = 0x12000, scoped, tag = 'internal scratch']
  #allocation2 [shape = 'f32[8,128]{1,0:T(8,128)}', space=vmem, size = 0x1000, scoped, tag = 'scratch operand']
  %s0 = inlined_call_operand.vmem [shape: f32[8,588], index: 0, kind: input, shape index: {}]
  %s1 = inlined_call_operand.vmem [shape: bf16[588,128], index: 1, kind: input, shape index: {}]
  %s2 = inlined_call_operand.vmem [shape: f32[1,128], index: 2, kind: input, shape index: {}]
  %s3 = inlined_call_operand.vmem [shape: bf16[8,128], index: 3, kind: output, shape index: {}]
  %s4 = sld [smem:[#allocation0]]
  $region30: #{dinov2_encoder_forward.18} parent=0
    _
  %s6 = ssub.s32 1, %s4
  %s7 = scalar_select 0, %s6, %s4
  // Predicated region
  $region2: #{dinov2_encoder_forward.18} parent=0 // pred_check
    _
  $region3: #{dinov2_encoder_forward.18} parent=0 // pred_check_branch
    %9 = sbr.rel (0) target = $region5
  $region4: #{dinov2_encoder_forward.18} parent=0 // pred_region
    _
  $region5: #{dinov2_encoder_forward.18} parent=0 // pred_fallthru
    _
  // Predicated region
  $region6: #{dinov2_encoder_forward.18} parent=0 // pred_check
    _
  $region7: #{dinov2_encoder_forward.18} parent=0 // pred_check_branch
    %11 = sbr.rel (0) target = $region9
  $region8: #{dinov2_encoder_forward.18} parent=0 // pred_region
    _
  $region9: #{dinov2_encoder_forward.18} parent=0 // pred_fallthru
    _
  // Predicated region
  $region10: #{dinov2_encoder_forward.18} parent=0 // pred_check
    _
  $region11: #{dinov2_encoder_forward.18} parent=0 // pred_check_branch
    %13 = sbr.rel (0) target = $region13
  $region12: #{dinov2_encoder_forward.18} parent=0 // pred_region
    _
  $region13: #{dinov2_encoder_forward.18} parent=0 // pred_fallthru
    _
  %p15 = scmp.eq.s32.totalorder 0, 0
  // Predicated region
  $region14: #{dinov2_encoder_forward.18} parent=0 // pred_check
    %p16 = pneg %p15
  $region15: #{dinov2_encoder_forward.18} parent=0 // pred_check_branch
    %18 = sbr.rel (%p16) target = $region17
  $region16: #{dinov2_encoder_forward.18} parent=0 // pred_region
    %19 = vst [vmem:[#allocation2] sm:$0xff] 0.0
  $region17: #{dinov2_encoder_forward.18} parent=0 // pred_fallthru
    _
  %v20 = vld [vmem:[%s0] sm:$0xff]
  %v21 = vld [vmem:[%s0 + $0x8] sm:$0xff]
  %v22 = vld [vmem:[%s0 + $0x10] sm:$0xff]
  %v23 = vld [vmem:[%s0 + $0x18] sm:$0xff]
  %v24 = vld [vmem:[%s0 + $0x20] sm:$0xff]
  %v25 = vld [vmem:[#allocation2] sm:$0xff]
  %v26 = vpack.c.bf16 %v20, %v20
  %v27 = vpack.c.bf16 %v21, %v21
  %v28 = vpack.c.bf16 %v22, %v22
  %v29 = vpack.c.bf16 %v23, %v23
  %v30 = vpack.c.bf16 %v24, %v24
  %v31 = vld [vmem:[%s1] sm:$0xf]
  %v32 = vld [vmem:[%s1 + $0x4] sm:$0xf]
  %v33 = vld [vmem:[%s1 + $0x8] sm:$0xf]
  %v34 = vld [vmem:[%s1 + $0xc] sm:$0xf]
  %v35 = vld [vmem:[%s1 + $0x10] sm:$0xf]
  %v36 = vld [vmem:[%s1 + $0x14] sm:$0xf]
  %v37 = vld [vmem:[%s1 + $0x18] sm:$0xf]
  %v38 = vld [vmem:[%s1 + $0x1c] sm:$0xf]
  %v39 = vld [vmem:[%s1 + $0x20] sm:$0xf]
  %v40 = vld [vmem:[%s1 + $0x24] sm:$0xf]
  %v41 = vld [vmem:[%s1 + $0x28] sm:$0xf]
  %v42 = vld [vmem:[%s1 + $0x2c] sm:$0xf]
  %v43 = vld [vmem:[%s1 + $0x30] sm:$0xf]
  %v44 = vld [vmem:[%s1 + $0x34] sm:$0xf]
  %v45 = vld [vmem:[%s1 + $0x38] sm:$0xf]
  %v46 = vld [vmem:[%s1 + $0x3c] sm:$0xf]
  %v47 = vld [vmem:[%s1 + $0x40] sm:$0xf]
  %v48 = vld [vmem:[%s1 + $0x44] sm:$0xf]
  %v49 = vld [vmem:[%s1 + $0x48] sm:$0xf]
  %v50 = vld [vmem:[%s1 + $0x4c] sm:$0xf]
  %v51 = vld [vmem:[%s1 + $0x50] sm:$0xf]
  %v52 = vld [vmem:[%s1 + $0x54] sm:$0xf]
  %v53 = vld [vmem:[%s1 + $0x58] sm:$0xf]
  %v54 = vld [vmem:[%s1 + $0x5c] sm:$0xf]
  %v55 = vld [vmem:[%s1 + $0x60] sm:$0xf]
  %v56 = vld [vmem:[%s1 + $0x64] sm:$0xf]
  %v57 = vld [vmem:[%s1 + $0x68] sm:$0xf]
  %v58 = vld [vmem:[%s1 + $0x6c] sm:$0xf]
  %v59 = vld [vmem:[%s1 + $0x70] sm:$0xf]
  %v60 = vld [vmem:[%s1 + $0x74] sm:$0xf]
  %v61 = vld [vmem:[%s1 + $0x78] sm:$0xf]
  %v62 = vld [vmem:[%s1 + $0x7c] sm:$0xf]
  %v63 = vld [vmem:[%s1 + $0x80] sm:$0xf]
  %v64 = vld [vmem:[%s1 + $0x84] sm:$0xf]
  %v65 = vld [vmem:[%s1 + $0x88] sm:$0xf]
  %v66 = vld [vmem:[%s1 + $0x8c] sm:$0xf]
  %v67 = vld [vmem:[%s1 + $0x90] sm:$0xf]
  %v68 = vld [vmem:[%s1 + $0x94] sm:$0xf]
  %v69 = vld [vmem:[%s1 + $0x98] sm:$0xf]
  %v70 = vld [vmem:[%s1 + $0x9c] sm:$0xf]
  %v71 = vld [vmem:[%s1 + $0xa0] sm:$0xf]
  %v72 = vld [vmem:[%s1 + $0xa4] sm:$0xf]
  %v73 = vld [vmem:[%s1 + $0xa8] sm:$0xf]
  %v74 = vld [vmem:[%s1 + $0xac] sm:$0xf]
  %v75 = vld [vmem:[%s1 + $0xb0] sm:$0xf]
  %v76 = vld [vmem:[%s1 + $0xb4] sm:$0xf]
  %v77 = vld [vmem:[%s1 + $0xb8] sm:$0xf]
  %v78 = vld [vmem:[%s1 + $0xbc] sm:$0xf]
  %v79 = vld [vmem:[%s1 + $0xc0] sm:$0xf]
  %v80 = vld [vmem:[%s1 + $0xc4] sm:$0xf]
  %v81 = vld [vmem:[%s1 + $0xc8] sm:$0xf]
  %v82 = vld [vmem:[%s1 + $0xcc] sm:$0xf]
  %v83 = vld [vmem:[%s1 + $0xd0] sm:$0xf]
  %v84 = vld [vmem:[%s1 + $0xd4] sm:$0xf]
  %v85 = vld [vmem:[%s1 + $0xd8] sm:$0xf]
  %v86 = vld [vmem:[%s1 + $0xdc] sm:$0xf]
  %v87 = vld [vmem:[%s1 + $0xe0] sm:$0xf]
  %v88 = vld [vmem:[%s1 + $0xe4] sm:$0xf]
  %v89 = vld [vmem:[%s1 + $0xe8] sm:$0xf]
  %v90 = vld [vmem:[%s1 + $0xec] sm:$0xf]
  %v91 = vld [vmem:[%s1 + $0xf0] sm:$0xf]
  %v92 = vld [vmem:[%s1 + $0xf4] sm:$0xf]
  %v93 = vld [vmem:[%s1 + $0xf8] sm:$0xf]
  %v94 = vld [vmem:[%s1 + $0xfc] sm:$0xf]
  %v95 = vld [vmem:[%s1 + $0x100] sm:$0xf]
  %v96 = vld [vmem:[%s1 + $0x104] sm:$0xf]
  %v97 = vld [vmem:[%s1 + $0x108] sm:$0xf]
  %v98 = vld [vmem:[%s1 + $0x10c] sm:$0xf]
  %v99 = vld [vmem:[%s1 + $0x110] sm:$0xf]
  %v100 = vld [vmem:[%s1 + $0x114] sm:$0xf]
  %v101 = vld [vmem:[%s1 + $0x118] sm:$0xf]
  %v102 = vld [vmem:[%s1 + $0x11c] sm:$0xf]
  %v103 = vld [vmem:[%s1 + $0x120] sm:$0xf]
  %v104 = vld [vmem:[%s1 + $0x124] sm:$0x3]
  %v179 = vunpack.c.l.b16 %v31
  %v180 = vunpack.c.l.b16 %v32
  %v181 = vunpack.c.l.b16 %v33
  %v182 = vunpack.c.l.b16 %v34
  %v183 = vunpack.c.l.b16 %v35
  %v184 = vunpack.c.l.b16 %v36
  %v185 = vunpack.c.l.b16 %v37
  %v186 = vunpack.c.l.b16 %v38
  %v187 = vunpack.c.l.b16 %v39
  %v188 = vunpack.c.l.b16 %v40
  %v189 = vunpack.c.l.b16 %v41
  %v190 = vunpack.c.l.b16 %v42
  %v191 = vunpack.c.l.b16 %v43
  %v192 = vunpack.c.l.b16 %v44
  %v193 = vunpack.c.l.b16 %v45
  %v194 = vunpack.c.l.b16 %v46
  %v195 = vunpack.c.l.b16 %v47
  %v196 = vunpack.c.l.b16 %v48
  %v197 = vunpack.c.l.b16 %v49
  %v198 = vunpack.c.l.b16 %v50
  %v199 = vunpack.c.l.b16 %v51
  %v200 = vunpack.c.l.b16 %v52
  %v201 = vunpack.c.l.b16 %v53
  %v202 = vunpack.c.l.b16 %v54
  %v203 = vunpack.c.l.b16 %v55
  %v204 = vunpack.c.l.b16 %v56
  %v205 = vunpack.c.l.b16 %v57
  %v206 = vunpack.c.l.b16 %v58
  %v207 = vunpack.c.l.b16 %v59
  %v208 = vunpack.c.l.b16 %v60
  %v209 = vunpack.c.l.b16 %v61
  %v210 = vunpack.c.l.b16 %v62
  %v211 = vunpack.c.l.b16 %v63
  %v212 = vunpack.c.l.b16 %v64
  %v213 = vunpack.c.l.b16 %v65
  %v214 = vunpack.c.l.b16 %v66
  %v215 = vunpack.c.l.b16 %v67
  %v216 = vunpack.c.l.b16 %v68
  %v217 = vunpack.c.l.b16 %v69
  %v218 = vunpack.c.l.b16 %v70
  %v219 = vunpack.c.l.b16 %v71
  %v220 = vunpack.c.l.b16 %v72
  %v221 = vunpack.c.l.b16 %v73
  %v222 = vunpack.c.l.b16 %v74
  %v223 = vunpack.c.l.b16 %v75
  %v224 = vunpack.c.l.b16 %v76
  %v225 = vunpack.c.l.b16 %v77
  %v226 = vunpack.c.l.b16 %v78
  %v227 = vunpack.c.l.b16 %v79
  %v228 = vunpack.c.l.b16 %v80
  %v229 = vunpack.c.l.b16 %v81
  %v230 = vunpack.c.l.b16 %v82
  %v231 = vunpack.c.l.b16 %v83
  %v232 = vunpack.c.l.b16 %v84
  %v233 = vunpack.c.l.b16 %v85
  %v234 = vunpack.c.l.b16 %v86
  %v235 = vunpack.c.l.b16 %v87
  %v236 = vunpack.c.l.b16 %v88
  %v237 = vunpack.c.l.b16 %v89
  %v238 = vunpack.c.l.b16 %v90
  %v239 = vunpack.c.l.b16 %v91
  %v240 = vunpack.c.l.b16 %v92
  %v241 = vunpack.c.l.b16 %v93
  %v242 = vunpack.c.l.b16 %v94
  %v243 = vunpack.c.l.b16 %v95
  %v244 = vunpack.c.l.b16 %v96
  %v245 = vunpack.c.l.b16 %v97
  %v246 = vunpack.c.l.b16 %v98
  %v247 = vunpack.c.l.b16 %v99
  %v248 = vunpack.c.l.b16 %v100
  %v249 = vunpack.c.l.b16 %v101
  %v250 = vunpack.c.l.b16 %v102
  %v251 = vunpack.c.l.b16 %v103
  %v252 = vunpack.c.l.b16 %v104
  %v253 = vpack.c.b16 %v180, %v179
  %v254 = vpack.c.b16 %v182, %v181
  %v255 = vpack.c.b16 %v184, %v183
  %v256 = vpack.c.b16 %v186, %v185
  %v257 = vpack.c.b16 %v188, %v187
  %v258 = vpack.c.b16 %v190, %v189
  %v259 = vpack.c.b16 %v192, %v191
  %v260 = vpack.c.b16 %v194, %v193
  %v261 = vpack.c.b16 %v196, %v195
  %v262 = vpack.c.b16 %v198, %v197
  %v263 = vpack.c.b16 %v200, %v199
  %v264 = vpack.c.b16 %v202, %v201
  %v265 = vpack.c.b16 %v204, %v203
  %v266 = vpack.c.b16 %v206, %v205
  %v267 = vpack.c.b16 %v208, %v207
  %v268 = vpack.c.b16 %v210, %v209
  %v269 = vpack.c.b16 %v212, %v211
  %v270 = vpack.c.b16 %v214, %v213
  %v271 = vpack.c.b16 %v216, %v215
  %v272 = vpack.c.b16 %v218, %v217
  %v273 = vpack.c.b16 %v220, %v219
  %v274 = vpack.c.b16 %v222, %v221
  %v275 = vpack.c.b16 %v224, %v223
  %v276 = vpack.c.b16 %v226, %v225
  %v277 = vpack.c.b16 %v228, %v227
  %v278 = vpack.c.b16 %v230, %v229
  %v279 = vpack.c.b16 %v232, %v231
  %v280 = vpack.c.b16 %v234, %v233
  %v281 = vpack.c.b16 %v236, %v235
  %v282 = vpack.c.b16 %v238, %v237
  %v283 = vpack.c.b16 %v240, %v239
  %v284 = vpack.c.b16 %v242, %v241
  %v285 = vpack.c.b16 %v244, %v243
  %v286 = vpack.c.b16 %v246, %v245
  %v287 = vpack.c.b16 %v248, %v247
  %v288 = vpack.c.b16 %v250, %v249
  %v289 = vpack.c.b16 %v252, %v251
  %vm326 = vcmask 621568
  %v328 = vsel %vm326, %v30, 0
  %vm330 = vcmask 1045504
  %v332 = vsel %vm330, %v289, 0
  %334 = vmatprep.subr.bf16.mxu0 0
  %335 = vmatpush1.bf16.msra.mxu0 %v253
  %336 = vmatprep.subr.bf16.mxu0 0
  %337 = vmatpush1.bf16.msra.mxu0 %v254
  %338 = vmatprep.subr.bf16.mxu0 0
  %339 = vmatpush1.bf16.msra.mxu0 %v255
  %340 = vmatprep.subr.bf16.mxu0 0
  %341 = vmatpush1.bf16.msra.mxu0 %v256
  %342 = vmatprep.subr.bf16.mxu0 0
  %343 = vmatpush1.bf16.msra.mxu0 %v257
  %344 = vmatprep.subr.bf16.mxu0 0
  %345 = vmatpush1.bf16.msra.mxu0 %v258
  %346 = vmatprep.subr.bf16.mxu0 0
  %347 = vmatpush1.bf16.msra.mxu0 %v259
  %348 = vmatprep.subr.bf16.mxu0 0
  %349 = vmatpush1.bf16.msra.mxu0 %v260
  %350 = vmatprep.subr.bf16.mxu0 0
  %351 = vmatpush1.bf16.msra.mxu0 %v261
  %352 = vmatprep.subr.bf16.mxu0 0
  %353 = vmatpush1.bf16.msra.mxu0 %v262
  %354 = vmatprep.subr.bf16.mxu0 0
  %355 = vmatpush1.bf16.msra.mxu0 %v263
  %356 = vmatprep.subr.bf16.mxu0 0
  %357 = vmatpush1.bf16.msra.mxu0 %v264
  %358 = vmatprep.subr.bf16.mxu0 0
  %359 = vmatpush1.bf16.msra.mxu0 %v265
  %360 = vmatprep.subr.bf16.mxu0 0
  %361 = vmatpush1.bf16.msra.mxu0 %v266
  %362 = vmatprep.subr.bf16.mxu0 0
  %363 = vmatpush1.bf16.msra.mxu0 %v267
  %364 = vmatprep.subr.bf16.mxu0 0
  %365 = vmatpush1.bf16.msra.mxu0 %v268
  %366 = vmatprep.mubr.bf16.mxu0 %v27
  %367 = vmatmul.mubr.bf16.gmra.mrb[0].mxu0 %v26
  %v368 = vpop.f32.mrb[0].mxu0
  %v369 = vadd.f32 0.0, %v368
  %v370 = vpop.f32.mrb[0].mxu0
  %v371 = vpop.f32.mrb[0].mxu0
  %v372 = vpop.f32.mrb[0].mxu0
  %373 = vdwg.mxu0
  %374 = vmatprep.subr.bf16.mxu0 0
  %375 = vmatpush1.bf16.msra.mxu0 %v269
  %376 = vmatprep.subr.bf16.mxu0 0
  %377 = vmatpush1.bf16.msra.mxu0 %v270
  %378 = vmatprep.subr.bf16.mxu0 0
  %379 = vmatpush1.bf16.msra.mxu0 %v271
  %380 = vmatprep.subr.bf16.mxu0 0
  %381 = vmatpush1.bf16.msra.mxu0 %v272
  %382 = vmatprep.subr.bf16.mxu0 0
  %383 = vmatpush1.bf16.msra.mxu0 %v273
  %384 = vmatprep.subr.bf16.mxu0 0
  %385 = vmatpush1.bf16.msra.mxu0 %v274
  %386 = vmatprep.subr.bf16.mxu0 0
  %387 = vmatpush1.bf16.msra.mxu0 %v275
  %388 = vmatprep.subr.bf16.mxu0 0
  %389 = vmatpush1.bf16.msra.mxu0 %v276
  %390 = vmatprep.subr.bf16.mxu0 0
  %391 = vmatpush1.bf16.msra.mxu0 %v277
  %392 = vmatprep.subr.bf16.mxu0 0
  %393 = vmatpush1.bf16.msra.mxu0 %v278
  %394 = vmatprep.subr.bf16.mxu0 0
  %395 = vmatpush1.bf16.msra.mxu0 %v279
  %396 = vmatprep.subr.bf16.mxu0 0
  %397 = vmatpush1.bf16.msra.mxu0 %v280
  %398 = vmatprep.subr.bf16.mxu0 0
  %399 = vmatpush1.bf16.msra.mxu0 %v281
  %400 = vmatprep.subr.bf16.mxu0 0
  %401 = vmatpush1.bf16.msra.mxu0 %v282
  %402 = vmatprep.subr.bf16.mxu0 0
  %403 = vmatpush1.bf16.msra.mxu0 %v283
  %404 = vmatprep.subr.bf16.mxu0 0
  %405 = vmatpush1.bf16.msra.mxu0 %v284
  %406 = vmatprep.mubr.bf16.mxu0 %v29
  %407 = vmatmul.mubr.bf16.gmra.mrb[0].mxu0 %v28
  %v408 = vpop.f32.mrb[0].mxu0
  %v409 = vadd.f32 %v369, %v408
  %v410 = vpop.f32.mrb[0].mxu0
  %v411 = vpop.f32.mrb[0].mxu0
  %v412 = vpop.f32.mrb[0].mxu0
  %413 = vdwg.mxu0
  %414 = vmatprep.subr.bf16.mxu0 0
  %415 = vmatpush1.bf16.msra.mxu0 %v285
  %416 = vmatprep.subr.bf16.mxu0 0
  %417 = vmatpush1.bf16.msra.mxu0 %v286
  %418 = vmatprep.subr.bf16.mxu0 0
  %419 = vmatpush1.bf16.msra.mxu0 %v287
  %420 = vmatprep.subr.bf16.mxu0 0
  %421 = vmatpush1.bf16.msra.mxu0 %v288
  %422 = vmatprep.subr.bf16.mxu0 0
  %423 = vmatpush1.bf16.msra.mxu0 %v332
  %424 = vmatprep.subr.bf16.mxu0 0
  %425 = vmatpush1.bf16.msra.mxu0 0
  %426 = vmatprep.subr.bf16.mxu0 0
  %427 = vmatpush1.bf16.msra.mxu0 0
  %428 = vmatprep.subr.bf16.mxu0 0
  %429 = vmatpush1.bf16.msra.mxu0 0
  %430 = vmatprep.subr.bf16.mxu0 0
  %431 = vmatpush1.bf16.msra.mxu0 0
  %432 = vmatprep.subr.bf16.mxu0 0
  %433 = vmatpush1.bf16.msra.mxu0 0
  %434 = vmatprep.subr.bf16.mxu0 0
  %435 = vmatpush1.bf16.msra.mxu0 0
  %436 = vmatprep.subr.bf16.mxu0 0
  %437 = vmatpush1.bf16.msra.mxu0 0
  %438 = vmatprep.subr.bf16.mxu0 0
  %439 = vmatpush1.bf16.msra.mxu0 0
  %440 = vmatprep.subr.bf16.mxu0 0
  %441 = vmatpush1.bf16.msra.mxu0 0
  %442 = vmatprep.subr.bf16.mxu0 0
  %443 = vmatpush1.bf16.msra.mxu0 0
  %444 = vmatprep.subr.bf16.mxu0 0
  %445 = vmatpush1.bf16.msra.mxu0 0
  %446 = vmatprep.mubr.bf16.mxu0 0
  %447 = vmatmul.mubr.bf16.gmra.mrb[0].mxu0 %v328
  %v448 = vpop.f32.mrb[0].mxu0
  %v449 = vadd.f32 %v409, %v448
  %v450 = vpop.f32.mrb[0].mxu0
  %v451 = vpop.f32.mrb[0].mxu0
  %v452 = vpop.f32.mrb[0].mxu0
  %453 = vdwg.mxu0
  %v454 = vadd.f32 %v25, %v449
  %455 = vst [vmem:[#allocation2] sm:$0xff] %v454
  // Predicated region
  $region18: #{dinov2_encoder_forward.18} parent=0 // pred_check
    %p456 = pneg %p15
  $region19: #{dinov2_encoder_forward.18} parent=0 // pred_check_branch
    %458 = sbr.rel (%p456) target = $region21
  $region20: #{dinov2_encoder_forward.18} parent=0 // pred_region
    %v459 = vld [vmem:[#allocation2] sm:$0xff]
    %v460 = vld [vmem:[%s2] sm:$0x1]
    %v462 = vlaneseq
    %v463 = vshrl.u32 %v462, 7
    %v464 = vsub.s32 0, %v463
    %v465 = vrot.slane %v460, %v464
    %v467 = vadd.f32 %v459, %v465
    %v468 = vpack.c.bf16 %v467, %v467
    %469 = vst [vmem:[%s3] sm:$0xf] %v468
  $region21: #{dinov2_encoder_forward.18} parent=0 // pred_fallthru
    _
  // Predicated region
  $region22: #{dinov2_encoder_forward.18} parent=0 // pred_check
    _
  $region23: #{dinov2_encoder_forward.18} parent=0 // pred_check_branch
    %471 = sbr.rel (0) target = $region25
  $region24: #{dinov2_encoder_forward.18} parent=0 // pred_region
    _
  $region25: #{dinov2_encoder_forward.18} parent=0 // pred_fallthru
    _
  // Predicated region
  $region26: #{dinov2_encoder_forward.18} parent=0 // pred_check
    _
  $region27: #{dinov2_encoder_forward.18} parent=0 // pred_check_branch
    %473 = sbr.rel (0) target = $region29
  $region28: #{dinov2_encoder_forward.18} parent=0 // pred_region
    _
  $region29: #{dinov2_encoder_forward.18} parent=0 // pred_fallthru
    _

// kernel: dinov2_encoder_forward.23
$region0: #{dinov2_encoder_forward.23}
  #allocation0 [shape = 'u32[]', space=smem, size = 0x4, offset = 0x4, fixed_abs, tag = 'smem constant byte address 0x4 - core index']
  #allocation1 [shape = 'u32[144,128]{1,0:T(1,128)}', space=vmem, size = 0x12000, scoped, tag = 'internal scratch']
  #allocation2 [shape = 'f32[16,128]{1,0:T(8,128)}', space=vmem, size = 0x2000, scoped, tag = 'scratch operand']
  %s0 = inlined_call_operand.vmem [shape: bf16[16,512], index: 0, kind: input, shape index: {}]
  %s1 = inlined_call_operand.vmem [shape: bf16[512,128], index: 1, kind: input, shape index: {}]
  %s2 = inlined_call_operand.vmem [shape: f32[1,128], index: 2, kind: input, shape index: {}]
  %s3 = inlined_call_operand.vmem [shape: f32[1,128], index: 3, kind: input, shape index: {}]
  %s4 = inlined_call_operand.vmem [shape: bf16[16,128], index: 4, kind: input, shape index: {}]
  %s5 = inlined_call_operand.vmem [shape: bf16[16,128], index: 5, kind: output, shape index: {}]
  %s6 = sld [smem:[#allocation0]]
  $region38: #{dinov2_encoder_forward.23} parent=0
    _
  %s8 = ssub.s32 1, %s6
  %s9 = scalar_select 0, %s8, %s6
  // Predicated region
  $region2: #{dinov2_encoder_forward.23} parent=0 // pred_check
    _
  $region3: #{dinov2_encoder_forward.23} parent=0 // pred_check_branch
    %11 = sbr.rel (0) target = $region5
  $region4: #{dinov2_encoder_forward.23} parent=0 // pred_region
    _
  $region5: #{dinov2_encoder_forward.23} parent=0 // pred_fallthru
    _
  // Predicated region
  $region6: #{dinov2_encoder_forward.23} parent=0 // pred_check
    _
  $region7: #{dinov2_encoder_forward.23} parent=0 // pred_check_branch
    %13 = sbr.rel (0) target = $region9
  $region8: #{dinov2_encoder_forward.23} parent=0 // pred_region
    _
  $region9: #{dinov2_encoder_forward.23} parent=0 // pred_fallthru
    _
  // Predicated region
  $region10: #{dinov2_encoder_forward.23} parent=0 // pred_check
    _
  $region11: #{dinov2_encoder_forward.23} parent=0 // pred_check_branch
    %15 = sbr.rel (0) target = $region13
  $region12: #{dinov2_encoder_forward.23} parent=0 // pred_region
    _
  $region13: #{dinov2_encoder_forward.23} parent=0 // pred_fallthru
    _
  // Predicated region
  $region14: #{dinov2_encoder_forward.23} parent=0 // pred_check
    _
  $region15: #{dinov2_encoder_forward.23} parent=0 // pred_check_branch
    %17 = sbr.rel (0) target = $region17
  $region16: #{dinov2_encoder_forward.23} parent=0 // pred_region
    _
  $region17: #{dinov2_encoder_forward.23} parent=0 // pred_fallthru
    _
  // Predicated region
  $region18: #{dinov2_encoder_forward.23} parent=0 // pred_check
    _
  $region19: #{dinov2_encoder_forward.23} parent=0 // pred_check_branch
    %19 = sbr.rel (0) target = $region21
  $region20: #{dinov2_encoder_forward.23} parent=0 // pred_region
    _
  $region21: #{dinov2_encoder_forward.23} parent=0 // pred_fallthru
    _
  %p21 = scmp.eq.s32.totalorder 0, 0
  // Predicated region
  $region22: #{dinov2_encoder_forward.23} parent=0 // pred_check
    %p22 = pneg %p21
  $region23: #{dinov2_encoder_forward.23} parent=0 // pred_check_branch
    %24 = sbr.rel (%p22) target = $region25
  $region24: #{dinov2_encoder_forward.23} parent=0 // pred_region
    %25 = vst [vmem:[#allocation2] sm:$0xff] 0.0
    %26 = vst [vmem:[#allocation2 + $0x8] sm:$0xff] 0.0
  $region25: #{dinov2_encoder_forward.23} parent=0 // pred_fallthru
    _
  %v27 = vld [vmem:[%s0] sm:$0xff]
  %v28 = vld [vmem:[%s0 + $0x8] sm:$0xff]
  %v29 = vld [vmem:[%s0 + $0x10] sm:$0xff]
  %v30 = vld [vmem:[%s0 + $0x18] sm:$0xff]
  %v31 = vld [vmem:[#allocation2] sm:$0xff]
  %v32 = vld [vmem:[#allocation2 + $0x8] sm:$0xff]
  %v33 = vld [vmem:[%s1] sm:$0xf]
  %v34 = vld [vmem:[%s1 + $0x4] sm:$0xf]
  %v35 = vld [vmem:[%s1 + $0x8] sm:$0xf]
  %v36 = vld [vmem:[%s1 + $0xc] sm:$0xf]
  %v37 = vld [vmem:[%s1 + $0x10] sm:$0xf]
  %v38 = vld [vmem:[%s1 + $0x14] sm:$0xf]
  %v39 = vld [vmem:[%s1 + $0x18] sm:$0xf]
  %v40 = vld [vmem:[%s1 + $0x1c] sm:$0xf]
  %v41 = vld [vmem:[%s1 + $0x20] sm:$0xf]
  %v42 = vld [vmem:[%s1 + $0x24] sm:$0xf]
  %v43 = vld [vmem:[%s1 + $0x28] sm:$0xf]
  %v44 = vld [vmem:[%s1 + $0x2c] sm:$0xf]
  %v45 = vld [vmem:[%s1 + $0x30] sm:$0xf]
  %v46 = vld [vmem:[%s1 + $0x34] sm:$0xf]
  %v47 = vld [vmem:[%s1 + $0x38] sm:$0xf]
  %v48 = vld [vmem:[%s1 + $0x3c] sm:$0xf]
  %v49 = vld [vmem:[%s1 + $0x40] sm:$0xf]
  %v50 = vld [vmem:[%s1 + $0x44] sm:$0xf]
  %v51 = vld [vmem:[%s1 + $0x48] sm:$0xf]
  %v52 = vld [vmem:[%s1 + $0x4c] sm:$0xf]
  %v53 = vld [vmem:[%s1 + $0x50] sm:$0xf]
  %v54 = vld [vmem:[%s1 + $0x54] sm:$0xf]
  %v55 = vld [vmem:[%s1 + $0x58] sm:$0xf]
  %v56 = vld [vmem:[%s1 + $0x5c] sm:$0xf]
  %v57 = vld [vmem:[%s1 + $0x60] sm:$0xf]
  %v58 = vld [vmem:[%s1 + $0x64] sm:$0xf]
  %v59 = vld [vmem:[%s1 + $0x68] sm:$0xf]
  %v60 = vld [vmem:[%s1 + $0x6c] sm:$0xf]
  %v61 = vld [vmem:[%s1 + $0x70] sm:$0xf]
  %v62 = vld [vmem:[%s1 + $0x74] sm:$0xf]
  %v63 = vld [vmem:[%s1 + $0x78] sm:$0xf]
  %v64 = vld [vmem:[%s1 + $0x7c] sm:$0xf]
  %v65 = vld [vmem:[%s1 + $0x80] sm:$0xf]
  %v66 = vld [vmem:[%s1 + $0x84] sm:$0xf]
  %v67 = vld [vmem:[%s1 + $0x88] sm:$0xf]
  %v68 = vld [vmem:[%s1 + $0x8c] sm:$0xf]
  %v69 = vld [vmem:[%s1 + $0x90] sm:$0xf]
  %v70 = vld [vmem:[%s1 + $0x94] sm:$0xf]
  %v71 = vld [vmem:[%s1 + $0x98] sm:$0xf]
  %v72 = vld [vmem:[%s1 + $0x9c] sm:$0xf]
  %v73 = vld [vmem:[%s1 + $0xa0] sm:$0xf]
  %v74 = vld [vmem:[%s1 + $0xa4] sm:$0xf]
  %v75 = vld [vmem:[%s1 + $0xa8] sm:$0xf]
  %v76 = vld [vmem:[%s1 + $0xac] sm:$0xf]
  %v77 = vld [vmem:[%s1 + $0xb0] sm:$0xf]
  %v78 = vld [vmem:[%s1 + $0xb4] sm:$0xf]
  %v79 = vld [vmem:[%s1 + $0xb8] sm:$0xf]
  %v80 = vld [vmem:[%s1 + $0xbc] sm:$0xf]
  %v81 = vld [vmem:[%s1 + $0xc0] sm:$0xf]
  %v82 = vld [vmem:[%s1 + $0xc4] sm:$0xf]
  %v83 = vld [vmem:[%s1 + $0xc8] sm:$0xf]
  %v84 = vld [vmem:[%s1 + $0xcc] sm:$0xf]
  %v85 = vld [vmem:[%s1 + $0xd0] sm:$0xf]
  %v86 = vld [vmem:[%s1 + $0xd4] sm:$0xf]
  %v87 = vld [vmem:[%s1 + $0xd8] sm:$0xf]
  %v88 = vld [vmem:[%s1 + $0xdc] sm:$0xf]
  %v89 = vld [vmem:[%s1 + $0xe0] sm:$0xf]
  %v90 = vld [vmem:[%s1 + $0xe4] sm:$0xf]
  %v91 = vld [vmem:[%s1 + $0xe8] sm:$0xf]
  %v92 = vld [vmem:[%s1 + $0xec] sm:$0xf]
  %v93 = vld [vmem:[%s1 + $0xf0] sm:$0xf]
  %v94 = vld [vmem:[%s1 + $0xf4] sm:$0xf]
  %v95 = vld [vmem:[%s1 + $0xf8] sm:$0xf]
  %v96 = vld [vmem:[%s1 + $0xfc] sm:$0xf]
  %v101 = vunpack.c.l.b16 %v27
  %v102 = vunpack.c.h.b16 %v27
  %v103 = vunpack.c.l.b16 %v28
  %v104 = vunpack.c.h.b16 %v28
  %v105 = vunpack.c.l.b16 %v29
  %v106 = vunpack.c.h.b16 %v29
  %v107 = vunpack.c.l.b16 %v30
  %v108 = vunpack.c.h.b16 %v30
  %v109 = vpack.c.b16 %v105, %v101
  %v110 = vpack.c.b16 %v106, %v102
  %v111 = vpack.c.b16 %v107, %v103
  %v112 = vpack.c.b16 %v108, %v104
  %v181 = vunpack.c.l.b16 %v33
  %v182 = vunpack.c.l.b16 %v34
  %v183 = vunpack.c.l.b16 %v35
  %v184 = vunpack.c.l.b16 %v36
  %v185 = vunpack.c.l.b16 %v37
  %v186 = vunpack.c.l.b16 %v38
  %v187 = vunpack.c.l.b16 %v39
  %v188 = vunpack.c.l.b16 %v40
  %v189 = vunpack.c.l.b16 %v41
  %v190 = vunpack.c.l.b16 %v42
  %v191 = vunpack.c.l.b16 %v43
  %v192 = vunpack.c.l.b16 %v44
  %v193 = vunpack.c.l.b16 %v45
  %v194 = vunpack.c.l.b16 %v46
  %v195 = vunpack.c.l.b16 %v47
  %v196 = vunpack.c.l.b16 %v48
  %v197 = vunpack.c.l.b16 %v49
  %v198 = vunpack.c.l.b16 %v50
  %v199 = vunpack.c.l.b16 %v51
  %v200 = vunpack.c.l.b16 %v52
  %v201 = vunpack.c.l.b16 %v53
  %v202 = vunpack.c.l.b16 %v54
  %v203 = vunpack.c.l.b16 %v55
  %v204 = vunpack.c.l.b16 %v56
  %v205 = vunpack.c.l.b16 %v57
  %v206 = vunpack.c.l.b16 %v58
  %v207 = vunpack.c.l.b16 %v59
  %v208 = vunpack.c.l.b16 %v60
  %v209 = vunpack.c.l.b16 %v61
  %v210 = vunpack.c.l.b16 %v62
  %v211 = vunpack.c.l.b16 %v63
  %v212 = vunpack.c.l.b16 %v64
  %v213 = vunpack.c.l.b16 %v65
  %v214 = vunpack.c.l.b16 %v66
  %v215 = vunpack.c.l.b16 %v67
  %v216 = vunpack.c.l.b16 %v68
  %v217 = vunpack.c.l.b16 %v69
  %v218 = vunpack.c.l.b16 %v70
  %v219 = vunpack.c.l.b16 %v71
  %v220 = vunpack.c.l.b16 %v72
  %v221 = vunpack.c.l.b16 %v73
  %v222 = vunpack.c.l.b16 %v74
  %v223 = vunpack.c.l.b16 %v75
  %v224 = vunpack.c.l.b16 %v76
  %v225 = vunpack.c.l.b16 %v77
  %v226 = vunpack.c.l.b16 %v78
  %v227 = vunpack.c.l.b16 %v79
  %v228 = vunpack.c.l.b16 %v80
  %v229 = vunpack.c.l.b16 %v81
  %v230 = vunpack.c.l.b16 %v82
  %v231 = vunpack.c.l.b16 %v83
  %v232 = vunpack.c.l.b16 %v84
  %v233 = vunpack.c.l.b16 %v85
  %v234 = vunpack.c.l.b16 %v86
  %v235 = vunpack.c.l.b16 %v87
  %v236 = vunpack.c.l.b16 %v88
  %v237 = vunpack.c.l.b16 %v89
  %v238 = vunpack.c.l.b16 %v90
  %v239 = vunpack.c.l.b16 %v91
  %v240 = vunpack.c.l.b16 %v92
  %v241 = vunpack.c.l.b16 %v93
  %v242 = vunpack.c.l.b16 %v94
  %v243 = vunpack.c.l.b16 %v95
  %v244 = vunpack.c.l.b16 %v96
  %v245 = vpack.c.b16 %v182, %v181
  %v246 = vpack.c.b16 %v184, %v183
  %v247 = vpack.c.b16 %v186, %v185
  %v248 = vpack.c.b16 %v188, %v187
  %v249 = vpack.c.b16 %v190, %v189
  %v250 = vpack.c.b16 %v192, %v191
  %v251 = vpack.c.b16 %v194, %v193
  %v252 = vpack.c.b16 %v196, %v195
  %v253 = vpack.c.b16 %v198, %v197
  %v254 = vpack.c.b16 %v200, %v199
  %v255 = vpack.c.b16 %v202, %v201
  %v256 = vpack.c.b16 %v204, %v203
  %v257 = vpack.c.b16 %v206, %v205
  %v258 = vpack.c.b16 %v208, %v207
  %v259 = vpack.c.b16 %v210, %v209
  %v260 = vpack.c.b16 %v212, %v211
  %v261 = vpack.c.b16 %v214, %v213
  %v262 = vpack.c.b16 %v216, %v215
  %v263 = vpack.c.b16 %v218, %v217
  %v264 = vpack.c.b16 %v220, %v219
  %v265 = vpack.c.b16 %v222, %v221
  %v266 = vpack.c.b16 %v224, %v223
  %v267 = vpack.c.b16 %v226, %v225
  %v268 = vpack.c.b16 %v228, %v227
  %v269 = vpack.c.b16 %v230, %v229
  %v270 = vpack.c.b16 %v232, %v231
  %v271 = vpack.c.b16 %v234, %v233
  %v272 = vpack.c.b16 %v236, %v235
  %v273 = vpack.c.b16 %v238, %v237
  %v274 = vpack.c.b16 %v240, %v239
  %v275 = vpack.c.b16 %v242, %v241
  %v276 = vpack.c.b16 %v244, %v243
  %309 = vmatprep.subr.bf16.mxu0 0
  %310 = vmatpush1.bf16.msra.mxu0 %v245
  %311 = vmatprep.subr.bf16.mxu0 0
  %312 = vmatpush1.bf16.msra.mxu0 %v246
  %313 = vmatprep.subr.bf16.mxu0 0
  %314 = vmatpush1.bf16.msra.mxu0 %v247
  %315 = vmatprep.subr.bf16.mxu0 0
  %316 = vmatpush1.bf16.msra.mxu0 %v248
  %317 = vmatprep.subr.bf16.mxu0 0
  %318 = vmatpush1.bf16.msra.mxu0 %v249
  %319 = vmatprep.subr.bf16.mxu0 0
  %320 = vmatpush1.bf16.msra.mxu0 %v250
  %321 = vmatprep.subr.bf16.mxu0 0
  %322 = vmatpush1.bf16.msra.mxu0 %v251
  %323 = vmatprep.subr.bf16.mxu0 0
  %324 = vmatpush1.bf16.msra.mxu0 %v252
  %325 = vmatprep.subr.bf16.mxu0 0
  %326 = vmatpush1.bf16.msra.mxu0 %v253
  %327 = vmatprep.subr.bf16.mxu0 0
  %328 = vmatpush1.bf16.msra.mxu0 %v254
  %329 = vmatprep.subr.bf16.mxu0 0
  %330 = vmatpush1.bf16.msra.mxu0 %v255
  %331 = vmatprep.subr.bf16.mxu0 0
  %332 = vmatpush1.bf16.msra.mxu0 %v256
  %333 = vmatprep.subr.bf16.mxu0 0
  %334 = vmatpush1.bf16.msra.mxu0 %v257
  %335 = vmatprep.subr.bf16.mxu0 0
  %336 = vmatpush1.bf16.msra.mxu0 %v258
  %337 = vmatprep.subr.bf16.mxu0 0
  %338 = vmatpush1.bf16.msra.mxu0 %v259
  %339 = vmatprep.subr.bf16.mxu0 0
  %340 = vmatpush1.bf16.msra.mxu0 %v260
  %341 = vmatprep.mubr.bf16.mxu0 %v110
  %342 = vmatmul.mubr.bf16.gmra.mrb[0].mxu0 %v109
  %v343 = vpop.f32.mrb[0].mxu0
  %v344 = vadd.f32 0.0, %v343
  %v345 = vpop.f32.mrb[0].mxu0
  %v346 = vpop.f32.mrb[0].mxu0
  %v347 = vadd.f32 0.0, %v346
  %v348 = vpop.f32.mrb[0].mxu0
  %349 = vdwg.mxu0
  %350 = vmatprep.subr.bf16.mxu0 0
  %351 = vmatpush1.bf16.msra.mxu0 %v261
  %352 = vmatprep.subr.bf16.mxu0 0
  %353 = vmatpush1.bf16.msra.mxu0 %v262
  %354 = vmatprep.subr.bf16.mxu0 0
  %355 = vmatpush1.bf16.msra.mxu0 %v263
  %356 = vmatprep.subr.bf16.mxu0 0
  %357 = vmatpush1.bf16.msra.mxu0 %v264
  %358 = vmatprep.subr.bf16.mxu0 0
  %359 = vmatpush1.bf16.msra.mxu0 %v265
  %360 = vmatprep.subr.bf16.mxu0 0
  %361 = vmatpush1.bf16.msra.mxu0 %v266
  %362 = vmatprep.subr.bf16.mxu0 0
  %363 = vmatpush1.bf16.msra.mxu0 %v267
  %364 = vmatprep.subr.bf16.mxu0 0
  %365 = vmatpush1.bf16.msra.mxu0 %v268
  %366 = vmatprep.subr.bf16.mxu0 0
  %367 = vmatpush1.bf16.msra.mxu0 %v269
  %368 = vmatprep.subr.bf16.mxu0 0
  %369 = vmatpush1.bf16.msra.mxu0 %v270
  %370 = vmatprep.subr.bf16.mxu0 0
  %371 = vmatpush1.bf16.msra.mxu0 %v271
  %372 = vmatprep.subr.bf16.mxu0 0
  %373 = vmatpush1.bf16.msra.mxu0 %v272
  %374 = vmatprep.subr.bf16.mxu0 0
  %375 = vmatpush1.bf16.msra.mxu0 %v273
  %376 = vmatprep.subr.bf16.mxu0 0
  %377 = vmatpush1.bf16.msra.mxu0 %v274
  %378 = vmatprep.subr.bf16.mxu0 0
  %379 = vmatpush1.bf16.msra.mxu0 %v275
  %380 = vmatprep.subr.bf16.mxu0 0
  %381 = vmatpush1.bf16.msra.mxu0 %v276
  %382 = vmatprep.mubr.bf16.mxu0 %v112
  %383 = vmatmul.mubr.bf16.gmra.mrb[0].mxu0 %v111
  %v384 = vpop.f32.mrb[0].mxu0
  %v385 = vadd.f32 %v344, %v384
  %v386 = vpop.f32.mrb[0].mxu0
  %v387 = vpop.f32.mrb[0].mxu0
  %v388 = vadd.f32 %v347, %v387
  %v389 = vpop.f32.mrb[0].mxu0
  %390 = vdwg.mxu0
  %v391 = vadd.f32 %v31, %v385
  %v392 = vadd.f32 %v32, %v388
  %393 = vst [vmem:[#allocation2] sm:$0xff] %v391
  %394 = vst [vmem:[#allocation2 + $0x8] sm:$0xff] %v392
  // Predicated region
  $region26: #{dinov2_encoder_forward.23} parent=0 // pred_check
    %p395 = pneg %p21
  $region27: #{dinov2_encoder_forward.23} parent=0 // pred_check_branch
    %397 = sbr.rel (%p395) target = $region29
  $region28: #{dinov2_encoder_forward.23} parent=0 // pred_region
    %v398 = vld [vmem:[#allocation2] sm:$0xff]
    %v399 = vld [vmem:[#allocation2 + $0x8] sm:$0xff]
    %v400 = vld [vmem:[%s2] sm:$0x1]
    %v402 = vlaneseq
    %v403 = vshrl.u32 %v402, 7
    %v404 = vsub.s32 0, %v403
    %v405 = vrot.slane %v400, %v404
    %v407 = vadd.f32 %v398, %v405
    %v408 = vadd.f32 %v399, %v405
    %v409 = vld [vmem:[%s4] sm:$0xf]
    %v410 = vld [vmem:[%s4 + $0x4] sm:$0xf]
    %v411 = vunpack.c.l.bf16 %v409
    %v412 = vunpack.c.l.bf16 %v410
    %v413 = vld [vmem:[%s3] sm:$0x1]
    %v415 = vlaneseq
    %v416 = vshrl.u32 %v415, 7
    %v417 = vsub.s32 0, %v416
    %v418 = vrot.slane %v413, %v417
    %v420 = vmul.f32 %v407, %v418
    %v421 = vmul.f32 %v408, %v418
    %v422 = vadd.f32 %v411, %v420
    %v423 = vadd.f32 %v412, %v421
    %v424 = vpack.c.bf16 %v423, %v422
    %v426 = vunpack.c.l.b16 %v424
    %v427 = vunpack.c.h.b16 %v424
    %v428 = vpack.c.b16 %v426, %v426
    %v429 = vpack.c.b16 %v427, %v427
    %432 = vst [vmem:[%s5] sm:$0xf] %v428
    %433 = vst [vmem:[%s5 + $0x4] sm:$0xf] %v429
  $region29: #{dinov2_encoder_forward.23} parent=0 // pred_fallthru
    _
  // Predicated region
  $region30: #{dinov2_encoder_forward.23} parent=0 // pred_check
    _
  $region31: #{dinov2_encoder_forward.23} parent=0 // pred_check_branch
    %435 = sbr.rel (0) target = $region33
  $region32: #{dinov2_encoder_forward.23} parent=0 // pred_region
    _
  $region33: #{dinov2_encoder_forward.23} parent=0 // pred_fallthru
    _
  // Predicated region
  $region34: #{dinov2_encoder_forward.23} parent=0 // pred_check
    _
  $region35: #{dinov2_encoder_forward.23} parent=0 // pred_check_branch
    %437 = sbr.rel (0) target = $region37
  $region36: #{dinov2_encoder_forward.23} parent=0 // pred_region
    _
  $region37: #{dinov2_encoder_forward.23} parent=0 // pred_fallthru
    _

// kernel: dinov2_encoder_forward.22
$region0: #{dinov2_encoder_forward.22}
  #allocation0 [shape = 'u32[]', space=smem, size = 0x4, offset = 0x4, fixed_abs, tag = 'smem constant byte address 0x4 - core index']
  #allocation1 [shape = 'u32[144,128]{1,0:T(1,128)}', space=vmem, size = 0x12000, scoped, tag = 'internal scratch']
  #allocation2 [shape = 'f32[16,512]{1,0:T(8,128)}', space=vmem, size = 0x8000, scoped, tag = 'scratch operand']
  %s0 = inlined_call_operand.vmem [shape: bf16[16,128], index: 0, kind: input, shape index: {}]
  %s1 = inlined_call_operand.vmem [shape: bf16[128,512], index: 1, kind: input, shape index: {}]
  %s2 = inlined_call_operand.vmem [shape: f32[1,512], index: 2, kind: input, shape index: {}]
  %s3 = inlined_call_operand.vmem [shape: f32[1,128], index: 3, kind: input, shape index: {}]
  %s4 = inlined_call_operand.vmem [shape: f32[1,128], index: 4, kind: input, shape index: {}]
  %s5 = inlined_call_operand.vmem [shape: bf16[16,512], index: 5, kind: output, shape index: {}]
  %s6 = sld [smem:[#allocation0]]
  $region38: #{dinov2_encoder_forward.22} parent=0
    _
  %s8 = ssub.s32 1, %s6
  %s9 = scalar_select 0, %s8, %s6
  // Predicated region
  $region2: #{dinov2_encoder_forward.22} parent=0 // pred_check
    _
  $region3: #{dinov2_encoder_forward.22} parent=0 // pred_check_branch
    %11 = sbr.rel (0) target = $region5
  $region4: #{dinov2_encoder_forward.22} parent=0 // pred_region
    _
  $region5: #{dinov2_encoder_forward.22} parent=0 // pred_fallthru
    _
  // Predicated region
  $region6: #{dinov2_encoder_forward.22} parent=0 // pred_check
    _
  $region7: #{dinov2_encoder_forward.22} parent=0 // pred_check_branch
    %13 = sbr.rel (0) target = $region9
  $region8: #{dinov2_encoder_forward.22} parent=0 // pred_region
    _
  $region9: #{dinov2_encoder_forward.22} parent=0 // pred_fallthru
    _
  // Predicated region
  $region10: #{dinov2_encoder_forward.22} parent=0 // pred_check
    _
  $region11: #{dinov2_encoder_forward.22} parent=0 // pred_check_branch
    %15 = sbr.rel (0) target = $region13
  $region12: #{dinov2_encoder_forward.22} parent=0 // pred_region
    _
  $region13: #{dinov2_encoder_forward.22} parent=0 // pred_fallthru
    _
  // Predicated region
  $region14: #{dinov2_encoder_forward.22} parent=0 // pred_check
    _
  $region15: #{dinov2_encoder_forward.22} parent=0 // pred_check_branch
    %17 = sbr.rel (0) target = $region17
  $region16: #{dinov2_encoder_forward.22} parent=0 // pred_region
    _
  $region17: #{dinov2_encoder_forward.22} parent=0 // pred_fallthru
    _
  // Predicated region
  $region18: #{dinov2_encoder_forward.22} parent=0 // pred_check
    _
  $region19: #{dinov2_encoder_forward.22} parent=0 // pred_check_branch
    %19 = sbr.rel (0) target = $region21
  $region20: #{dinov2_encoder_forward.22} parent=0 // pred_region
    _
  $region21: #{dinov2_encoder_forward.22} parent=0 // pred_fallthru
    _
  %p21 = scmp.eq.s32.totalorder 0, 0
  // Predicated region
  $region22: #{dinov2_encoder_forward.22} parent=0 // pred_check
    %p22 = pneg %p21
  $region23: #{dinov2_encoder_forward.22} parent=0 // pred_check_branch
    %24 = sbr.rel (%p22) target = $region25
  $region24: #{dinov2_encoder_forward.22} parent=0 // pred_region
    %25 = vst [vmem:[#allocation2] sm:$0xff] 0.0
    %26 = vst [vmem:[#allocation2 + $0x8] sm:$0xff] 0.0
    %27 = vst [vmem:[#allocation2 + $0x10] sm:$0xff] 0.0
    %28 = vst [vmem:[#allocation2 + $0x18] sm:$0xff] 0.0
    %29 = vst [vmem:[#allocation2 + $0x20] sm:$0xff] 0.0
    %30 = vst [vmem:[#allocation2 + $0x28] sm:$0xff] 0.0
    %31 = vst [vmem:[#allocation2 + $0x30] sm:$0xff] 0.0
    %32 = vst [vmem:[#allocation2 + $0x38] sm:$0xff] 0.0
  $region25: #{dinov2_encoder_forward.22} parent=0 // pred_fallthru
    _
  %v33 = vld [vmem:[%s0] sm:$0xf]
  %v34 = vld [vmem:[%s0 + $0x4] sm:$0xf]
  %v35 = vunpack.c.l.bf16 %v33
  %v36 = vunpack.c.l.bf16 %v34
  %v37 = vld [vmem:[%s3] sm:$0x1]
  %v38 = vld [vmem:[%s4] sm:$0x1]
  %39 = vadd.xlane.f32.xlu0 %v35
  %v40 = vpop.xlane.xlu0 %39
  %41 = vadd.xlane.f32.xlu0 %v36
  %v42 = vpop.xlane.xlu0 %41
  %v43 = vrcp.pop 128.0
  %v44 = vmul.f32 %v40, %v43
  %v45 = vmul.f32 %v42, %v43
  %v46 = vsub.f32 %v35, %v44
  %v47 = vsub.f32 %v36, %v45
  %v48 = vmul.f32 %v46, %v46
  %v49 = vmul.f32 %v47, %v47
  %50 = vadd.xlane.f32.xlu0 %v48
  %v51 = vpop.xlane.xlu0 %50
  %52 = vadd.xlane.f32.xlu0 %v49
  %v53 = vpop.xlane.xlu0 %52
  %v54 = vmul.f32 %v51, %v43
  %v55 = vmul.f32 %v53, %v43
  %v56 = vadd.f32 %v54, 1e-06
  %v57 = vadd.f32 %v55, 1e-06
  %v58 = vrsqrt.pop %v56
  %v59 = vrsqrt.pop %v57
  %v60 = vmul.f32 %v46, %v58
  %v61 = vmul.f32 %v47, %v59
  %v63 = vlaneseq
  %v64 = vshrl.u32 %v63, 7
  %v65 = vsub.s32 0, %v64
  %v66 = vrot.slane %v37, %v65
  %v68 = vmul.f32 %v60, %v66
  %v69 = vmul.f32 %v61, %v66
  %v71 = vlaneseq
  %v72 = vshrl.u32 %v71, 7
  %v73 = vsub.s32 0, %v72
  %v74 = vrot.slane %v38, %v73
  %v76 = vadd.f32 %v68, %v74
  %v77 = vadd.f32 %v69, %v74
  %v78 = vld [vmem:[#allocation2] sm:$0xff]
  %v79 = vld [vmem:[#allocation2 + $0x8] sm:$0xff]
  %v80 = vld [vmem:[#allocation2 + $0x10] sm:$0xff]
  %v81 = vld [vmem:[#allocation2 + $0x18] sm:$0xff]
  %v82 = vld [vmem:[#allocation2 + $0x20] sm:$0xff]
  %v83 = vld [vmem:[#allocation2 + $0x28] sm:$0xff]
  %v84 = vld [vmem:[#allocation2 + $0x30] sm:$0xff]
  %v85 = vld [vmem:[#allocation2 + $0x38] sm:$0xff]
  %v86 = vpack.c.bf16 %v77, %v76
  %v87 = vld [vmem:[%s1] sm:$0xff]
  %v88 = vld [vmem:[%s1 + $0x8] sm:$0xff]
  %v89 = vld [vmem:[%s1 + $0x10] sm:$0xff]
  %v90 = vld [vmem:[%s1 + $0x18] sm:$0xff]
  %v91 = vld [vmem:[%s1 + $0x20] sm:$0xff]
  %v92 = vld [vmem:[%s1 + $0x28] sm:$0xff]
  %v93 = vld [vmem:[%s1 + $0x30] sm:$0xff]
  %v94 = vld [vmem:[%s1 + $0x38] sm:$0xff]
  %v95 = vld [vmem:[%s1 + $0x40] sm:$0xff]
  %v96 = vld [vmem:[%s1 + $0x48] sm:$0xff]
  %v97 = vld [vmem:[%s1 + $0x50] sm:$0xff]
  %v98 = vld [vmem:[%s1 + $0x58] sm:$0xff]
  %v99 = vld [vmem:[%s1 + $0x60] sm:$0xff]
  %v100 = vld [vmem:[%s1 + $0x68] sm:$0xff]
  %v101 = vld [vmem:[%s1 + $0x70] sm:$0xff]
  %v102 = vld [vmem:[%s1 + $0x78] sm:$0xff]
  %v103 = vld [vmem:[%s1 + $0x80] sm:$0xff]
  %v104 = vld [vmem:[%s1 + $0x88] sm:$0xff]
  %v105 = vld [vmem:[%s1 + $0x90] sm:$0xff]
  %v106 = vld [vmem:[%s1 + $0x98] sm:$0xff]
  %v107 = vld [vmem:[%s1 + $0xa0] sm:$0xff]
  %v108 = vld [vmem:[%s1 + $0xa8] sm:$0xff]
  %v109 = vld [vmem:[%s1 + $0xb0] sm:$0xff]
  %v110 = vld [vmem:[%s1 + $0xb8] sm:$0xff]
  %v111 = vld [vmem:[%s1 + $0xc0] sm:$0xff]
  %v112 = vld [vmem:[%s1 + $0xc8] sm:$0xff]
  %v113 = vld [vmem:[%s1 + $0xd0] sm:$0xff]
  %v114 = vld [vmem:[%s1 + $0xd8] sm:$0xff]
  %v115 = vld [vmem:[%s1 + $0xe0] sm:$0xff]
  %v116 = vld [vmem:[%s1 + $0xe8] sm:$0xff]
  %v117 = vld [vmem:[%s1 + $0xf0] sm:$0xff]
  %v118 = vld [vmem:[%s1 + $0xf8] sm:$0xff]
  %v151 = vunpack.c.l.b16 %v87
  %v152 = vunpack.c.h.b16 %v87
  %v153 = vunpack.c.l.b16 %v88
  %v154 = vunpack.c.h.b16 %v88
  %v155 = vunpack.c.l.b16 %v89
  %v156 = vunpack.c.h.b16 %v89
  %v157 = vunpack.c.l.b16 %v90
  %v158 = vunpack.c.h.b16 %v90
  %v159 = vunpack.c.l.b16 %v91
  %v160 = vunpack.c.h.b16 %v91
  %v161 = vunpack.c.l.b16 %v92
  %v162 = vunpack.c.h.b16 %v92
  %v163 = vunpack.c.l.b16 %v93
  %v164 = vunpack.c.h.b16 %v93
  %v165 = vunpack.c.l.b16 %v94
  %v166 = vunpack.c.h.b16 %v94
  %v167 = vunpack.c.l.b16 %v95
  %v168 = vunpack.c.h.b16 %v95
  %v169 = vunpack.c.l.b16 %v96
  %v170 = vunpack.c.h.b16 %v96
  %v171 = vunpack.c.l.b16 %v97
  %v172 = vunpack.c.h.b16 %v97
  %v173 = vunpack.c.l.b16 %v98
  %v174 = vunpack.c.h.b16 %v98
  %v175 = vunpack.c.l.b16 %v99
  %v176 = vunpack.c.h.b16 %v99
  %v177 = vunpack.c.l.b16 %v100
  %v178 = vunpack.c.h.b16 %v100
  %v179 = vunpack.c.l.b16 %v101
  %v180 = vunpack.c.h.b16 %v101
  %v181 = vunpack.c.l.b16 %v102
  %v182 = vunpack.c.h.b16 %v102
  %v183 = vunpack.c.l.b16 %v103
  %v184 = vunpack.c.h.b16 %v103
  %v185 = vunpack.c.l.b16 %v104
  %v186 = vunpack.c.h.b16 %v104
  %v187 = vunpack.c.l.b16 %v105
  %v188 = vunpack.c.h.b16 %v105
  %v189 = vunpack.c.l.b16 %v106
  %v190 = vunpack.c.h.b16 %v106
  %v191 = vunpack.c.l.b16 %v107
  %v192 = vunpack.c.h.b16 %v107
  %v193 = vunpack.c.l.b16 %v108
  %v194 = vunpack.c.h.b16 %v108
  %v195 = vunpack.c.l.b16 %v109
  %v196 = vunpack.c.h.b16 %v109
  %v197 = vunpack.c.l.b16 %v110
  %v198 = vunpack.c.h.b16 %v110
  %v199 = vunpack.c.l.b16 %v111
  %v200 = vunpack.c.h.b16 %v111
  %v201 = vunpack.c.l.b16 %v112
  %v202 = vunpack.c.h.b16 %v112
  %v203 = vunpack.c.l.b16 %v113
  %v204 = vunpack.c.h.b16 %v113
  %v205 = vunpack.c.l.b16 %v114
  %v206 = vunpack.c.h.b16 %v114
  %v207 = vunpack.c.l.b16 %v115
  %v208 = vunpack.c.h.b16 %v115
  %v209 = vunpack.c.l.b16 %v116
  %v210 = vunpack.c.h.b16 %v116
  %v211 = vunpack.c.l.b16 %v117
  %v212 = vunpack.c.h.b16 %v117
  %v213 = vunpack.c.l.b16 %v118
  %v214 = vunpack.c.h.b16 %v118
  %v215 = vpack.c.b16 %v155, %v151
  %v216 = vpack.c.b16 %v156, %v152
  %v217 = vpack.c.b16 %v157, %v153
  %v218 = vpack.c.b16 %v158, %v154
  %v219 = vpack.c.b16 %v163, %v159
  %v220 = vpack.c.b16 %v164, %v160
  %v221 = vpack.c.b16 %v165, %v161
  %v222 = vpack.c.b16 %v166, %v162
  %v223 = vpack.c.b16 %v171, %v167
  %v224 = vpack.c.b16 %v172, %v168
  %v225 = vpack.c.b16 %v173, %v169
  %v226 = vpack.c.b16 %v174, %v170
  %v227 = vpack.c.b16 %v179, %v175
  %v228 = vpack.c.b16 %v180, %v176
  %v229 = vpack.c.b16 %v181, %v177
  %v230 = vpack.c.b16 %v182, %v178
  %v231 = vpack.c.b16 %v187, %v183
  %v232 = vpack.c.b16 %v188, %v184
  %v233 = vpack.c.b16 %v189, %v185
  %v234 = vpack.c.b16 %v190, %v186
  %v235 = vpack.c.b16 %v195, %v191
  %v236 = vpack.c.b16 %v196, %v192
  %v237 = vpack.c.b16 %v197, %v193
  %v238 = vpack.c.b16 %v198, %v194
  %v239 = vpack.c.b16 %v203, %v199
  %v240 = vpack.c.b16 %v204, %v200
  %v241 = vpack.c.b16 %v205, %v201
  %v242 = vpack.c.b16 %v206, %v202
  %v243 = vpack.c.b16 %v211, %v207
  %v244 = vpack.c.b16 %v212, %v208
  %v245 = vpack.c.b16 %v213, %v209
  %v246 = vpack.c.b16 %v214, %v210
  %279 = vmatprep.subr.bf16.mxu0 %v216
  %280 = vmatpush1.bf16.msra.mxu0 %v215
  %281 = vmatprep.subr.bf16.mxu0 %v220
  %282 = vmatpush1.bf16.msra.mxu0 %v219
  %283 = vmatprep.subr.bf16.mxu0 %v224
  %284 = vmatpush1.bf16.msra.mxu0 %v223
  %285 = vmatprep.subr.bf16.mxu0 %v228
  %286 = vmatpush1.bf16.msra.mxu0 %v227
  %287 = vmatprep.subr.bf16.mxu0 %v232
  %288 = vmatpush1.bf16.msra.mxu0 %v231
  %289 = vmatprep.subr.bf16.mxu0 %v236
  %290 = vmatpush1.bf16.msra.mxu0 %v235
  %291 = vmatprep.subr.bf16.mxu0 %v240
  %292 = vmatpush1.bf16.msra.mxu0 %v239
  %293 = vmatprep.subr.bf16.mxu0 %v244
  %294 = vmatpush1.bf16.msra.mxu0 %v243
  %295 = vmatprep.subr.bf16.mxu0 0
  %296 = vmatpush1.bf16.msra.mxu0 0
  %297 = vmatprep.subr.bf16.mxu0 0
  %298 = vmatpush1.bf16.msra.mxu0 0
  %299 = vmatprep.subr.bf16.mxu0 0
  %300 = vmatpush1.bf16.msra.mxu0 0
  %301 = vmatprep.subr.bf16.mxu0 0
  %302 = vmatpush1.bf16.msra.mxu0 0
  %303 = vmatprep.subr.bf16.mxu0 0
  %304 = vmatpush1.bf16.msra.mxu0 0
  %305 = vmatprep.subr.bf16.mxu0 0
  %306 = vmatpush1.bf16.msra.mxu0 0
  %307 = vmatprep.subr.bf16.mxu0 0
  %308 = vmatpush1.bf16.msra.mxu0 0
  %309 = vmatprep.subr.bf16.mxu0 0
  %310 = vmatpush1.bf16.msra.mxu0 0
  %311 = vmatprep.mubr.bf16.mxu0 0
  %312 = vmatmul.mubr.bf16.gmra.mrb[0].mxu0 %v86
  %v313 = vpop.f32.mrb[0].mxu0
  %v314 = vadd.f32 0.0, %v313
  %v315 = vpop.f32.mrb[0].mxu0
  %v316 = vadd.f32 0.0, %v315
  %v317 = vpop.f32.mrb[0].mxu0
  %v318 = vadd.f32 0.0, %v317
  %v319 = vpop.f32.mrb[0].mxu0
  %v320 = vadd.f32 0.0, %v319
  %321 = vdwg.mxu0
  %322 = vmatprep.subr.bf16.mxu0 %v218
  %323 = vmatpush1.bf16.msra.mxu0 %v217
  %324 = vmatprep.subr.bf16.mxu0 %v222
  %325 = vmatpush1.bf16.msra.mxu0 %v221
  %326 = vmatprep.subr.bf16.mxu0 %v226
  %327 = vmatpush1.bf16.msra.mxu0 %v225
  %328 = vmatprep.subr.bf16.mxu0 %v230
  %329 = vmatpush1.bf16.msra.mxu0 %v229
  %330 = vmatprep.subr.bf16.mxu0 %v234
  %331 = vmatpush1.bf16.msra.mxu0 %v233
  %332 = vmatprep.subr.bf16.mxu0 %v238
  %333 = vmatpush1.bf16.msra.mxu0 %v237
  %334 = vmatprep.subr.bf16.mxu0 %v242
  %335 = vmatpush1.bf16.msra.mxu0 %v241
  %336 = vmatprep.subr.bf16.mxu0 %v246
  %337 = vmatpush1.bf16.msra.mxu0 %v245
  %338 = vmatprep.subr.bf16.mxu0 0
  %339 = vmatpush1.bf16.msra.mxu0 0
  %340 = vmatprep.subr.bf16.mxu0 0
  %341 = vmatpush1.bf16.msra.mxu0 0
  %342 = vmatprep.subr.bf16.mxu0 0
  %343 = vmatpush1.bf16.msra.mxu0 0
  %344 = vmatprep.subr.bf16.mxu0 0
  %345 = vmatpush1.bf16.msra.mxu0 0
  %346 = vmatprep.subr.bf16.mxu0 0
  %347 = vmatpush1.bf16.msra.mxu0 0
  %348 = vmatprep.subr.bf16.mxu0 0
  %349 = vmatpush1.bf16.msra.mxu0 0
  %350 = vmatprep.subr.bf16.mxu0 0
  %351 = vmatpush1.bf16.msra.mxu0 0
  %352 = vmatprep.subr.bf16.mxu0 0
  %353 = vmatpush1.bf16.msra.mxu0 0
  %354 = vmatprep.mubr.bf16.mxu0 0
  %355 = vmatmul.mubr.bf16.gmra.mrb[0].mxu0 %v86
  %v356 = vpop.f32.mrb[0].mxu0
  %v357 = vadd.f32 0.0, %v356
  %v358 = vpop.f32.mrb[0].mxu0
  %v359 = vadd.f32 0.0, %v358
  %v360 = vpop.f32.mrb[0].mxu0
  %v361 = vadd.f32 0.0, %v360
  %v362 = vpop.f32.mrb[0].mxu0
  %v363 = vadd.f32 0.0, %v362
  %364 = vdwg.mxu0
  %v365 = vadd.f32 %v78, %v314
  %v366 = vadd.f32 %v79, %v316
  %v367 = vadd.f32 %v80, %v357
  %v368 = vadd.f32 %v81, %v359
  %v369 = vadd.f32 %v82, %v318
  %v370 = vadd.f32 %v83, %v320
  %v371 = vadd.f32 %v84, %v361
  %v372 = vadd.f32 %v85, %v363
  %373 = vst [vmem:[#allocation2] sm:$0xff] %v365
  %374 = vst [vmem:[#allocation2 + $0x8] sm:$0xff] %v366
  %375 = vst [vmem:[#allocation2 + $0x10] sm:$0xff] %v367
  %376 = vst [vmem:[#allocation2 + $0x18] sm:$0xff] %v368
  %377 = vst [vmem:[#allocation2 + $0x20] sm:$0xff] %v369
  %378 = vst [vmem:[#allocation2 + $0x28] sm:$0xff] %v370
  %379 = vst [vmem:[#allocation2 + $0x30] sm:$0xff] %v371
  %380 = vst [vmem:[#allocation2 + $0x38] sm:$0xff] %v372
  // Predicated region
  $region26: #{dinov2_encoder_forward.22} parent=0 // pred_check
    %p381 = pneg %p21
  $region27: #{dinov2_encoder_forward.22} parent=0 // pred_check_branch
    %383 = sbr.rel (%p381) target = $region29
  $region28: #{dinov2_encoder_forward.22} parent=0 // pred_region
    %v384 = vld [vmem:[#allocation2] sm:$0xff]
    %v385 = vld [vmem:[#allocation2 + $0x8] sm:$0xff]
    %v386 = vld [vmem:[#allocation2 + $0x10] sm:$0xff]
    %v387 = vld [vmem:[#allocation2 + $0x18] sm:$0xff]
    %v388 = vld [vmem:[#allocation2 + $0x20] sm:$0xff]
    %v389 = vld [vmem:[#allocation2 + $0x28] sm:$0xff]
    %v390 = vld [vmem:[#allocation2 + $0x30] sm:$0xff]
    %v391 = vld [vmem:[#allocation2 + $0x38] sm:$0xff]
    %v392 = vld [vmem:[%s2] sm:$0xf]
    %v394 = vlaneseq
    %v395 = vshrl.u32 %v394, 7
    %v396 = vsub.s32 0, %v395
    %v397 = vrot.slane %v392, %v396
    %v398 = vlaneseq
    %v399 = vshrl.u32 %v398, 7
    %v400 = vsub.s32 1, %v399
    %v401 = vrot.slane %v392, %v400
    %v402 = vlaneseq
    %v403 = vshrl.u32 %v402, 7
    %v404 = vsub.s32 2, %v403
    %v405 = vrot.slane %v392, %v404
    %v406 = vlaneseq
    %v407 = vshrl.u32 %v406, 7
    %v408 = vsub.s32 3, %v407
    %v409 = vrot.slane %v392, %v408
    %v414 = vadd.f32 %v384, %v397
    %v415 = vadd.f32 %v385, %v401
    %v416 = vadd.f32 %v386, %v405
    %v417 = vadd.f32 %v387, %v409
    %v418 = vadd.f32 %v388, %v397
    %v419 = vadd.f32 %v389, %v401
    %v420 = vadd.f32 %v390, %v405
    %v421 = vadd.f32 %v391, %v409
    %v422 = vmul.f32 %v414, 0.5
    %v423 = vmul.f32 %v415, 0.5
    %v424 = vmul.f32 %v416, 0.5
    %v425 = vmul.f32 %v417, 0.5
    %v426 = vmul.f32 %v418, 0.5
    %v427 = vmul.f32 %v419, 0.5
    %v428 = vmul.f32 %v420, 0.5
    %v429 = vmul.f32 %v421, 0.5
    %v430 = vmul.f32 %v414, 0.70710677
    %v431 = vmul.f32 %v415, 0.70710677
    %v432 = vmul.f32 %v416, 0.70710677
    %v433 = vmul.f32 %v417, 0.70710677
    %v434 = vmul.f32 %v418, 0.70710677
    %v435 = vmul.f32 %v419, 0.70710677
    %v436 = vmul.f32 %v420, 0.70710677
    %v437 = vmul.f32 %v421, 0.70710677
    %v438 = verf.f32.pop %v430
    %v439 = verf.f32.pop %v431
    %v440 = verf.f32.pop %v432
    %v441 = verf.f32.pop %v433
    %v442 = verf.f32.pop %v434
    %v443 = verf.f32.pop %v435
    %v444 = verf.f32.pop %v436
    %v445 = verf.f32.pop %v437
    %v446 = vadd.f32 %v438, 1.0
    %v447 = vadd.f32 %v439, 1.0
    %v448 = vadd.f32 %v440, 1.0
    %v449 = vadd.f32 %v441, 1.0
    %v450 = vadd.f32 %v442, 1.0
    %v451 = vadd.f32 %v443, 1.0
    %v452 = vadd.f32 %v444, 1.0
    %v453 = vadd.f32 %v445, 1.0
    %v454 = vmul.f32 %v422, %v446
    %v455 = vmul.f32 %v423, %v447
    %v456 = vmul.f32 %v424, %v448
    %v457 = vmul.f32 %v425, %v449
    %v458 = vmul.f32 %v426, %v450
    %v459 = vmul.f32 %v427, %v451
    %v460 = vmul.f32 %v428, %v452
    %v461 = vmul.f32 %v429, %v453
    %v462 = vpack.c.bf16 %v458, %v454
    %v463 = vpack.c.bf16 %v459, %v455
    %v464 = vpack.c.bf16 %v460, %v456
    %v465 = vpack.c.bf16 %v461, %v457
    %v470 = vunpack.c.l.b16 %v462
    %v471 = vunpack.c.l.b16 %v463
    %v472 = vunpack.c.l.b16 %v464
    %v473 = vunpack.c.l.b16 %v465
    %v474 = vunpack.c.h.b16 %v462
    %v475 = vunpack.c.h.b16 %v463
    %v476 = vunpack.c.h.b16 %v464
    %v477 = vunpack.c.h.b16 %v465
    %v478 = vpack.c.b16 %v471, %v470
    %v479 = vpack.c.b16 %v473, %v472
    %v480 = vpack.c.b16 %v475, %v474
    %v481 = vpack.c.b16 %v477, %v476
    %486 = vst [vmem:[%s5] sm:$0xff] %v478
    %487 = vst [vmem:[%s5 + $0x8] sm:$0xff] %v479
    %488 = vst [vmem:[%s5 + $0x10] sm:$0xff] %v480
    %489 = vst [vmem:[%s5 + $0x18] sm:$0xff] %v481
  $region29: #{dinov2_encoder_forward.22} parent=0 // pred_fallthru
    _
  // Predicated region
  $region30: #{dinov2_encoder_forward.22} parent=0 // pred_check
    _
  $region31: #{dinov2_encoder_forward.22} parent=0 // pred_check_branch
    %491 = sbr.rel (0) target = $region33
  $region32: #{dinov2_encoder_forward.22} parent=0 // pred_region
    _
  $region33: #{dinov2_encoder_forward.22} parent=0 // pred_fallthru
    _
  // Predicated region
  $region34: #{dinov2_encoder_forward.22} parent=0 // pred_check
    _
  $region35: #{dinov2_encoder_forward.22} parent=0 // pred_check_branch
    %493 = sbr.rel (0) target = $region37
  $region36: #{dinov2_encoder_forward.22} parent=0 // pred_region
    _
  $region37: #{dinov2_encoder_forward.22} parent=0 // pred_fallthru
    _

// kernel: dinov2_encoder_forward.35
$region0: #{dinov2_encoder_forward.35}
  #allocation0 [shape = 'u32[]', space=smem, size = 0x4, offset = 0x4, fixed_abs, tag = 'smem constant byte address 0x4 - core index']
  #allocation1 [shape = 'u32[144,128]{1,0:T(1,128)}', space=vmem, size = 0x12000, scoped, tag = 'internal scratch']
  %s0 = inlined_call_operand.vmem [shape: bf16[2,128], index: 0, kind: input, shape index: {}]
  %s1 = inlined_call_operand.vmem [shape: f32[1,128], index: 1, kind: input, shape index: {}]
  %s2 = inlined_call_operand.vmem [shape: f32[1,128], index: 2, kind: input, shape index: {}]
  %s3 = inlined_call_operand.hbm [shape: f32[2,128], index: 3, kind: output, shape index: {}]
  %s4 = sld [smem:[#allocation0]]
  $region22: #{dinov2_encoder_forward.35} parent=0
    _
  %s6 = ssub.s32 1, %s4
  %s7 = scalar_select 0, %s6, %s4
  $region1: #{dinov2_encoder_forward.35} parent=0
    #allocation2 [shape = 'u8[1024]{0}', space=vmem, size = 0x400, scoped, tag = 'output window, operand 0, single buffered']
    #allocation3 [shape = 's32[1]{0}', space=sflag, size = 0x4, scoped, tag = 'scoped memory for dinov2_encoder_forward.35']
    %8 = vsyncpa [#allocation3], 0
    // Predicated region
    $region2: #{dinov2_encoder_forward.35} parent=1 // pred_check
      _
    $region3: #{dinov2_encoder_forward.35} parent=1 // pred_check_branch
      %10 = sbr.rel (0) target = $region5
    $region4: #{dinov2_encoder_forward.35} parent=1 // pred_region
      _
    $region5: #{dinov2_encoder_forward.35} parent=1 // pred_fallthru
      _
    // Predicated region
    $region6: #{dinov2_encoder_forward.35} parent=1 // pred_check
      _
    $region7: #{dinov2_encoder_forward.35} parent=1 // pred_check_branch
      %12 = sbr.rel (0) target = $region9
    $region8: #{dinov2_encoder_forward.35} parent=1 // pred_region
      _
    $region9: #{dinov2_encoder_forward.35} parent=1 // pred_fallthru
      _
    // Predicated region
    $region10: #{dinov2_encoder_forward.35} parent=1 // pred_check
      _
    $region11: #{dinov2_encoder_forward.35} parent=1 // pred_check_branch
      %14 = sbr.rel (0) target = $region13
    $region12: #{dinov2_encoder_forward.35} parent=1 // pred_region
      _
    $region13: #{dinov2_encoder_forward.35} parent=1 // pred_fallthru
      _
    %v15 = vld [vmem:[%s0] sm:$0x1]
    %v16 = vunpack.c.l.bf16 %v15
    %v17 = vld [vmem:[%s1] sm:$0x1]
    %v18 = vld [vmem:[%s2] sm:$0x1]
    %vm19 = vcmask 1041408
    %v20 = vsel %vm19, %v16, 0.0
    %21 = vadd.xlane.f32.xlu0 %v20
    %v22 = vpop.xlane.xlu0 %21
    %v23 = vrcp.pop 128.0
    %v24 = vmul.f32 %v22, %v23
    %v25 = vsub.f32 %v16, %v24
    %v26 = vmul.f32 %v25, %v25
    %v27 = vsel %vm19, %v26, 0.0
    %28 = vadd.xlane.f32.xlu0 %v27
    %v29 = vpop.xlane.xlu0 %28
    %v30 = vmul.f32 %v29, %v23
    %v31 = vadd.f32 %v30, 1e-06
    %v32 = vrsqrt.pop %v31
    %v33 = vmul.f32 %v25, %v32
    %v35 = vlaneseq
    %v36 = vshrl.u32 %v35, 7
    %v37 = vsub.s32 0, %v36
    %v38 = vrot.slane %v17, %v37
    %v40 = vmul.f32 %v33, %v38
    %v42 = vlaneseq
    %v43 = vshrl.u32 %v42, 7
    %v44 = vsub.s32 0, %v43
    %v45 = vrot.slane %v18, %v44
    %v47 = vadd.f32 %v40, %v45
    %48 = vst [vmem:[#allocation2] sm:$0x3] %v47
    // Predicated region
    $region14: #{dinov2_encoder_forward.35} parent=1 // pred_check
      _
    $region15: #{dinov2_encoder_forward.35} parent=1 // pred_check_branch
      %50 = sbr.rel (0) target = $region17
    $region16: #{dinov2_encoder_forward.35} parent=1 // pred_region
      %s52 = ssub.s32 32, 32
      %53 = vsyncadd [#allocation3], %s52
      %s55 = sshll.u32 [#allocation2], 4
      %s56 = int_to_ptr.vmem [resolvable:$true] %s55
      %58 = dma.vmem_to_hbm [thread:$0]  %s56, 32, %s3, [#allocation3]
    $region17: #{dinov2_encoder_forward.35} parent=1 // pred_fallthru
      _
    // Predicated region
    $region18: #{dinov2_encoder_forward.35} parent=1 // pred_check
      _
    $region19: #{dinov2_encoder_forward.35} parent=1 // pred_check_branch
      %60 = sbr.rel (0) target = $region21
    $region20: #{dinov2_encoder_forward.35} parent=1 // pred_region
      %61 = dma.done [#allocation3], 32
    $region21: #{dinov2_encoder_forward.35} parent=1 // pred_fallthru
      _
    %62 = vsyncpa [#allocation3], 1

// kernel: dinov2_encoder_forward.34
$region0: #{dinov2_encoder_forward.34}
  #allocation0 [shape = 'u32[]', space=smem, size = 0x4, offset = 0x4, fixed_abs, tag = 'smem constant byte address 0x4 - core index']
  #allocation1 [shape = 'u32[144,128]{1,0:T(1,128)}', space=vmem, size = 0x12000, scoped, tag = 'internal scratch']
  %s0 = inlined_call_operand.vmem [shape: bf16[16,128], index: 0, kind: input, shape index: {}]
  %s1 = inlined_call_operand.vmem [shape: bf16[16,128], index: 1, kind: input, shape index: {}]
  %s2 = inlined_call_operand.vmem [shape: f32[1,128], index: 2, kind: input, shape index: {}]
  %s3 = inlined_call_operand.vmem [shape: f32[1,128], index: 3, kind: input, shape index: {}]
  %s4 = inlined_call_operand.vmem [shape: bf16[2,128,128], index: 4, kind: input, shape index: {}]
  %s5 = inlined_call_operand.vmem [shape: f32[1,128], index: 5, kind: input, shape index: {}]
  %s6 = inlined_call_operand.vmem [shape: f32[16,128], index: 6, kind: output, shape index: {}]
  %s7 = sld [smem:[#allocation0]]
  $region34: #{dinov2_encoder_forward.34} parent=0
    _
  %s9 = ssub.s32 1, %s7
  %s10 = scalar_select 0, %s9, %s7
  // Predicated region
  $region2: #{dinov2_encoder_forward.34} parent=0 // pred_check
    _
  $region3: #{dinov2_encoder_forward.34} parent=0 // pred_check_branch
    %12 = sbr.rel (0) target = $region5
  $region4: #{dinov2_encoder_forward.34} parent=0 // pred_region
    _
  $region5: #{dinov2_encoder_forward.34} parent=0 // pred_fallthru
    _
  // Predicated region
  $region6: #{dinov2_encoder_forward.34} parent=0 // pred_check
    _
  $region7: #{dinov2_encoder_forward.34} parent=0 // pred_check_branch
    %14 = sbr.rel (0) target = $region9
  $region8: #{dinov2_encoder_forward.34} parent=0 // pred_region
    _
  $region9: #{dinov2_encoder_forward.34} parent=0 // pred_fallthru
    _
  // Predicated region
  $region10: #{dinov2_encoder_forward.34} parent=0 // pred_check
    _
  $region11: #{dinov2_encoder_forward.34} parent=0 // pred_check_branch
    %16 = sbr.rel (0) target = $region13
  $region12: #{dinov2_encoder_forward.34} parent=0 // pred_region
    _
  $region13: #{dinov2_encoder_forward.34} parent=0 // pred_fallthru
    _
  // Predicated region
  $region14: #{dinov2_encoder_forward.34} parent=0 // pred_check
    _
  $region15: #{dinov2_encoder_forward.34} parent=0 // pred_check_branch
    %18 = sbr.rel (0) target = $region17
  $region16: #{dinov2_encoder_forward.34} parent=0 // pred_region
    _
  $region17: #{dinov2_encoder_forward.34} parent=0 // pred_fallthru
    _
  // Predicated region
  $region18: #{dinov2_encoder_forward.34} parent=0 // pred_check
    _
  $region19: #{dinov2_encoder_forward.34} parent=0 // pred_check_branch
    %20 = sbr.rel (0) target = $region21
  $region20: #{dinov2_encoder_forward.34} parent=0 // pred_region
    _
  $region21: #{dinov2_encoder_forward.34} parent=0 // pred_fallthru
    _
  // Predicated region
  $region22: #{dinov2_encoder_forward.34} parent=0 // pred_check
    _
  $region23: #{dinov2_encoder_forward.34} parent=0 // pred_check_branch
    %22 = sbr.rel (0) target = $region25
  $region24: #{dinov2_encoder_forward.34} parent=0 // pred_region
    _
  $region25: #{dinov2_encoder_forward.34} parent=0 // pred_fallthru
    _
  %v24 = vld [vmem:[%s5] sm:$0x1]
  %v25 = vld [vmem:[%s0] sm:$0xf]
  %v26 = vld [vmem:[%s0 + $0x4] sm:$0xf]
  %v27 = vunpack.c.l.bf16 %v25
  %v28 = vunpack.c.l.bf16 %v26
  %v29 = vld [vmem:[%s2] sm:$0x1]
  %v30 = vld [vmem:[%s3] sm:$0x1]
  %31 = vadd.xlane.f32.xlu0 %v27
  %v32 = vpop.xlane.xlu0 %31
  %33 = vadd.xlane.f32.xlu0 %v28
  %v34 = vpop.xlane.xlu0 %33
  %v35 = vrcp.pop 128.0
  %v36 = vmul.f32 %v32, %v35
  %v37 = vmul.f32 %v34, %v35
  %v38 = vsub.f32 %v27, %v36
  %v39 = vsub.f32 %v28, %v37
  %v40 = vmul.f32 %v38, %v38
  %v41 = vmul.f32 %v39, %v39
  %42 = vadd.xlane.f32.xlu0 %v40
  %v43 = vpop.xlane.xlu0 %42
  %44 = vadd.xlane.f32.xlu0 %v41
  %v45 = vpop.xlane.xlu0 %44
  %v46 = vmul.f32 %v43, %v35
  %v47 = vmul.f32 %v45, %v35
  %v48 = vadd.f32 %v46, 1e-06
  %v49 = vadd.f32 %v47, 1e-06
  %v50 = vrsqrt.pop %v48
  %v51 = vrsqrt.pop %v49
  %v52 = vmul.f32 %v38, %v50
  %v53 = vmul.f32 %v39, %v51
  %v55 = vlaneseq
  %v56 = vshrl.u32 %v55, 7
  %v57 = vsub.s32 0, %v56
  %v58 = vrot.slane %v29, %v57
  %v60 = vmul.f32 %v52, %v58
  %v61 = vmul.f32 %v53, %v58
  %v63 = vlaneseq
  %v64 = vshrl.u32 %v63, 7
  %v65 = vsub.s32 0, %v64
  %v66 = vrot.slane %v30, %v65
  %v68 = vadd.f32 %v60, %v66
  %v69 = vadd.f32 %v61, %v66
  %v70 = vpack.c.bf16 %v69, %v68
  %v71 = vld [vmem:[%s4] sm:$0xf]
  %v72 = vld [vmem:[%s4 + $0x4] sm:$0xf]
  %v73 = vld [vmem:[%s4 + $0x8] sm:$0xf]
  %v74 = vld [vmem:[%s4 + $0xc] sm:$0xf]
  %v75 = vld [vmem:[%s4 + $0x10] sm:$0xf]
  %v76 = vld [vmem:[%s4 + $0x14] sm:$0xf]
  %v77 = vld [vmem:[%s4 + $0x18] sm:$0xf]
  %v78 = vld [vmem:[%s4 + $0x1c] sm:$0xf]
  %v79 = vld [vmem:[%s4 + $0x20] sm:$0xf]
  %v80 = vld [vmem:[%s4 + $0x24] sm:$0xf]
  %v81 = vld [vmem:[%s4 + $0x28] sm:$0xf]
  %v82 = vld [vmem:[%s4 + $0x2c] sm:$0xf]
  %v83 = vld [vmem:[%s4 + $0x30] sm:$0xf]
  %v84 = vld [vmem:[%s4 + $0x34] sm:$0xf]
  %v85 = vld [vmem:[%s4 + $0x38] sm:$0xf]
  %v86 = vld [vmem:[%s4 + $0x3c] sm:$0xf]
  %v103 = vunpack.c.l.b16 %v71
  %v104 = vunpack.c.l.b16 %v72
  %v105 = vunpack.c.l.b16 %v73
  %v106 = vunpack.c.l.b16 %v74
  %v107 = vunpack.c.l.b16 %v75
  %v108 = vunpack.c.l.b16 %v76
  %v109 = vunpack.c.l.b16 %v77
  %v110 = vunpack.c.l.b16 %v78
  %v111 = vunpack.c.l.b16 %v79
  %v112 = vunpack.c.l.b16 %v80
  %v113 = vunpack.c.l.b16 %v81
  %v114 = vunpack.c.l.b16 %v82
  %v115 = vunpack.c.l.b16 %v83
  %v116 = vunpack.c.l.b16 %v84
  %v117 = vunpack.c.l.b16 %v85
  %v118 = vunpack.c.l.b16 %v86
  %v119 = vpack.c.b16 %v104, %v103
  %v120 = vpack.c.b16 %v106, %v105
  %v121 = vpack.c.b16 %v108, %v107
  %v122 = vpack.c.b16 %v110, %v109
  %v123 = vpack.c.b16 %v112, %v111
  %v124 = vpack.c.b16 %v114, %v113
  %v125 = vpack.c.b16 %v116, %v115
  %v126 = vpack.c.b16 %v118, %v117
  %135 = vmatprep.subr.bf16.mxu0 0
  %136 = vmatpush1.bf16.msra.mxu0 %v119
  %137 = vmatprep.subr.bf16.mxu0 0
  %138 = vmatpush1.bf16.msra.mxu0 %v120
  %139 = vmatprep.subr.bf16.mxu0 0
  %140 = vmatpush1.bf16.msra.mxu0 %v121
  %141 = vmatprep.subr.bf16.mxu0 0
  %142 = vmatpush1.bf16.msra.mxu0 %v122
  %143 = vmatprep.subr.bf16.mxu0 0
  %144 = vmatpush1.bf16.msra.mxu0 %v123
  %145 = vmatprep.subr.bf16.mxu0 0
  %146 = vmatpush1.bf16.msra.mxu0 %v124
  %147 = vmatprep.subr.bf16.mxu0 0
  %148 = vmatpush1.bf16.msra.mxu0 %v125
  %149 = vmatprep.subr.bf16.mxu0 0
  %150 = vmatpush1.bf16.msra.mxu0 %v126
  %151 = vmatprep.subr.bf16.mxu0 0
  %152 = vmatpush1.bf16.msra.mxu0 0
  %153 = vmatprep.subr.bf16.mxu0 0
  %154 = vmatpush1.bf16.msra.mxu0 0
  %155 = vmatprep.subr.bf16.mxu0 0
  %156 = vmatpush1.bf16.msra.mxu0 0
  %157 = vmatprep.subr.bf16.mxu0 0
  %158 = vmatpush1.bf16.msra.mxu0 0
  %159 = vmatprep.subr.bf16.mxu0 0
  %160 = vmatpush1.bf16.msra.mxu0 0
  %161 = vmatprep.subr.bf16.mxu0 0
  %162 = vmatpush1.bf16.msra.mxu0 0
  %163 = vmatprep.subr.bf16.mxu0 0
  %164 = vmatpush1.bf16.msra.mxu0 0
  %165 = vmatprep.subr.bf16.mxu0 0
  %166 = vmatpush1.bf16.msra.mxu0 0
  %167 = vmatprep.mubr.bf16.mxu0 0
  %168 = vmatmul.mubr.bf16.gmra.mrb[0].mxu0 %v70
  %v169 = vpop.f32.mrb[0].mxu0
  %v170 = vadd.f32 0.0, %v169
  %v171 = vpop.f32.mrb[0].mxu0
  %v172 = vpop.f32.mrb[0].mxu0
  %v173 = vadd.f32 0.0, %v172
  %v174 = vpop.f32.mrb[0].mxu0
  %175 = vdwg.mxu0
  %v177 = vlaneseq
  %v178 = vshrl.u32 %v177, 7
  %v179 = vsub.s32 0, %v178
  %v180 = vrot.slane %v24, %v179
  %v182 = vadd.f32 %v180, %v170
  %v183 = vadd.f32 %v180, %v173
  %v184 = vld [vmem:[%s1] sm:$0xf]
  %v185 = vld [vmem:[%s1 + $0x4] sm:$0xf]
  %v186 = vunpack.c.l.bf16 %v184
  %v187 = vunpack.c.l.bf16 %v185
  %188 = vadd.xlane.f32.xlu0 %v186
  %v189 = vpop.xlane.xlu0 %188
  %190 = vadd.xlane.f32.xlu0 %v187
  %v191 = vpop.xlane.xlu0 %190
  %v192 = vmul.f32 %v189, %v35
  %v193 = vmul.f32 %v191, %v35
  %v194 = vsub.f32 %v186, %v192
  %v195 = vsub.f32 %v187, %v193
  %v196 = vmul.f32 %v194, %v194
  %v197 = vmul.f32 %v195, %v195
  %198 = vadd.xlane.f32.xlu0 %v196
  %v199 = vpop.xlane.xlu0 %198
  %200 = vadd.xlane.f32.xlu0 %v197
  %v201 = vpop.xlane.xlu0 %200
  %v202 = vmul.f32 %v199, %v35
  %v203 = vmul.f32 %v201, %v35
  %v204 = vadd.f32 %v202, 1e-06
  %v205 = vadd.f32 %v203, 1e-06
  %v206 = vrsqrt.pop %v204
  %v207 = vrsqrt.pop %v205
  %v208 = vmul.f32 %v194, %v206
  %v209 = vmul.f32 %v195, %v207
  %v210 = vmul.f32 %v208, %v58
  %v211 = vmul.f32 %v209, %v58
  %v212 = vadd.f32 %v210, %v66
  %v213 = vadd.f32 %v211, %v66
  %v214 = vpack.c.bf16 %v213, %v212
  %s215 = scalar_lea.vmem %s4, 64
  %v216 = vld [vmem:[%s215] sm:$0xf]
  %v217 = vld [vmem:[%s215 + $0x4] sm:$0xf]
  %v218 = vld [vmem:[%s215 + $0x8] sm:$0xf]
  %v219 = vld [vmem:[%s215 + $0xc] sm:$0xf]
  %v220 = vld [vmem:[%s215 + $0x10] sm:$0xf]
  %v221 = vld [vmem:[%s215 + $0x14] sm:$0xf]
  %v222 = vld [vmem:[%s215 + $0x18] sm:$0xf]
  %v223 = vld [vmem:[%s215 + $0x1c] sm:$0xf]
  %v224 = vld [vmem:[%s215 + $0x20] sm:$0xf]
  %v225 = vld [vmem:[%s215 + $0x24] sm:$0xf]
  %v226 = vld [vmem:[%s215 + $0x28] sm:$0xf]
  %v227 = vld [vmem:[%s215 + $0x2c] sm:$0xf]
  %v228 = vld [vmem:[%s215 + $0x30] sm:$0xf]
  %v229 = vld [vmem:[%s215 + $0x34] sm:$0xf]
  %v230 = vld [vmem:[%s215 + $0x38] sm:$0xf]
  %v231 = vld [vmem:[%s215 + $0x3c] sm:$0xf]
  %v248 = vunpack.c.l.b16 %v216
  %v249 = vunpack.c.l.b16 %v217
  %v250 = vunpack.c.l.b16 %v218
  %v251 = vunpack.c.l.b16 %v219
  %v252 = vunpack.c.l.b16 %v220
  %v253 = vunpack.c.l.b16 %v221
  %v254 = vunpack.c.l.b16 %v222
  %v255 = vunpack.c.l.b16 %v223
  %v256 = vunpack.c.l.b16 %v224
  %v257 = vunpack.c.l.b16 %v225
  %v258 = vunpack.c.l.b16 %v226
  %v259 = vunpack.c.l.b16 %v227
  %v260 = vunpack.c.l.b16 %v228
  %v261 = vunpack.c.l.b16 %v229
  %v262 = vunpack.c.l.b16 %v230
  %v263 = vunpack.c.l.b16 %v231
  %v264 = vpack.c.b16 %v249, %v248
  %v265 = vpack.c.b16 %v251, %v250
  %v266 = vpack.c.b16 %v253, %v252
  %v267 = vpack.c.b16 %v255, %v254
  %v268 = vpack.c.b16 %v257, %v256
  %v269 = vpack.c.b16 %v259, %v258
  %v270 = vpack.c.b16 %v261, %v260
  %v271 = vpack.c.b16 %v263, %v262
  %280 = vmatprep.subr.bf16.mxu0 0
  %281 = vmatpush1.bf16.msra.mxu0 %v264
  %282 = vmatprep.subr.bf16.mxu0 0
  %283 = vmatpush1.bf16.msra.mxu0 %v265
  %284 = vmatprep.subr.bf16.mxu0 0
  %285 = vmatpush1.bf16.msra.mxu0 %v266
  %286 = vmatprep.subr.bf16.mxu0 0
  %287 = vmatpush1.bf16.msra.mxu0 %v267
  %288 = vmatprep.subr.bf16.mxu0 0
  %289 = vmatpush1.bf16.msra.mxu0 %v268
  %290 = vmatprep.subr.bf16.mxu0 0
  %291 = vmatpush1.bf16.msra.mxu0 %v269
  %292 = vmatprep.subr.bf16.mxu0 0
  %293 = vmatpush1.bf16.msra.mxu0 %v270
  %294 = vmatprep.subr.bf16.mxu0 0
  %295 = vmatpush1.bf16.msra.mxu0 %v271
  %296 = vmatprep.subr.bf16.mxu0 0
  %297 = vmatpush1.bf16.msra.mxu0 0
  %298 = vmatprep.subr.bf16.mxu0 0
  %299 = vmatpush1.bf16.msra.mxu0 0
  %300 = vmatprep.subr.bf16.mxu0 0
  %301 = vmatpush1.bf16.msra.mxu0 0
  %302 = vmatprep.subr.bf16.mxu0 0
  %303 = vmatpush1.bf16.msra.mxu0 0
  %304 = vmatprep.subr.bf16.mxu0 0
  %305 = vmatpush1.bf16.msra.mxu0 0
  %306 = vmatprep.subr.bf16.mxu0 0
  %307 = vmatpush1.bf16.msra.mxu0 0
  %308 = vmatprep.subr.bf16.mxu0 0
  %309 = vmatpush1.bf16.msra.mxu0 0
  %310 = vmatprep.subr.bf16.mxu0 0
  %311 = vmatpush1.bf16.msra.mxu0 0
  %312 = vmatprep.mubr.bf16.mxu0 0
  %313 = vmatmul.mubr.bf16.gmra.mrb[0].mxu0 %v214
  %v314 = vpop.f32.mrb[0].mxu0
  %v315 = vadd.f32 0.0, %v314
  %v316 = vpop.f32.mrb[0].mxu0
  %v317 = vpop.f32.mrb[0].mxu0
  %v318 = vadd.f32 0.0, %v317
  %v319 = vpop.f32.mrb[0].mxu0
  %320 = vdwg.mxu0
  %v321 = vadd.f32 %v182, %v315
  %v322 = vadd.f32 %v183, %v318
  %323 = vst [vmem:[%s6] sm:$0xff] %v321
  %324 = vst [vmem:[%s6 + $0x8] sm:$0xff] %v322
  // Predicated region
  $region26: #{dinov2_encoder_forward.34} parent=0 // pred_check
    _
  $region27: #{dinov2_encoder_forward.34} parent=0 // pred_check_branch
    %326 = sbr.rel (0) target = $region29
  $region28: #{dinov2_encoder_forward.34} parent=0 // pred_region
    _
  $region29: #{dinov2_encoder_forward.34} parent=0 // pred_fallthru
    _
  // Predicated region
  $region30: #{dinov2_encoder_forward.34} parent=0 // pred_check
    _
  $region31: #{dinov2_encoder_forward.34} parent=0 // pred_check_branch
    %328 = sbr.rel (0) target = $region33
  $region32: #{dinov2_encoder_forward.34} parent=0 // pred_region
    _
  $region33: #{dinov2_encoder_forward.34} parent=0 // pred_fallthru
    _

</llo_original>
